<compile_context>
chip_gen: v7x
topology: tpu7x:2x2x1
jax: 0.10.0
libtpu: 0.0.40
codegen_flags: <defaults>
</compile_context>

<pallas_src>
import functools

import jax
import jax.numpy as jnp
from jax import lax
from jax.experimental import pallas as pl
from jax.experimental.pallas import tpu as pltpu


SEQ_LEN = 8
FEAT_DIM = 128
MAX_MISSING = 0.2
TAU = 0.5

# Multi-pivot bisection: 7 pivots/pass -> interval shrinks 8x per pass;
# 12 passes -> (max-min)/2**36 resolution (sub-ulp for realistic z ranges).
# `>=` at the converged lower bound over-keeps exact ties, same as torch.topk.
_N_PIVOTS = 7
_BISECT_PASSES = 12


# --------------------------------------------------------------------------- #
# Kernels
# --------------------------------------------------------------------------- #
def _soft_mask_kernel(logits_ref, u_ref, m_soft_ref, *, inv_tau):
    """Training path: elementwise Gumbel-sigmoid on a lane-dense row tile."""
    u = u_ref[...]
    # Exact reference formula (u + 1e-10); u is uniform[0,1) so -log(-log(.))
    # never sees a non-positive argument here.
    gumbel = -jnp.log(-jnp.log(u + 1e-10))
    z = (logits_ref[...] + gumbel) * inv_tau
    # sigmoid(z) == 0.5 * tanh(0.5 z) + 0.5  : one EUP op instead of exp+recip,
    # and exact (no approx-reciprocal error on the training/gradient path).
    m_soft_ref[...] = 0.5 * jnp.tanh(0.5 * z) + 0.5


def _hard_mask_fused_kernel(logits_ref, u_ref, m_hard_ref, *, k):
    """Eval path, fully fused: noise + k-th-largest threshold + hard compare.

    tau > 0 scaling and sigmoid are strictly monotone, so thresholding
    z = logits + gumbel at its k-th largest value gives the identical mask;
    neither the divide-by-tau nor the sigmoid is computed at all.
    """
    u = u_ref[...]
    gumbel = -jnp.log(-jnp.log(u + 1e-10))
    z = logits_ref[...] + gumbel

    lo0 = jnp.min(z)
    hi0 = jnp.max(z)

    inv_span = jnp.float32(1.0 / (_N_PIVOTS + 1))

    def body(_, carry):
        lo, hi = carry
        step = (hi - lo) * inv_span
        new_lo, new_hi = lo, hi
        # Static unroll over increasing pivots: counts are monotone
        # non-increasing in the pivot, so the last "ok" pivot is the tightest
        # lower bound and the first "not ok" pivot the tightest upper bound.
        for p in range(1, _N_PIVOTS + 1):
            piv = lo + step * jnp.float32(p)
            cnt = jnp.sum((z >= piv).astype(jnp.int32))   # exact int32 count
            ok = cnt >= k                                 # piv <= k-th largest
            new_lo = jnp.where(ok, piv, new_lo)
            new_hi = jnp.where(ok, new_hi, jnp.minimum(new_hi, piv))
        return new_lo, new_hi

    lo, _ = lax.fori_loop(0, _BISECT_PASSES, body, (lo0, hi0), unroll=True)

    # lo is within (max-min)/2**36 below the true k-th largest, so (z >= lo)
    # matches torch's (m_soft >= topk(...).values.min()) up to exact ties.
    m_hard_ref[...] = (z >= lo).astype(jnp.float32)


# --------------------------------------------------------------------------- #
# pallas_call wrappers
# --------------------------------------------------------------------------- #
def _soft_mask(logits, u, tau):
    seq_len, feat_dim = logits.shape
    # Lane-dense row tiling; feat_dim stays whole so output stores are unmasked.
    # 2048x128 f32 blocks (~1 MiB each, double-buffered) beat the ~0.35 us/step
    # overhead even at v7x HBM bandwidth; cdiv handles any seq_len (partial last
    # block is masked by Pallas), small shapes use one full-array block.
    tile_rows = min(seq_len, 2048)
    kernel = functools.partial(_soft_mask_kernel, inv_tau=1.0 / tau)
    return pl.pallas_call(
        kernel,
        out_shape=jax.ShapeDtypeStruct((seq_len, feat_dim), jnp.float32),
        grid=(pl.cdiv(seq_len, tile_rows),),
        in_specs=[
            pl.BlockSpec((tile_rows, feat_dim), lambda i: (i, 0)),
            pl.BlockSpec((tile_rows, feat_dim), lambda i: (i, 0)),
        ],
        out_specs=pl.BlockSpec((tile_rows, feat_dim), lambda i: (i, 0)),
        compiler_params=pltpu.CompilerParams(
            dimension_semantics=("parallel",)),
    )(logits, u)


def _hard_mask_fused(logits, u, k):
    # Whole array resident in VMEM: the k-th-largest selection is a global
    # reduction, so the fused kernel keeps z in a single VMEM block.
    # TODO(synk): for very large seq_len (resident set beyond VMEM, or to use
    # v7x's second TensorCore) switch to a gridded two-pass design: per-row-tile
    # pivot counts, then threshold + compare; not needed at these sizes.
    kernel = functools.partial(_hard_mask_fused_kernel, k=k)
    # logits + u + out + z (+ headroom); raise the scoped-VMEM limit only when
    # the defaults (16 MiB v5e, 32 MiB v6e/v7x) would be exceeded.
    resident_bytes = 4 * logits.size * 4 + (2 << 20)
    compiler_params = None
    if resident_bytes > (16 << 20):
        compiler_params = pltpu.CompilerParams(
            vmem_limit_bytes=min(resident_bytes, 56 << 20))
    return pl.pallas_call(
        kernel,
        out_shape=jax.ShapeDtypeStruct(logits.shape, jnp.float32),
        in_specs=[
            pl.BlockSpec(memory_space=pltpu.MemorySpace.VMEM),
            pl.BlockSpec(memory_space=pltpu.MemorySpace.VMEM),
        ],
        out_specs=pl.BlockSpec(memory_space=pltpu.MemorySpace.VMEM),
        compiler_params=compiler_params,
    )(logits, u)


def gumbel_mask_generator_forward(logits, u, *, training=False, hard=True,
                                  max_missing=MAX_MISSING, tau=TAU):
    """Mirrors GumbelMaskGenerator.forward.

    logits: (seq_len, feat_dim) float32 parameter.
    u:      (seq_len, feat_dim) float32 uniform(0,1) samples (rand_like(logits)).
    """
    # TODO(synk): u could be generated in-kernel (pltpu.prng_seed +
    # pltpu.prng_random_bits) to cut HBM traffic ~33% on the mem-bound soft
    # path; kept as an explicit input to match torch.rand_like semantics and
    # keep the kernel deterministic w.r.t. the caller-supplied noise.
    logits = logits.astype(jnp.float32)
    u = u.astype(jnp.float32)
    if (not training) and hard:
        k = int((1.0 - max_missing) * logits.size)
        return _hard_mask_fused(logits, u, k)
    return _soft_mask(logits, u, tau)


# --------------------------------------------------------------------------- #
# Demo / sanity check
# --------------------------------------------------------------------------- #
if __name__ == "__main__":
    key = jax.random.PRNGKey(0)
    k_logits, k_u = jax.random.split(key)

    # Deterministic "parameter" init (nn.Parameter(torch.randn(seq_len, feat_dim))).
    logits = jax.random.normal(k_logits, (SEQ_LEN, FEAT_DIM), dtype=jnp.float32)
    # u = torch.rand_like(self.logits)
    u = jax.random.uniform(k_u, (SEQ_LEN, FEAT_DIM), dtype=jnp.float32)

    # Eval-mode hard mask (default PyTorch path when not training and hard=True).
    m_hard = gumbel_mask_generator_forward(logits, u, training=False, hard=True)
    m_hard = jax.block_until_ready(m_hard)

    # Training-mode soft mask path.
    m_soft = gumbel_mask_generator_forward(logits, u, training=True, hard=True)
    m_soft = jax.block_until_ready(m_soft)

    # ---- reference checks (plain JAX) ----
    gumbel = -jnp.log(-jnp.log(u + 1e-10))
    z_ref = (logits + gumbel) / TAU
    m_soft_ref = jax.nn.sigmoid(z_ref)
    k = int((1.0 - MAX_MISSING) * m_soft_ref.size)
    thr = jnp.min(jax.lax.top_k(m_soft_ref.reshape(-1), k)[0])
    m_hard_ref = (m_soft_ref >= thr).astype(jnp.float32)

    assert m_hard.shape == (SEQ_LEN, FEAT_DIM) and m_hard.dtype == jnp.float32
    assert m_soft.shape == (SEQ_LEN, FEAT_DIM) and m_soft.dtype == jnp.float32
    # Hard mask is binary and keeps at least k elements (ties over-keep, as in torch).
    assert bool(jnp.all((m_hard == 0.0) | (m_hard == 1.0)))
    assert int(m_hard.sum()) >= k
    # Agreement with the XLA top_k reference (allow a couple of ulp-level tie flips).
    assert int(jnp.sum(m_hard != m_hard_ref)) <= 2
    # Soft path uses the exact tanh-based sigmoid -> tight agreement.
    assert bool(jnp.allclose(m_soft, m_soft_ref, atol=1e-5, rtol=1e-5))

    print("KERNEL_OK")
</pallas_src>

<mosaic_0001>
module attributes {stable_mosaic.version = 11 : i64} {
  func.func @_hard_mask_fused_kernel(%arg0: memref<8x128xf32, #tpu.memory_space<vmem>>, %arg1: memref<8x128xf32, #tpu.memory_space<vmem>>, %arg2: memref<8x128xf32, #tpu.memory_space<vmem>>) attributes {dimension_semantics = [], scalar_prefetch = 0 : i64, scratch_operands = 0 : i64, tpu.core_type = #tpu.core_type<tc>} {
    %c0 = arith.constant 0 : index
    %c0_0 = arith.constant 0 : index
    %0 = vector.load %arg1[%c0, %c0_0] : memref<8x128xf32, #tpu.memory_space<vmem>>, vector<8x128xf32>
    %cst = arith.constant 1.000000e-10 : f32
    %1 = vector.broadcast %cst : f32 to vector<8x128xf32>
    %2 = arith.addf %0, %1 : vector<8x128xf32>
    %3 = math.log %2 : vector<8x128xf32>
    %cst_1 = arith.constant 0.000000e+00 : f32
    %4 = vector.broadcast %cst_1 : f32 to vector<8x128xf32>
    %5 = arith.subf %4, %3 : vector<8x128xf32>
    %6 = math.log %5 : vector<8x128xf32>
    %cst_2 = arith.constant 0.000000e+00 : f32
    %7 = vector.broadcast %cst_2 : f32 to vector<8x128xf32>
    %8 = arith.subf %7, %6 : vector<8x128xf32>
    %c0_3 = arith.constant 0 : index
    %c0_4 = arith.constant 0 : index
    %9 = vector.load %arg0[%c0_3, %c0_4] : memref<8x128xf32, #tpu.memory_space<vmem>>, vector<8x128xf32>
    %10 = arith.addf %9, %8 : vector<8x128xf32>
    %11 = vector.shape_cast %10 : vector<8x128xf32> to vector<1x8x128xf32>
    %cst_5 = arith.constant dense<0x7F800000> : vector<1xf32>
    %12 = vector.multi_reduction <minimumf>, %11, %cst_5 [1, 2] : vector<1x8x128xf32> to vector<1xf32>
    %13 = vector.shape_cast %12 : vector<1xf32> to vector<1x1x1xf32>
    %14 = vector.extract %13[0, 0, 0] : f32 from vector<1x1x1xf32>
    %15 = vector.shape_cast %10 : vector<8x128xf32> to vector<1x8x128xf32>
    %cst_6 = arith.constant dense<0xFF800000> : vector<1xf32>
    %16 = vector.multi_reduction <maximumf>, %15, %cst_6 [1, 2] : vector<1x8x128xf32> to vector<1xf32>
    %17 = vector.shape_cast %16 : vector<1xf32> to vector<1x1x1xf32>
    %18 = vector.extract %17[0, 0, 0] : f32 from vector<1x1x1xf32>
    %cst_7 = arith.constant 1.250000e-01 : f32
    %c0_i32 = arith.constant 0 : i32
    %19 = arith.subf %18, %14 : f32
    %20 = arith.mulf %19, %cst_7 : f32
    %cst_8 = arith.constant 1.000000e+00 : f32
    %21 = arith.mulf %20, %cst_8 : f32
    %22 = arith.addf %14, %21 : f32
    %23 = vector.broadcast %22 : f32 to vector<8x128xf32>
    %24 = arith.cmpf oge, %10, %23 : vector<8x128xf32>
    %25 = arith.extui %24 : vector<8x128xi1> to vector<8x128xi32>
    %26 = vector.shape_cast %25 : vector<8x128xi32> to vector<1x8x128xi32>
    %cst_9 = arith.constant dense<0> : vector<1xi32>
    %27 = vector.multi_reduction <add>, %26, %cst_9 [1, 2] : vector<1x8x128xi32> to vector<1xi32>
    %28 = vector.shape_cast %27 : vector<1xi32> to vector<1x1x1xi32>
    %29 = vector.extract %28[0, 0, 0] : i32 from vector<1x1x1xi32>
    %c819_i32 = arith.constant 819 : i32
    %30 = arith.cmpi sge, %29, %c819_i32 : i32
    %31 = arith.select %30, %22, %14 : f32
    %32 = arith.minimumf %18, %22 : f32
    %33 = arith.select %30, %18, %32 : f32
    %cst_10 = arith.constant 2.000000e+00 : f32
    %34 = arith.mulf %20, %cst_10 : f32
    %35 = arith.addf %14, %34 : f32
    %36 = vector.broadcast %35 : f32 to vector<8x128xf32>
    %37 = arith.cmpf oge, %10, %36 : vector<8x128xf32>
    %38 = arith.extui %37 : vector<8x128xi1> to vector<8x128xi32>
    %39 = vector.shape_cast %38 : vector<8x128xi32> to vector<1x8x128xi32>
    %cst_11 = arith.constant dense<0> : vector<1xi32>
    %40 = vector.multi_reduction <add>, %39, %cst_11 [1, 2] : vector<1x8x128xi32> to vector<1xi32>
    %41 = vector.shape_cast %40 : vector<1xi32> to vector<1x1x1xi32>
    %42 = vector.extract %41[0, 0, 0] : i32 from vector<1x1x1xi32>
    %c819_i32_12 = arith.constant 819 : i32
    %43 = arith.cmpi sge, %42, %c819_i32_12 : i32
    %44 = arith.select %43, %35, %31 : f32
    %45 = arith.minimumf %33, %35 : f32
    %46 = arith.select %43, %33, %45 : f32
    %cst_13 = arith.constant 3.000000e+00 : f32
    %47 = arith.mulf %20, %cst_13 : f32
    %48 = arith.addf %14, %47 : f32
    %49 = vector.broadcast %48 : f32 to vector<8x128xf32>
    %50 = arith.cmpf oge, %10, %49 : vector<8x128xf32>
    %51 = arith.extui %50 : vector<8x128xi1> to vector<8x128xi32>
    %52 = vector.shape_cast %51 : vector<8x128xi32> to vector<1x8x128xi32>
    %cst_14 = arith.constant dense<0> : vector<1xi32>
    %53 = vector.multi_reduction <add>, %52, %cst_14 [1, 2] : vector<1x8x128xi32> to vector<1xi32>
    %54 = vector.shape_cast %53 : vector<1xi32> to vector<1x1x1xi32>
    %55 = vector.extract %54[0, 0, 0] : i32 from vector<1x1x1xi32>
    %c819_i32_15 = arith.constant 819 : i32
    %56 = arith.cmpi sge, %55, %c819_i32_15 : i32
    %57 = arith.select %56, %48, %44 : f32
    %58 = arith.minimumf %46, %48 : f32
    %59 = arith.select %56, %46, %58 : f32
    %cst_16 = arith.constant 4.000000e+00 : f32
    %60 = arith.mulf %20, %cst_16 : f32
    %61 = arith.addf %14, %60 : f32
    %62 = vector.broadcast %61 : f32 to vector<8x128xf32>
    %63 = arith.cmpf oge, %10, %62 : vector<8x128xf32>
    %64 = arith.extui %63 : vector<8x128xi1> to vector<8x128xi32>
    %65 = vector.shape_cast %64 : vector<8x128xi32> to vector<1x8x128xi32>
    %cst_17 = arith.constant dense<0> : vector<1xi32>
    %66 = vector.multi_reduction <add>, %65, %cst_17 [1, 2] : vector<1x8x128xi32> to vector<1xi32>
    %67 = vector.shape_cast %66 : vector<1xi32> to vector<1x1x1xi32>
    %68 = vector.extract %67[0, 0, 0] : i32 from vector<1x1x1xi32>
    %c819_i32_18 = arith.constant 819 : i32
    %69 = arith.cmpi sge, %68, %c819_i32_18 : i32
    %70 = arith.select %69, %61, %57 : f32
    %71 = arith.minimumf %59, %61 : f32
    %72 = arith.select %69, %59, %71 : f32
    %cst_19 = arith.constant 5.000000e+00 : f32
    %73 = arith.mulf %20, %cst_19 : f32
    %74 = arith.addf %14, %73 : f32
    %75 = vector.broadcast %74 : f32 to vector<8x128xf32>
    %76 = arith.cmpf oge, %10, %75 : vector<8x128xf32>
    %77 = arith.extui %76 : vector<8x128xi1> to vector<8x128xi32>
    %78 = vector.shape_cast %77 : vector<8x128xi32> to vector<1x8x128xi32>
    %cst_20 = arith.constant dense<0> : vector<1xi32>
    %79 = vector.multi_reduction <add>, %78, %cst_20 [1, 2] : vector<1x8x128xi32> to vector<1xi32>
    %80 = vector.shape_cast %79 : vector<1xi32> to vector<1x1x1xi32>
    %81 = vector.extract %80[0, 0, 0] : i32 from vector<1x1x1xi32>
    %c819_i32_21 = arith.constant 819 : i32
    %82 = arith.cmpi sge, %81, %c819_i32_21 : i32
    %83 = arith.select %82, %74, %70 : f32
    %84 = arith.minimumf %72, %74 : f32
    %85 = arith.select %82, %72, %84 : f32
    %cst_22 = arith.constant 6.000000e+00 : f32
    %86 = arith.mulf %20, %cst_22 : f32
    %87 = arith.addf %14, %86 : f32
    %88 = vector.broadcast %87 : f32 to vector<8x128xf32>
    %89 = arith.cmpf oge, %10, %88 : vector<8x128xf32>
    %90 = arith.extui %89 : vector<8x128xi1> to vector<8x128xi32>
    %91 = vector.shape_cast %90 : vector<8x128xi32> to vector<1x8x128xi32>
    %cst_23 = arith.constant dense<0> : vector<1xi32>
    %92 = vector.multi_reduction <add>, %91, %cst_23 [1, 2] : vector<1x8x128xi32> to vector<1xi32>
    %93 = vector.shape_cast %92 : vector<1xi32> to vector<1x1x1xi32>
    %94 = vector.extract %93[0, 0, 0] : i32 from vector<1x1x1xi32>
    %c819_i32_24 = arith.constant 819 : i32
    %95 = arith.cmpi sge, %94, %c819_i32_24 : i32
    %96 = arith.select %95, %87, %83 : f32
    %97 = arith.minimumf %85, %87 : f32
    %98 = arith.select %95, %85, %97 : f32
    %cst_25 = arith.constant 7.000000e+00 : f32
    %99 = arith.mulf %20, %cst_25 : f32
    %100 = arith.addf %14, %99 : f32
    %101 = vector.broadcast %100 : f32 to vector<8x128xf32>
    %102 = arith.cmpf oge, %10, %101 : vector<8x128xf32>
    %103 = arith.extui %102 : vector<8x128xi1> to vector<8x128xi32>
    %104 = vector.shape_cast %103 : vector<8x128xi32> to vector<1x8x128xi32>
    %cst_26 = arith.constant dense<0> : vector<1xi32>
    %105 = vector.multi_reduction <add>, %104, %cst_26 [1, 2] : vector<1x8x128xi32> to vector<1xi32>
    %106 = vector.shape_cast %105 : vector<1xi32> to vector<1x1x1xi32>
    %107 = vector.extract %106[0, 0, 0] : i32 from vector<1x1x1xi32>
    %c819_i32_27 = arith.constant 819 : i32
    %108 = arith.cmpi sge, %107, %c819_i32_27 : i32
    %109 = arith.select %108, %100, %96 : f32
    %110 = arith.minimumf %98, %100 : f32
    %111 = arith.select %108, %98, %110 : f32
    %c1_i32 = arith.constant 1 : i32
    %112 = arith.subf %111, %109 : f32
    %113 = arith.mulf %112, %cst_7 : f32
    %cst_28 = arith.constant 1.000000e+00 : f32
    %114 = arith.mulf %113, %cst_28 : f32
    %115 = arith.addf %109, %114 : f32
    %116 = vector.broadcast %115 : f32 to vector<8x128xf32>
    %117 = arith.cmpf oge, %10, %116 : vector<8x128xf32>
    %118 = arith.extui %117 : vector<8x128xi1> to vector<8x128xi32>
    %119 = vector.shape_cast %118 : vector<8x128xi32> to vector<1x8x128xi32>
    %cst_29 = arith.constant dense<0> : vector<1xi32>
    %120 = vector.multi_reduction <add>, %119, %cst_29 [1, 2] : vector<1x8x128xi32> to vector<1xi32>
    %121 = vector.shape_cast %120 : vector<1xi32> to vector<1x1x1xi32>
    %122 = vector.extract %121[0, 0, 0] : i32 from vector<1x1x1xi32>
    %c819_i32_30 = arith.constant 819 : i32
    %123 = arith.cmpi sge, %122, %c819_i32_30 : i32
    %124 = arith.select %123, %115, %109 : f32
    %125 = arith.minimumf %111, %115 : f32
    %126 = arith.select %123, %111, %125 : f32
    %cst_31 = arith.constant 2.000000e+00 : f32
    %127 = arith.mulf %113, %cst_31 : f32
    %128 = arith.addf %109, %127 : f32
    %129 = vector.broadcast %128 : f32 to vector<8x128xf32>
    %130 = arith.cmpf oge, %10, %129 : vector<8x128xf32>
    %131 = arith.extui %130 : vector<8x128xi1> to vector<8x128xi32>
    %132 = vector.shape_cast %131 : vector<8x128xi32> to vector<1x8x128xi32>
    %cst_32 = arith.constant dense<0> : vector<1xi32>
    %133 = vector.multi_reduction <add>, %132, %cst_32 [1, 2] : vector<1x8x128xi32> to vector<1xi32>
    %134 = vector.shape_cast %133 : vector<1xi32> to vector<1x1x1xi32>
    %135 = vector.extract %134[0, 0, 0] : i32 from vector<1x1x1xi32>
    %c819_i32_33 = arith.constant 819 : i32
    %136 = arith.cmpi sge, %135, %c819_i32_33 : i32
    %137 = arith.select %136, %128, %124 : f32
    %138 = arith.minimumf %126, %128 : f32
    %139 = arith.select %136, %126, %138 : f32
    %cst_34 = arith.constant 3.000000e+00 : f32
    %140 = arith.mulf %113, %cst_34 : f32
    %141 = arith.addf %109, %140 : f32
    %142 = vector.broadcast %141 : f32 to vector<8x128xf32>
    %143 = arith.cmpf oge, %10, %142 : vector<8x128xf32>
    %144 = arith.extui %143 : vector<8x128xi1> to vector<8x128xi32>
    %145 = vector.shape_cast %144 : vector<8x128xi32> to vector<1x8x128xi32>
    %cst_35 = arith.constant dense<0> : vector<1xi32>
    %146 = vector.multi_reduction <add>, %145, %cst_35 [1, 2] : vector<1x8x128xi32> to vector<1xi32>
    %147 = vector.shape_cast %146 : vector<1xi32> to vector<1x1x1xi32>
    %148 = vector.extract %147[0, 0, 0] : i32 from vector<1x1x1xi32>
    %c819_i32_36 = arith.constant 819 : i32
    %149 = arith.cmpi sge, %148, %c819_i32_36 : i32
    %150 = arith.select %149, %141, %137 : f32
    %151 = arith.minimumf %139, %141 : f32
    %152 = arith.select %149, %139, %151 : f32
    %cst_37 = arith.constant 4.000000e+00 : f32
    %153 = arith.mulf %113, %cst_37 : f32
    %154 = arith.addf %109, %153 : f32
    %155 = vector.broadcast %154 : f32 to vector<8x128xf32>
    %156 = arith.cmpf oge, %10, %155 : vector<8x128xf32>
    %157 = arith.extui %156 : vector<8x128xi1> to vector<8x128xi32>
    %158 = vector.shape_cast %157 : vector<8x128xi32> to vector<1x8x128xi32>
    %cst_38 = arith.constant dense<0> : vector<1xi32>
    %159 = vector.multi_reduction <add>, %158, %cst_38 [1, 2] : vector<1x8x128xi32> to vector<1xi32>
    %160 = vector.shape_cast %159 : vector<1xi32> to vector<1x1x1xi32>
    %161 = vector.extract %160[0, 0, 0] : i32 from vector<1x1x1xi32>
    %c819_i32_39 = arith.constant 819 : i32
    %162 = arith.cmpi sge, %161, %c819_i32_39 : i32
    %163 = arith.select %162, %154, %150 : f32
    %164 = arith.minimumf %152, %154 : f32
    %165 = arith.select %162, %152, %164 : f32
    %cst_40 = arith.constant 5.000000e+00 : f32
    %166 = arith.mulf %113, %cst_40 : f32
    %167 = arith.addf %109, %166 : f32
    %168 = vector.broadcast %167 : f32 to vector<8x128xf32>
    %169 = arith.cmpf oge, %10, %168 : vector<8x128xf32>
    %170 = arith.extui %169 : vector<8x128xi1> to vector<8x128xi32>
    %171 = vector.shape_cast %170 : vector<8x128xi32> to vector<1x8x128xi32>
    %cst_41 = arith.constant dense<0> : vector<1xi32>
    %172 = vector.multi_reduction <add>, %171, %cst_41 [1, 2] : vector<1x8x128xi32> to vector<1xi32>
    %173 = vector.shape_cast %172 : vector<1xi32> to vector<1x1x1xi32>
    %174 = vector.extract %173[0, 0, 0] : i32 from vector<1x1x1xi32>
    %c819_i32_42 = arith.constant 819 : i32
    %175 = arith.cmpi sge, %174, %c819_i32_42 : i32
    %176 = arith.select %175, %167, %163 : f32
    %177 = arith.minimumf %165, %167 : f32
    %178 = arith.select %175, %165, %177 : f32
    %cst_43 = arith.constant 6.000000e+00 : f32
    %179 = arith.mulf %113, %cst_43 : f32
    %180 = arith.addf %109, %179 : f32
    %181 = vector.broadcast %180 : f32 to vector<8x128xf32>
    %182 = arith.cmpf oge, %10, %181 : vector<8x128xf32>
    %183 = arith.extui %182 : vector<8x128xi1> to vector<8x128xi32>
    %184 = vector.shape_cast %183 : vector<8x128xi32> to vector<1x8x128xi32>
    %cst_44 = arith.constant dense<0> : vector<1xi32>
    %185 = vector.multi_reduction <add>, %184, %cst_44 [1, 2] : vector<1x8x128xi32> to vector<1xi32>
    %186 = vector.shape_cast %185 : vector<1xi32> to vector<1x1x1xi32>
    %187 = vector.extract %186[0, 0, 0] : i32 from vector<1x1x1xi32>
    %c819_i32_45 = arith.constant 819 : i32
    %188 = arith.cmpi sge, %187, %c819_i32_45 : i32
    %189 = arith.select %188, %180, %176 : f32
    %190 = arith.minimumf %178, %180 : f32
    %191 = arith.select %188, %178, %190 : f32
    %cst_46 = arith.constant 7.000000e+00 : f32
    %192 = arith.mulf %113, %cst_46 : f32
    %193 = arith.addf %109, %192 : f32
    %194 = vector.broadcast %193 : f32 to vector<8x128xf32>
    %195 = arith.cmpf oge, %10, %194 : vector<8x128xf32>
    %196 = arith.extui %195 : vector<8x128xi1> to vector<8x128xi32>
    %197 = vector.shape_cast %196 : vector<8x128xi32> to vector<1x8x128xi32>
    %cst_47 = arith.constant dense<0> : vector<1xi32>
    %198 = vector.multi_reduction <add>, %197, %cst_47 [1, 2] : vector<1x8x128xi32> to vector<1xi32>
    %199 = vector.shape_cast %198 : vector<1xi32> to vector<1x1x1xi32>
    %200 = vector.extract %199[0, 0, 0] : i32 from vector<1x1x1xi32>
    %c819_i32_48 = arith.constant 819 : i32
    %201 = arith.cmpi sge, %200, %c819_i32_48 : i32
    %202 = arith.select %201, %193, %189 : f32
    %203 = arith.minimumf %191, %193 : f32
    %204 = arith.select %201, %191, %203 : f32
    %c2_i32 = arith.constant 2 : i32
    %205 = arith.subf %204, %202 : f32
    %206 = arith.mulf %205, %cst_7 : f32
    %cst_49 = arith.constant 1.000000e+00 : f32
    %207 = arith.mulf %206, %cst_49 : f32
    %208 = arith.addf %202, %207 : f32
    %209 = vector.broadcast %208 : f32 to vector<8x128xf32>
    %210 = arith.cmpf oge, %10, %209 : vector<8x128xf32>
    %211 = arith.extui %210 : vector<8x128xi1> to vector<8x128xi32>
    %212 = vector.shape_cast %211 : vector<8x128xi32> to vector<1x8x128xi32>
    %cst_50 = arith.constant dense<0> : vector<1xi32>
    %213 = vector.multi_reduction <add>, %212, %cst_50 [1, 2] : vector<1x8x128xi32> to vector<1xi32>
    %214 = vector.shape_cast %213 : vector<1xi32> to vector<1x1x1xi32>
    %215 = vector.extract %214[0, 0, 0] : i32 from vector<1x1x1xi32>
    %c819_i32_51 = arith.constant 819 : i32
    %216 = arith.cmpi sge, %215, %c819_i32_51 : i32
    %217 = arith.select %216, %208, %202 : f32
    %218 = arith.minimumf %204, %208 : f32
    %219 = arith.select %216, %204, %218 : f32
    %cst_52 = arith.constant 2.000000e+00 : f32
    %220 = arith.mulf %206, %cst_52 : f32
    %221 = arith.addf %202, %220 : f32
    %222 = vector.broadcast %221 : f32 to vector<8x128xf32>
    %223 = arith.cmpf oge, %10, %222 : vector<8x128xf32>
    %224 = arith.extui %223 : vector<8x128xi1> to vector<8x128xi32>
    %225 = vector.shape_cast %224 : vector<8x128xi32> to vector<1x8x128xi32>
    %cst_53 = arith.constant dense<0> : vector<1xi32>
    %226 = vector.multi_reduction <add>, %225, %cst_53 [1, 2] : vector<1x8x128xi32> to vector<1xi32>
    %227 = vector.shape_cast %226 : vector<1xi32> to vector<1x1x1xi32>
    %228 = vector.extract %227[0, 0, 0] : i32 from vector<1x1x1xi32>
    %c819_i32_54 = arith.constant 819 : i32
    %229 = arith.cmpi sge, %228, %c819_i32_54 : i32
    %230 = arith.select %229, %221, %217 : f32
    %231 = arith.minimumf %219, %221 : f32
    %232 = arith.select %229, %219, %231 : f32
    %cst_55 = arith.constant 3.000000e+00 : f32
    %233 = arith.mulf %206, %cst_55 : f32
    %234 = arith.addf %202, %233 : f32
    %235 = vector.broadcast %234 : f32 to vector<8x128xf32>
    %236 = arith.cmpf oge, %10, %235 : vector<8x128xf32>
    %237 = arith.extui %236 : vector<8x128xi1> to vector<8x128xi32>
    %238 = vector.shape_cast %237 : vector<8x128xi32> to vector<1x8x128xi32>
    %cst_56 = arith.constant dense<0> : vector<1xi32>
    %239 = vector.multi_reduction <add>, %238, %cst_56 [1, 2] : vector<1x8x128xi32> to vector<1xi32>
    %240 = vector.shape_cast %239 : vector<1xi32> to vector<1x1x1xi32>
    %241 = vector.extract %240[0, 0, 0] : i32 from vector<1x1x1xi32>
    %c819_i32_57 = arith.constant 819 : i32
    %242 = arith.cmpi sge, %241, %c819_i32_57 : i32
    %243 = arith.select %242, %234, %230 : f32
    %244 = arith.minimumf %232, %234 : f32
    %245 = arith.select %242, %232, %244 : f32
    %cst_58 = arith.constant 4.000000e+00 : f32
    %246 = arith.mulf %206, %cst_58 : f32
    %247 = arith.addf %202, %246 : f32
    %248 = vector.broadcast %247 : f32 to vector<8x128xf32>
    %249 = arith.cmpf oge, %10, %248 : vector<8x128xf32>
    %250 = arith.extui %249 : vector<8x128xi1> to vector<8x128xi32>
    %251 = vector.shape_cast %250 : vector<8x128xi32> to vector<1x8x128xi32>
    %cst_59 = arith.constant dense<0> : vector<1xi32>
    %252 = vector.multi_reduction <add>, %251, %cst_59 [1, 2] : vector<1x8x128xi32> to vector<1xi32>
    %253 = vector.shape_cast %252 : vector<1xi32> to vector<1x1x1xi32>
    %254 = vector.extract %253[0, 0, 0] : i32 from vector<1x1x1xi32>
    %c819_i32_60 = arith.constant 819 : i32
    %255 = arith.cmpi sge, %254, %c819_i32_60 : i32
    %256 = arith.select %255, %247, %243 : f32
    %257 = arith.minimumf %245, %247 : f32
    %258 = arith.select %255, %245, %257 : f32
    %cst_61 = arith.constant 5.000000e+00 : f32
    %259 = arith.mulf %206, %cst_61 : f32
    %260 = arith.addf %202, %259 : f32
    %261 = vector.broadcast %260 : f32 to vector<8x128xf32>
    %262 = arith.cmpf oge, %10, %261 : vector<8x128xf32>
    %263 = arith.extui %262 : vector<8x128xi1> to vector<8x128xi32>
    %264 = vector.shape_cast %263 : vector<8x128xi32> to vector<1x8x128xi32>
    %cst_62 = arith.constant dense<0> : vector<1xi32>
    %265 = vector.multi_reduction <add>, %264, %cst_62 [1, 2] : vector<1x8x128xi32> to vector<1xi32>
    %266 = vector.shape_cast %265 : vector<1xi32> to vector<1x1x1xi32>
    %267 = vector.extract %266[0, 0, 0] : i32 from vector<1x1x1xi32>
    %c819_i32_63 = arith.constant 819 : i32
    %268 = arith.cmpi sge, %267, %c819_i32_63 : i32
    %269 = arith.select %268, %260, %256 : f32
    %270 = arith.minimumf %258, %260 : f32
    %271 = arith.select %268, %258, %270 : f32
    %cst_64 = arith.constant 6.000000e+00 : f32
    %272 = arith.mulf %206, %cst_64 : f32
    %273 = arith.addf %202, %272 : f32
    %274 = vector.broadcast %273 : f32 to vector<8x128xf32>
    %275 = arith.cmpf oge, %10, %274 : vector<8x128xf32>
    %276 = arith.extui %275 : vector<8x128xi1> to vector<8x128xi32>
    %277 = vector.shape_cast %276 : vector<8x128xi32> to vector<1x8x128xi32>
    %cst_65 = arith.constant dense<0> : vector<1xi32>
    %278 = vector.multi_reduction <add>, %277, %cst_65 [1, 2] : vector<1x8x128xi32> to vector<1xi32>
    %279 = vector.shape_cast %278 : vector<1xi32> to vector<1x1x1xi32>
    %280 = vector.extract %279[0, 0, 0] : i32 from vector<1x1x1xi32>
    %c819_i32_66 = arith.constant 819 : i32
    %281 = arith.cmpi sge, %280, %c819_i32_66 : i32
    %282 = arith.select %281, %273, %269 : f32
    %283 = arith.minimumf %271, %273 : f32
    %284 = arith.select %281, %271, %283 : f32
    %cst_67 = arith.constant 7.000000e+00 : f32
    %285 = arith.mulf %206, %cst_67 : f32
    %286 = arith.addf %202, %285 : f32
    %287 = vector.broadcast %286 : f32 to vector<8x128xf32>
    %288 = arith.cmpf oge, %10, %287 : vector<8x128xf32>
    %289 = arith.extui %288 : vector<8x128xi1> to vector<8x128xi32>
    %290 = vector.shape_cast %289 : vector<8x128xi32> to vector<1x8x128xi32>
    %cst_68 = arith.constant dense<0> : vector<1xi32>
    %291 = vector.multi_reduction <add>, %290, %cst_68 [1, 2] : vector<1x8x128xi32> to vector<1xi32>
    %292 = vector.shape_cast %291 : vector<1xi32> to vector<1x1x1xi32>
    %293 = vector.extract %292[0, 0, 0] : i32 from vector<1x1x1xi32>
    %c819_i32_69 = arith.constant 819 : i32
    %294 = arith.cmpi sge, %293, %c819_i32_69 : i32
    %295 = arith.select %294, %286, %282 : f32
    %296 = arith.minimumf %284, %286 : f32
    %297 = arith.select %294, %284, %296 : f32
    %c3_i32 = arith.constant 3 : i32
    %298 = arith.subf %297, %295 : f32
    %299 = arith.mulf %298, %cst_7 : f32
    %cst_70 = arith.constant 1.000000e+00 : f32
    %300 = arith.mulf %299, %cst_70 : f32
    %301 = arith.addf %295, %300 : f32
    %302 = vector.broadcast %301 : f32 to vector<8x128xf32>
    %303 = arith.cmpf oge, %10, %302 : vector<8x128xf32>
    %304 = arith.extui %303 : vector<8x128xi1> to vector<8x128xi32>
    %305 = vector.shape_cast %304 : vector<8x128xi32> to vector<1x8x128xi32>
    %cst_71 = arith.constant dense<0> : vector<1xi32>
    %306 = vector.multi_reduction <add>, %305, %cst_71 [1, 2] : vector<1x8x128xi32> to vector<1xi32>
    %307 = vector.shape_cast %306 : vector<1xi32> to vector<1x1x1xi32>
    %308 = vector.extract %307[0, 0, 0] : i32 from vector<1x1x1xi32>
    %c819_i32_72 = arith.constant 819 : i32
    %309 = arith.cmpi sge, %308, %c819_i32_72 : i32
    %310 = arith.select %309, %301, %295 : f32
    %311 = arith.minimumf %297, %301 : f32
    %312 = arith.select %309, %297, %311 : f32
    %cst_73 = arith.constant 2.000000e+00 : f32
    %313 = arith.mulf %299, %cst_73 : f32
    %314 = arith.addf %295, %313 : f32
    %315 = vector.broadcast %314 : f32 to vector<8x128xf32>
    %316 = arith.cmpf oge, %10, %315 : vector<8x128xf32>
    %317 = arith.extui %316 : vector<8x128xi1> to vector<8x128xi32>
    %318 = vector.shape_cast %317 : vector<8x128xi32> to vector<1x8x128xi32>
    %cst_74 = arith.constant dense<0> : vector<1xi32>
    %319 = vector.multi_reduction <add>, %318, %cst_74 [1, 2] : vector<1x8x128xi32> to vector<1xi32>
    %320 = vector.shape_cast %319 : vector<1xi32> to vector<1x1x1xi32>
    %321 = vector.extract %320[0, 0, 0] : i32 from vector<1x1x1xi32>
    %c819_i32_75 = arith.constant 819 : i32
    %322 = arith.cmpi sge, %321, %c819_i32_75 : i32
    %323 = arith.select %322, %314, %310 : f32
    %324 = arith.minimumf %312, %314 : f32
    %325 = arith.select %322, %312, %324 : f32
    %cst_76 = arith.constant 3.000000e+00 : f32
    %326 = arith.mulf %299, %cst_76 : f32
    %327 = arith.addf %295, %326 : f32
    %328 = vector.broadcast %327 : f32 to vector<8x128xf32>
    %329 = arith.cmpf oge, %10, %328 : vector<8x128xf32>
    %330 = arith.extui %329 : vector<8x128xi1> to vector<8x128xi32>
    %331 = vector.shape_cast %330 : vector<8x128xi32> to vector<1x8x128xi32>
    %cst_77 = arith.constant dense<0> : vector<1xi32>
    %332 = vector.multi_reduction <add>, %331, %cst_77 [1, 2] : vector<1x8x128xi32> to vector<1xi32>
    %333 = vector.shape_cast %332 : vector<1xi32> to vector<1x1x1xi32>
    %334 = vector.extract %333[0, 0, 0] : i32 from vector<1x1x1xi32>
    %c819_i32_78 = arith.constant 819 : i32
    %335 = arith.cmpi sge, %334, %c819_i32_78 : i32
    %336 = arith.select %335, %327, %323 : f32
    %337 = arith.minimumf %325, %327 : f32
    %338 = arith.select %335, %325, %337 : f32
    %cst_79 = arith.constant 4.000000e+00 : f32
    %339 = arith.mulf %299, %cst_79 : f32
    %340 = arith.addf %295, %339 : f32
    %341 = vector.broadcast %340 : f32 to vector<8x128xf32>
    %342 = arith.cmpf oge, %10, %341 : vector<8x128xf32>
    %343 = arith.extui %342 : vector<8x128xi1> to vector<8x128xi32>
    %344 = vector.shape_cast %343 : vector<8x128xi32> to vector<1x8x128xi32>
    %cst_80 = arith.constant dense<0> : vector<1xi32>
    %345 = vector.multi_reduction <add>, %344, %cst_80 [1, 2] : vector<1x8x128xi32> to vector<1xi32>
    %346 = vector.shape_cast %345 : vector<1xi32> to vector<1x1x1xi32>
    %347 = vector.extract %346[0, 0, 0] : i32 from vector<1x1x1xi32>
    %c819_i32_81 = arith.constant 819 : i32
    %348 = arith.cmpi sge, %347, %c819_i32_81 : i32
    %349 = arith.select %348, %340, %336 : f32
    %350 = arith.minimumf %338, %340 : f32
    %351 = arith.select %348, %338, %350 : f32
    %cst_82 = arith.constant 5.000000e+00 : f32
    %352 = arith.mulf %299, %cst_82 : f32
    %353 = arith.addf %295, %352 : f32
    %354 = vector.broadcast %353 : f32 to vector<8x128xf32>
    %355 = arith.cmpf oge, %10, %354 : vector<8x128xf32>
    %356 = arith.extui %355 : vector<8x128xi1> to vector<8x128xi32>
    %357 = vector.shape_cast %356 : vector<8x128xi32> to vector<1x8x128xi32>
    %cst_83 = arith.constant dense<0> : vector<1xi32>
    %358 = vector.multi_reduction <add>, %357, %cst_83 [1, 2] : vector<1x8x128xi32> to vector<1xi32>
    %359 = vector.shape_cast %358 : vector<1xi32> to vector<1x1x1xi32>
    %360 = vector.extract %359[0, 0, 0] : i32 from vector<1x1x1xi32>
    %c819_i32_84 = arith.constant 819 : i32
    %361 = arith.cmpi sge, %360, %c819_i32_84 : i32
    %362 = arith.select %361, %353, %349 : f32
    %363 = arith.minimumf %351, %353 : f32
    %364 = arith.select %361, %351, %363 : f32
    %cst_85 = arith.constant 6.000000e+00 : f32
    %365 = arith.mulf %299, %cst_85 : f32
    %366 = arith.addf %295, %365 : f32
    %367 = vector.broadcast %366 : f32 to vector<8x128xf32>
    %368 = arith.cmpf oge, %10, %367 : vector<8x128xf32>
    %369 = arith.extui %368 : vector<8x128xi1> to vector<8x128xi32>
    %370 = vector.shape_cast %369 : vector<8x128xi32> to vector<1x8x128xi32>
    %cst_86 = arith.constant dense<0> : vector<1xi32>
    %371 = vector.multi_reduction <add>, %370, %cst_86 [1, 2] : vector<1x8x128xi32> to vector<1xi32>
    %372 = vector.shape_cast %371 : vector<1xi32> to vector<1x1x1xi32>
    %373 = vector.extract %372[0, 0, 0] : i32 from vector<1x1x1xi32>
    %c819_i32_87 = arith.constant 819 : i32
    %374 = arith.cmpi sge, %373, %c819_i32_87 : i32
    %375 = arith.select %374, %366, %362 : f32
    %376 = arith.minimumf %364, %366 : f32
    %377 = arith.select %374, %364, %376 : f32
    %cst_88 = arith.constant 7.000000e+00 : f32
    %378 = arith.mulf %299, %cst_88 : f32
    %379 = arith.addf %295, %378 : f32
    %380 = vector.broadcast %379 : f32 to vector<8x128xf32>
    %381 = arith.cmpf oge, %10, %380 : vector<8x128xf32>
    %382 = arith.extui %381 : vector<8x128xi1> to vector<8x128xi32>
    %383 = vector.shape_cast %382 : vector<8x128xi32> to vector<1x8x128xi32>
    %cst_89 = arith.constant dense<0> : vector<1xi32>
    %384 = vector.multi_reduction <add>, %383, %cst_89 [1, 2] : vector<1x8x128xi32> to vector<1xi32>
    %385 = vector.shape_cast %384 : vector<1xi32> to vector<1x1x1xi32>
    %386 = vector.extract %385[0, 0, 0] : i32 from vector<1x1x1xi32>
    %c819_i32_90 = arith.constant 819 : i32
    %387 = arith.cmpi sge, %386, %c819_i32_90 : i32
    %388 = arith.select %387, %379, %375 : f32
    %389 = arith.minimumf %377, %379 : f32
    %390 = arith.select %387, %377, %389 : f32
    %c4_i32 = arith.constant 4 : i32
    %391 = arith.subf %390, %388 : f32
    %392 = arith.mulf %391, %cst_7 : f32
    %cst_91 = arith.constant 1.000000e+00 : f32
    %393 = arith.mulf %392, %cst_91 : f32
    %394 = arith.addf %388, %393 : f32
    %395 = vector.broadcast %394 : f32 to vector<8x128xf32>
    %396 = arith.cmpf oge, %10, %395 : vector<8x128xf32>
    %397 = arith.extui %396 : vector<8x128xi1> to vector<8x128xi32>
    %398 = vector.shape_cast %397 : vector<8x128xi32> to vector<1x8x128xi32>
    %cst_92 = arith.constant dense<0> : vector<1xi32>
    %399 = vector.multi_reduction <add>, %398, %cst_92 [1, 2] : vector<1x8x128xi32> to vector<1xi32>
    %400 = vector.shape_cast %399 : vector<1xi32> to vector<1x1x1xi32>
    %401 = vector.extract %400[0, 0, 0] : i32 from vector<1x1x1xi32>
    %c819_i32_93 = arith.constant 819 : i32
    %402 = arith.cmpi sge, %401, %c819_i32_93 : i32
    %403 = arith.select %402, %394, %388 : f32
    %404 = arith.minimumf %390, %394 : f32
    %405 = arith.select %402, %390, %404 : f32
    %cst_94 = arith.constant 2.000000e+00 : f32
    %406 = arith.mulf %392, %cst_94 : f32
    %407 = arith.addf %388, %406 : f32
    %408 = vector.broadcast %407 : f32 to vector<8x128xf32>
    %409 = arith.cmpf oge, %10, %408 : vector<8x128xf32>
    %410 = arith.extui %409 : vector<8x128xi1> to vector<8x128xi32>
    %411 = vector.shape_cast %410 : vector<8x128xi32> to vector<1x8x128xi32>
    %cst_95 = arith.constant dense<0> : vector<1xi32>
    %412 = vector.multi_reduction <add>, %411, %cst_95 [1, 2] : vector<1x8x128xi32> to vector<1xi32>
    %413 = vector.shape_cast %412 : vector<1xi32> to vector<1x1x1xi32>
    %414 = vector.extract %413[0, 0, 0] : i32 from vector<1x1x1xi32>
    %c819_i32_96 = arith.constant 819 : i32
    %415 = arith.cmpi sge, %414, %c819_i32_96 : i32
    %416 = arith.select %415, %407, %403 : f32
    %417 = arith.minimumf %405, %407 : f32
    %418 = arith.select %415, %405, %417 : f32
    %cst_97 = arith.constant 3.000000e+00 : f32
    %419 = arith.mulf %392, %cst_97 : f32
    %420 = arith.addf %388, %419 : f32
    %421 = vector.broadcast %420 : f32 to vector<8x128xf32>
    %422 = arith.cmpf oge, %10, %421 : vector<8x128xf32>
    %423 = arith.extui %422 : vector<8x128xi1> to vector<8x128xi32>
    %424 = vector.shape_cast %423 : vector<8x128xi32> to vector<1x8x128xi32>
    %cst_98 = arith.constant dense<0> : vector<1xi32>
    %425 = vector.multi_reduction <add>, %424, %cst_98 [1, 2] : vector<1x8x128xi32> to vector<1xi32>
    %426 = vector.shape_cast %425 : vector<1xi32> to vector<1x1x1xi32>
    %427 = vector.extract %426[0, 0, 0] : i32 from vector<1x1x1xi32>
    %c819_i32_99 = arith.constant 819 : i32
    %428 = arith.cmpi sge, %427, %c819_i32_99 : i32
    %429 = arith.select %428, %420, %416 : f32
    %430 = arith.minimumf %418, %420 : f32
    %431 = arith.select %428, %418, %430 : f32
    %cst_100 = arith.constant 4.000000e+00 : f32
    %432 = arith.mulf %392, %cst_100 : f32
    %433 = arith.addf %388, %432 : f32
    %434 = vector.broadcast %433 : f32 to vector<8x128xf32>
    %435 = arith.cmpf oge, %10, %434 : vector<8x128xf32>
    %436 = arith.extui %435 : vector<8x128xi1> to vector<8x128xi32>
    %437 = vector.shape_cast %436 : vector<8x128xi32> to vector<1x8x128xi32>
    %cst_101 = arith.constant dense<0> : vector<1xi32>
    %438 = vector.multi_reduction <add>, %437, %cst_101 [1, 2] : vector<1x8x128xi32> to vector<1xi32>
    %439 = vector.shape_cast %438 : vector<1xi32> to vector<1x1x1xi32>
    %440 = vector.extract %439[0, 0, 0] : i32 from vector<1x1x1xi32>
    %c819_i32_102 = arith.constant 819 : i32
    %441 = arith.cmpi sge, %440, %c819_i32_102 : i32
    %442 = arith.select %441, %433, %429 : f32
    %443 = arith.minimumf %431, %433 : f32
    %444 = arith.select %441, %431, %443 : f32
    %cst_103 = arith.constant 5.000000e+00 : f32
    %445 = arith.mulf %392, %cst_103 : f32
    %446 = arith.addf %388, %445 : f32
    %447 = vector.broadcast %446 : f32 to vector<8x128xf32>
    %448 = arith.cmpf oge, %10, %447 : vector<8x128xf32>
    %449 = arith.extui %448 : vector<8x128xi1> to vector<8x128xi32>
    %450 = vector.shape_cast %449 : vector<8x128xi32> to vector<1x8x128xi32>
    %cst_104 = arith.constant dense<0> : vector<1xi32>
    %451 = vector.multi_reduction <add>, %450, %cst_104 [1, 2] : vector<1x8x128xi32> to vector<1xi32>
    %452 = vector.shape_cast %451 : vector<1xi32> to vector<1x1x1xi32>
    %453 = vector.extract %452[0, 0, 0] : i32 from vector<1x1x1xi32>
    %c819_i32_105 = arith.constant 819 : i32
    %454 = arith.cmpi sge, %453, %c819_i32_105 : i32
    %455 = arith.select %454, %446, %442 : f32
    %456 = arith.minimumf %444, %446 : f32
    %457 = arith.select %454, %444, %456 : f32
    %cst_106 = arith.constant 6.000000e+00 : f32
    %458 = arith.mulf %392, %cst_106 : f32
    %459 = arith.addf %388, %458 : f32
    %460 = vector.broadcast %459 : f32 to vector<8x128xf32>
    %461 = arith.cmpf oge, %10, %460 : vector<8x128xf32>
    %462 = arith.extui %461 : vector<8x128xi1> to vector<8x128xi32>
    %463 = vector.shape_cast %462 : vector<8x128xi32> to vector<1x8x128xi32>
    %cst_107 = arith.constant dense<0> : vector<1xi32>
    %464 = vector.multi_reduction <add>, %463, %cst_107 [1, 2] : vector<1x8x128xi32> to vector<1xi32>
    %465 = vector.shape_cast %464 : vector<1xi32> to vector<1x1x1xi32>
    %466 = vector.extract %465[0, 0, 0] : i32 from vector<1x1x1xi32>
    %c819_i32_108 = arith.constant 819 : i32
    %467 = arith.cmpi sge, %466, %c819_i32_108 : i32
    %468 = arith.select %467, %459, %455 : f32
    %469 = arith.minimumf %457, %459 : f32
    %470 = arith.select %467, %457, %469 : f32
    %cst_109 = arith.constant 7.000000e+00 : f32
    %471 = arith.mulf %392, %cst_109 : f32
    %472 = arith.addf %388, %471 : f32
    %473 = vector.broadcast %472 : f32 to vector<8x128xf32>
    %474 = arith.cmpf oge, %10, %473 : vector<8x128xf32>
    %475 = arith.extui %474 : vector<8x128xi1> to vector<8x128xi32>
    %476 = vector.shape_cast %475 : vector<8x128xi32> to vector<1x8x128xi32>
    %cst_110 = arith.constant dense<0> : vector<1xi32>
    %477 = vector.multi_reduction <add>, %476, %cst_110 [1, 2] : vector<1x8x128xi32> to vector<1xi32>
    %478 = vector.shape_cast %477 : vector<1xi32> to vector<1x1x1xi32>
    %479 = vector.extract %478[0, 0, 0] : i32 from vector<1x1x1xi32>
    %c819_i32_111 = arith.constant 819 : i32
    %480 = arith.cmpi sge, %479, %c819_i32_111 : i32
    %481 = arith.select %480, %472, %468 : f32
    %482 = arith.minimumf %470, %472 : f32
    %483 = arith.select %480, %470, %482 : f32
    %c5_i32 = arith.constant 5 : i32
    %484 = arith.subf %483, %481 : f32
    %485 = arith.mulf %484, %cst_7 : f32
    %cst_112 = arith.constant 1.000000e+00 : f32
    %486 = arith.mulf %485, %cst_112 : f32
    %487 = arith.addf %481, %486 : f32
    %488 = vector.broadcast %487 : f32 to vector<8x128xf32>
    %489 = arith.cmpf oge, %10, %488 : vector<8x128xf32>
    %490 = arith.extui %489 : vector<8x128xi1> to vector<8x128xi32>
    %491 = vector.shape_cast %490 : vector<8x128xi32> to vector<1x8x128xi32>
    %cst_113 = arith.constant dense<0> : vector<1xi32>
    %492 = vector.multi_reduction <add>, %491, %cst_113 [1, 2] : vector<1x8x128xi32> to vector<1xi32>
    %493 = vector.shape_cast %492 : vector<1xi32> to vector<1x1x1xi32>
    %494 = vector.extract %493[0, 0, 0] : i32 from vector<1x1x1xi32>
    %c819_i32_114 = arith.constant 819 : i32
    %495 = arith.cmpi sge, %494, %c819_i32_114 : i32
    %496 = arith.select %495, %487, %481 : f32
    %497 = arith.minimumf %483, %487 : f32
    %498 = arith.select %495, %483, %497 : f32
    %cst_115 = arith.constant 2.000000e+00 : f32
    %499 = arith.mulf %485, %cst_115 : f32
    %500 = arith.addf %481, %499 : f32
    %501 = vector.broadcast %500 : f32 to vector<8x128xf32>
    %502 = arith.cmpf oge, %10, %501 : vector<8x128xf32>
    %503 = arith.extui %502 : vector<8x128xi1> to vector<8x128xi32>
    %504 = vector.shape_cast %503 : vector<8x128xi32> to vector<1x8x128xi32>
    %cst_116 = arith.constant dense<0> : vector<1xi32>
    %505 = vector.multi_reduction <add>, %504, %cst_116 [1, 2] : vector<1x8x128xi32> to vector<1xi32>
    %506 = vector.shape_cast %505 : vector<1xi32> to vector<1x1x1xi32>
    %507 = vector.extract %506[0, 0, 0] : i32 from vector<1x1x1xi32>
    %c819_i32_117 = arith.constant 819 : i32
    %508 = arith.cmpi sge, %507, %c819_i32_117 : i32
    %509 = arith.select %508, %500, %496 : f32
    %510 = arith.minimumf %498, %500 : f32
    %511 = arith.select %508, %498, %510 : f32
    %cst_118 = arith.constant 3.000000e+00 : f32
    %512 = arith.mulf %485, %cst_118 : f32
    %513 = arith.addf %481, %512 : f32
    %514 = vector.broadcast %513 : f32 to vector<8x128xf32>
    %515 = arith.cmpf oge, %10, %514 : vector<8x128xf32>
    %516 = arith.extui %515 : vector<8x128xi1> to vector<8x128xi32>
    %517 = vector.shape_cast %516 : vector<8x128xi32> to vector<1x8x128xi32>
    %cst_119 = arith.constant dense<0> : vector<1xi32>
    %518 = vector.multi_reduction <add>, %517, %cst_119 [1, 2] : vector<1x8x128xi32> to vector<1xi32>
    %519 = vector.shape_cast %518 : vector<1xi32> to vector<1x1x1xi32>
    %520 = vector.extract %519[0, 0, 0] : i32 from vector<1x1x1xi32>
    %c819_i32_120 = arith.constant 819 : i32
    %521 = arith.cmpi sge, %520, %c819_i32_120 : i32
    %522 = arith.select %521, %513, %509 : f32
    %523 = arith.minimumf %511, %513 : f32
    %524 = arith.select %521, %511, %523 : f32
    %cst_121 = arith.constant 4.000000e+00 : f32
    %525 = arith.mulf %485, %cst_121 : f32
    %526 = arith.addf %481, %525 : f32
    %527 = vector.broadcast %526 : f32 to vector<8x128xf32>
    %528 = arith.cmpf oge, %10, %527 : vector<8x128xf32>
    %529 = arith.extui %528 : vector<8x128xi1> to vector<8x128xi32>
    %530 = vector.shape_cast %529 : vector<8x128xi32> to vector<1x8x128xi32>
    %cst_122 = arith.constant dense<0> : vector<1xi32>
    %531 = vector.multi_reduction <add>, %530, %cst_122 [1, 2] : vector<1x8x128xi32> to vector<1xi32>
    %532 = vector.shape_cast %531 : vector<1xi32> to vector<1x1x1xi32>
    %533 = vector.extract %532[0, 0, 0] : i32 from vector<1x1x1xi32>
    %c819_i32_123 = arith.constant 819 : i32
    %534 = arith.cmpi sge, %533, %c819_i32_123 : i32
    %535 = arith.select %534, %526, %522 : f32
    %536 = arith.minimumf %524, %526 : f32
    %537 = arith.select %534, %524, %536 : f32
    %cst_124 = arith.constant 5.000000e+00 : f32
    %538 = arith.mulf %485, %cst_124 : f32
    %539 = arith.addf %481, %538 : f32
    %540 = vector.broadcast %539 : f32 to vector<8x128xf32>
    %541 = arith.cmpf oge, %10, %540 : vector<8x128xf32>
    %542 = arith.extui %541 : vector<8x128xi1> to vector<8x128xi32>
    %543 = vector.shape_cast %542 : vector<8x128xi32> to vector<1x8x128xi32>
    %cst_125 = arith.constant dense<0> : vector<1xi32>
    %544 = vector.multi_reduction <add>, %543, %cst_125 [1, 2] : vector<1x8x128xi32> to vector<1xi32>
    %545 = vector.shape_cast %544 : vector<1xi32> to vector<1x1x1xi32>
    %546 = vector.extract %545[0, 0, 0] : i32 from vector<1x1x1xi32>
    %c819_i32_126 = arith.constant 819 : i32
    %547 = arith.cmpi sge, %546, %c819_i32_126 : i32
    %548 = arith.select %547, %539, %535 : f32
    %549 = arith.minimumf %537, %539 : f32
    %550 = arith.select %547, %537, %549 : f32
    %cst_127 = arith.constant 6.000000e+00 : f32
    %551 = arith.mulf %485, %cst_127 : f32
    %552 = arith.addf %481, %551 : f32
    %553 = vector.broadcast %552 : f32 to vector<8x128xf32>
    %554 = arith.cmpf oge, %10, %553 : vector<8x128xf32>
    %555 = arith.extui %554 : vector<8x128xi1> to vector<8x128xi32>
    %556 = vector.shape_cast %555 : vector<8x128xi32> to vector<1x8x128xi32>
    %cst_128 = arith.constant dense<0> : vector<1xi32>
    %557 = vector.multi_reduction <add>, %556, %cst_128 [1, 2] : vector<1x8x128xi32> to vector<1xi32>
    %558 = vector.shape_cast %557 : vector<1xi32> to vector<1x1x1xi32>
    %559 = vector.extract %558[0, 0, 0] : i32 from vector<1x1x1xi32>
    %c819_i32_129 = arith.constant 819 : i32
    %560 = arith.cmpi sge, %559, %c819_i32_129 : i32
    %561 = arith.select %560, %552, %548 : f32
    %562 = arith.minimumf %550, %552 : f32
    %563 = arith.select %560, %550, %562 : f32
    %cst_130 = arith.constant 7.000000e+00 : f32
    %564 = arith.mulf %485, %cst_130 : f32
    %565 = arith.addf %481, %564 : f32
    %566 = vector.broadcast %565 : f32 to vector<8x128xf32>
    %567 = arith.cmpf oge, %10, %566 : vector<8x128xf32>
    %568 = arith.extui %567 : vector<8x128xi1> to vector<8x128xi32>
    %569 = vector.shape_cast %568 : vector<8x128xi32> to vector<1x8x128xi32>
    %cst_131 = arith.constant dense<0> : vector<1xi32>
    %570 = vector.multi_reduction <add>, %569, %cst_131 [1, 2] : vector<1x8x128xi32> to vector<1xi32>
    %571 = vector.shape_cast %570 : vector<1xi32> to vector<1x1x1xi32>
    %572 = vector.extract %571[0, 0, 0] : i32 from vector<1x1x1xi32>
    %c819_i32_132 = arith.constant 819 : i32
    %573 = arith.cmpi sge, %572, %c819_i32_132 : i32
    %574 = arith.select %573, %565, %561 : f32
    %575 = arith.minimumf %563, %565 : f32
    %576 = arith.select %573, %563, %575 : f32
    %c6_i32 = arith.constant 6 : i32
    %577 = arith.subf %576, %574 : f32
    %578 = arith.mulf %577, %cst_7 : f32
    %cst_133 = arith.constant 1.000000e+00 : f32
    %579 = arith.mulf %578, %cst_133 : f32
    %580 = arith.addf %574, %579 : f32
    %581 = vector.broadcast %580 : f32 to vector<8x128xf32>
    %582 = arith.cmpf oge, %10, %581 : vector<8x128xf32>
    %583 = arith.extui %582 : vector<8x128xi1> to vector<8x128xi32>
    %584 = vector.shape_cast %583 : vector<8x128xi32> to vector<1x8x128xi32>
    %cst_134 = arith.constant dense<0> : vector<1xi32>
    %585 = vector.multi_reduction <add>, %584, %cst_134 [1, 2] : vector<1x8x128xi32> to vector<1xi32>
    %586 = vector.shape_cast %585 : vector<1xi32> to vector<1x1x1xi32>
    %587 = vector.extract %586[0, 0, 0] : i32 from vector<1x1x1xi32>
    %c819_i32_135 = arith.constant 819 : i32
    %588 = arith.cmpi sge, %587, %c819_i32_135 : i32
    %589 = arith.select %588, %580, %574 : f32
    %590 = arith.minimumf %576, %580 : f32
    %591 = arith.select %588, %576, %590 : f32
    %cst_136 = arith.constant 2.000000e+00 : f32
    %592 = arith.mulf %578, %cst_136 : f32
    %593 = arith.addf %574, %592 : f32
    %594 = vector.broadcast %593 : f32 to vector<8x128xf32>
    %595 = arith.cmpf oge, %10, %594 : vector<8x128xf32>
    %596 = arith.extui %595 : vector<8x128xi1> to vector<8x128xi32>
    %597 = vector.shape_cast %596 : vector<8x128xi32> to vector<1x8x128xi32>
    %cst_137 = arith.constant dense<0> : vector<1xi32>
    %598 = vector.multi_reduction <add>, %597, %cst_137 [1, 2] : vector<1x8x128xi32> to vector<1xi32>
    %599 = vector.shape_cast %598 : vector<1xi32> to vector<1x1x1xi32>
    %600 = vector.extract %599[0, 0, 0] : i32 from vector<1x1x1xi32>
    %c819_i32_138 = arith.constant 819 : i32
    %601 = arith.cmpi sge, %600, %c819_i32_138 : i32
    %602 = arith.select %601, %593, %589 : f32
    %603 = arith.minimumf %591, %593 : f32
    %604 = arith.select %601, %591, %603 : f32
    %cst_139 = arith.constant 3.000000e+00 : f32
    %605 = arith.mulf %578, %cst_139 : f32
    %606 = arith.addf %574, %605 : f32
    %607 = vector.broadcast %606 : f32 to vector<8x128xf32>
    %608 = arith.cmpf oge, %10, %607 : vector<8x128xf32>
    %609 = arith.extui %608 : vector<8x128xi1> to vector<8x128xi32>
    %610 = vector.shape_cast %609 : vector<8x128xi32> to vector<1x8x128xi32>
    %cst_140 = arith.constant dense<0> : vector<1xi32>
    %611 = vector.multi_reduction <add>, %610, %cst_140 [1, 2] : vector<1x8x128xi32> to vector<1xi32>
    %612 = vector.shape_cast %611 : vector<1xi32> to vector<1x1x1xi32>
    %613 = vector.extract %612[0, 0, 0] : i32 from vector<1x1x1xi32>
    %c819_i32_141 = arith.constant 819 : i32
    %614 = arith.cmpi sge, %613, %c819_i32_141 : i32
    %615 = arith.select %614, %606, %602 : f32
    %616 = arith.minimumf %604, %606 : f32
    %617 = arith.select %614, %604, %616 : f32
    %cst_142 = arith.constant 4.000000e+00 : f32
    %618 = arith.mulf %578, %cst_142 : f32
    %619 = arith.addf %574, %618 : f32
    %620 = vector.broadcast %619 : f32 to vector<8x128xf32>
    %621 = arith.cmpf oge, %10, %620 : vector<8x128xf32>
    %622 = arith.extui %621 : vector<8x128xi1> to vector<8x128xi32>
    %623 = vector.shape_cast %622 : vector<8x128xi32> to vector<1x8x128xi32>
    %cst_143 = arith.constant dense<0> : vector<1xi32>
    %624 = vector.multi_reduction <add>, %623, %cst_143 [1, 2] : vector<1x8x128xi32> to vector<1xi32>
    %625 = vector.shape_cast %624 : vector<1xi32> to vector<1x1x1xi32>
    %626 = vector.extract %625[0, 0, 0] : i32 from vector<1x1x1xi32>
    %c819_i32_144 = arith.constant 819 : i32
    %627 = arith.cmpi sge, %626, %c819_i32_144 : i32
    %628 = arith.select %627, %619, %615 : f32
    %629 = arith.minimumf %617, %619 : f32
    %630 = arith.select %627, %617, %629 : f32
    %cst_145 = arith.constant 5.000000e+00 : f32
    %631 = arith.mulf %578, %cst_145 : f32
    %632 = arith.addf %574, %631 : f32
    %633 = vector.broadcast %632 : f32 to vector<8x128xf32>
    %634 = arith.cmpf oge, %10, %633 : vector<8x128xf32>
    %635 = arith.extui %634 : vector<8x128xi1> to vector<8x128xi32>
    %636 = vector.shape_cast %635 : vector<8x128xi32> to vector<1x8x128xi32>
    %cst_146 = arith.constant dense<0> : vector<1xi32>
    %637 = vector.multi_reduction <add>, %636, %cst_146 [1, 2] : vector<1x8x128xi32> to vector<1xi32>
    %638 = vector.shape_cast %637 : vector<1xi32> to vector<1x1x1xi32>
    %639 = vector.extract %638[0, 0, 0] : i32 from vector<1x1x1xi32>
    %c819_i32_147 = arith.constant 819 : i32
    %640 = arith.cmpi sge, %639, %c819_i32_147 : i32
    %641 = arith.select %640, %632, %628 : f32
    %642 = arith.minimumf %630, %632 : f32
    %643 = arith.select %640, %630, %642 : f32
    %cst_148 = arith.constant 6.000000e+00 : f32
    %644 = arith.mulf %578, %cst_148 : f32
    %645 = arith.addf %574, %644 : f32
    %646 = vector.broadcast %645 : f32 to vector<8x128xf32>
    %647 = arith.cmpf oge, %10, %646 : vector<8x128xf32>
    %648 = arith.extui %647 : vector<8x128xi1> to vector<8x128xi32>
    %649 = vector.shape_cast %648 : vector<8x128xi32> to vector<1x8x128xi32>
    %cst_149 = arith.constant dense<0> : vector<1xi32>
    %650 = vector.multi_reduction <add>, %649, %cst_149 [1, 2] : vector<1x8x128xi32> to vector<1xi32>
    %651 = vector.shape_cast %650 : vector<1xi32> to vector<1x1x1xi32>
    %652 = vector.extract %651[0, 0, 0] : i32 from vector<1x1x1xi32>
    %c819_i32_150 = arith.constant 819 : i32
    %653 = arith.cmpi sge, %652, %c819_i32_150 : i32
    %654 = arith.select %653, %645, %641 : f32
    %655 = arith.minimumf %643, %645 : f32
    %656 = arith.select %653, %643, %655 : f32
    %cst_151 = arith.constant 7.000000e+00 : f32
    %657 = arith.mulf %578, %cst_151 : f32
    %658 = arith.addf %574, %657 : f32
    %659 = vector.broadcast %658 : f32 to vector<8x128xf32>
    %660 = arith.cmpf oge, %10, %659 : vector<8x128xf32>
    %661 = arith.extui %660 : vector<8x128xi1> to vector<8x128xi32>
    %662 = vector.shape_cast %661 : vector<8x128xi32> to vector<1x8x128xi32>
    %cst_152 = arith.constant dense<0> : vector<1xi32>
    %663 = vector.multi_reduction <add>, %662, %cst_152 [1, 2] : vector<1x8x128xi32> to vector<1xi32>
    %664 = vector.shape_cast %663 : vector<1xi32> to vector<1x1x1xi32>
    %665 = vector.extract %664[0, 0, 0] : i32 from vector<1x1x1xi32>
    %c819_i32_153 = arith.constant 819 : i32
    %666 = arith.cmpi sge, %665, %c819_i32_153 : i32
    %667 = arith.select %666, %658, %654 : f32
    %668 = arith.minimumf %656, %658 : f32
    %669 = arith.select %666, %656, %668 : f32
    %c7_i32 = arith.constant 7 : i32
    %670 = arith.subf %669, %667 : f32
    %671 = arith.mulf %670, %cst_7 : f32
    %cst_154 = arith.constant 1.000000e+00 : f32
    %672 = arith.mulf %671, %cst_154 : f32
    %673 = arith.addf %667, %672 : f32
    %674 = vector.broadcast %673 : f32 to vector<8x128xf32>
    %675 = arith.cmpf oge, %10, %674 : vector<8x128xf32>
    %676 = arith.extui %675 : vector<8x128xi1> to vector<8x128xi32>
    %677 = vector.shape_cast %676 : vector<8x128xi32> to vector<1x8x128xi32>
    %cst_155 = arith.constant dense<0> : vector<1xi32>
    %678 = vector.multi_reduction <add>, %677, %cst_155 [1, 2] : vector<1x8x128xi32> to vector<1xi32>
    %679 = vector.shape_cast %678 : vector<1xi32> to vector<1x1x1xi32>
    %680 = vector.extract %679[0, 0, 0] : i32 from vector<1x1x1xi32>
    %c819_i32_156 = arith.constant 819 : i32
    %681 = arith.cmpi sge, %680, %c819_i32_156 : i32
    %682 = arith.select %681, %673, %667 : f32
    %683 = arith.minimumf %669, %673 : f32
    %684 = arith.select %681, %669, %683 : f32
    %cst_157 = arith.constant 2.000000e+00 : f32
    %685 = arith.mulf %671, %cst_157 : f32
    %686 = arith.addf %667, %685 : f32
    %687 = vector.broadcast %686 : f32 to vector<8x128xf32>
    %688 = arith.cmpf oge, %10, %687 : vector<8x128xf32>
    %689 = arith.extui %688 : vector<8x128xi1> to vector<8x128xi32>
    %690 = vector.shape_cast %689 : vector<8x128xi32> to vector<1x8x128xi32>
    %cst_158 = arith.constant dense<0> : vector<1xi32>
    %691 = vector.multi_reduction <add>, %690, %cst_158 [1, 2] : vector<1x8x128xi32> to vector<1xi32>
    %692 = vector.shape_cast %691 : vector<1xi32> to vector<1x1x1xi32>
    %693 = vector.extract %692[0, 0, 0] : i32 from vector<1x1x1xi32>
    %c819_i32_159 = arith.constant 819 : i32
    %694 = arith.cmpi sge, %693, %c819_i32_159 : i32
    %695 = arith.select %694, %686, %682 : f32
    %696 = arith.minimumf %684, %686 : f32
    %697 = arith.select %694, %684, %696 : f32
    %cst_160 = arith.constant 3.000000e+00 : f32
    %698 = arith.mulf %671, %cst_160 : f32
    %699 = arith.addf %667, %698 : f32
    %700 = vector.broadcast %699 : f32 to vector<8x128xf32>
    %701 = arith.cmpf oge, %10, %700 : vector<8x128xf32>
    %702 = arith.extui %701 : vector<8x128xi1> to vector<8x128xi32>
    %703 = vector.shape_cast %702 : vector<8x128xi32> to vector<1x8x128xi32>
    %cst_161 = arith.constant dense<0> : vector<1xi32>
    %704 = vector.multi_reduction <add>, %703, %cst_161 [1, 2] : vector<1x8x128xi32> to vector<1xi32>
    %705 = vector.shape_cast %704 : vector<1xi32> to vector<1x1x1xi32>
    %706 = vector.extract %705[0, 0, 0] : i32 from vector<1x1x1xi32>
    %c819_i32_162 = arith.constant 819 : i32
    %707 = arith.cmpi sge, %706, %c819_i32_162 : i32
    %708 = arith.select %707, %699, %695 : f32
    %709 = arith.minimumf %697, %699 : f32
    %710 = arith.select %707, %697, %709 : f32
    %cst_163 = arith.constant 4.000000e+00 : f32
    %711 = arith.mulf %671, %cst_163 : f32
    %712 = arith.addf %667, %711 : f32
    %713 = vector.broadcast %712 : f32 to vector<8x128xf32>
    %714 = arith.cmpf oge, %10, %713 : vector<8x128xf32>
    %715 = arith.extui %714 : vector<8x128xi1> to vector<8x128xi32>
    %716 = vector.shape_cast %715 : vector<8x128xi32> to vector<1x8x128xi32>
    %cst_164 = arith.constant dense<0> : vector<1xi32>
    %717 = vector.multi_reduction <add>, %716, %cst_164 [1, 2] : vector<1x8x128xi32> to vector<1xi32>
    %718 = vector.shape_cast %717 : vector<1xi32> to vector<1x1x1xi32>
    %719 = vector.extract %718[0, 0, 0] : i32 from vector<1x1x1xi32>
    %c819_i32_165 = arith.constant 819 : i32
    %720 = arith.cmpi sge, %719, %c819_i32_165 : i32
    %721 = arith.select %720, %712, %708 : f32
    %722 = arith.minimumf %710, %712 : f32
    %723 = arith.select %720, %710, %722 : f32
    %cst_166 = arith.constant 5.000000e+00 : f32
    %724 = arith.mulf %671, %cst_166 : f32
    %725 = arith.addf %667, %724 : f32
    %726 = vector.broadcast %725 : f32 to vector<8x128xf32>
    %727 = arith.cmpf oge, %10, %726 : vector<8x128xf32>
    %728 = arith.extui %727 : vector<8x128xi1> to vector<8x128xi32>
    %729 = vector.shape_cast %728 : vector<8x128xi32> to vector<1x8x128xi32>
    %cst_167 = arith.constant dense<0> : vector<1xi32>
    %730 = vector.multi_reduction <add>, %729, %cst_167 [1, 2] : vector<1x8x128xi32> to vector<1xi32>
    %731 = vector.shape_cast %730 : vector<1xi32> to vector<1x1x1xi32>
    %732 = vector.extract %731[0, 0, 0] : i32 from vector<1x1x1xi32>
    %c819_i32_168 = arith.constant 819 : i32
    %733 = arith.cmpi sge, %732, %c819_i32_168 : i32
    %734 = arith.select %733, %725, %721 : f32
    %735 = arith.minimumf %723, %725 : f32
    %736 = arith.select %733, %723, %735 : f32
    %cst_169 = arith.constant 6.000000e+00 : f32
    %737 = arith.mulf %671, %cst_169 : f32
    %738 = arith.addf %667, %737 : f32
    %739 = vector.broadcast %738 : f32 to vector<8x128xf32>
    %740 = arith.cmpf oge, %10, %739 : vector<8x128xf32>
    %741 = arith.extui %740 : vector<8x128xi1> to vector<8x128xi32>
    %742 = vector.shape_cast %741 : vector<8x128xi32> to vector<1x8x128xi32>
    %cst_170 = arith.constant dense<0> : vector<1xi32>
    %743 = vector.multi_reduction <add>, %742, %cst_170 [1, 2] : vector<1x8x128xi32> to vector<1xi32>
    %744 = vector.shape_cast %743 : vector<1xi32> to vector<1x1x1xi32>
    %745 = vector.extract %744[0, 0, 0] : i32 from vector<1x1x1xi32>
    %c819_i32_171 = arith.constant 819 : i32
    %746 = arith.cmpi sge, %745, %c819_i32_171 : i32
    %747 = arith.select %746, %738, %734 : f32
    %748 = arith.minimumf %736, %738 : f32
    %749 = arith.select %746, %736, %748 : f32
    %cst_172 = arith.constant 7.000000e+00 : f32
    %750 = arith.mulf %671, %cst_172 : f32
    %751 = arith.addf %667, %750 : f32
    %752 = vector.broadcast %751 : f32 to vector<8x128xf32>
    %753 = arith.cmpf oge, %10, %752 : vector<8x128xf32>
    %754 = arith.extui %753 : vector<8x128xi1> to vector<8x128xi32>
    %755 = vector.shape_cast %754 : vector<8x128xi32> to vector<1x8x128xi32>
    %cst_173 = arith.constant dense<0> : vector<1xi32>
    %756 = vector.multi_reduction <add>, %755, %cst_173 [1, 2] : vector<1x8x128xi32> to vector<1xi32>
    %757 = vector.shape_cast %756 : vector<1xi32> to vector<1x1x1xi32>
    %758 = vector.extract %757[0, 0, 0] : i32 from vector<1x1x1xi32>
    %c819_i32_174 = arith.constant 819 : i32
    %759 = arith.cmpi sge, %758, %c819_i32_174 : i32
    %760 = arith.select %759, %751, %747 : f32
    %761 = arith.minimumf %749, %751 : f32
    %762 = arith.select %759, %749, %761 : f32
    %c8_i32 = arith.constant 8 : i32
    %763 = arith.subf %762, %760 : f32
    %764 = arith.mulf %763, %cst_7 : f32
    %cst_175 = arith.constant 1.000000e+00 : f32
    %765 = arith.mulf %764, %cst_175 : f32
    %766 = arith.addf %760, %765 : f32
    %767 = vector.broadcast %766 : f32 to vector<8x128xf32>
    %768 = arith.cmpf oge, %10, %767 : vector<8x128xf32>
    %769 = arith.extui %768 : vector<8x128xi1> to vector<8x128xi32>
    %770 = vector.shape_cast %769 : vector<8x128xi32> to vector<1x8x128xi32>
    %cst_176 = arith.constant dense<0> : vector<1xi32>
    %771 = vector.multi_reduction <add>, %770, %cst_176 [1, 2] : vector<1x8x128xi32> to vector<1xi32>
    %772 = vector.shape_cast %771 : vector<1xi32> to vector<1x1x1xi32>
    %773 = vector.extract %772[0, 0, 0] : i32 from vector<1x1x1xi32>
    %c819_i32_177 = arith.constant 819 : i32
    %774 = arith.cmpi sge, %773, %c819_i32_177 : i32
    %775 = arith.select %774, %766, %760 : f32
    %776 = arith.minimumf %762, %766 : f32
    %777 = arith.select %774, %762, %776 : f32
    %cst_178 = arith.constant 2.000000e+00 : f32
    %778 = arith.mulf %764, %cst_178 : f32
    %779 = arith.addf %760, %778 : f32
    %780 = vector.broadcast %779 : f32 to vector<8x128xf32>
    %781 = arith.cmpf oge, %10, %780 : vector<8x128xf32>
    %782 = arith.extui %781 : vector<8x128xi1> to vector<8x128xi32>
    %783 = vector.shape_cast %782 : vector<8x128xi32> to vector<1x8x128xi32>
    %cst_179 = arith.constant dense<0> : vector<1xi32>
    %784 = vector.multi_reduction <add>, %783, %cst_179 [1, 2] : vector<1x8x128xi32> to vector<1xi32>
    %785 = vector.shape_cast %784 : vector<1xi32> to vector<1x1x1xi32>
    %786 = vector.extract %785[0, 0, 0] : i32 from vector<1x1x1xi32>
    %c819_i32_180 = arith.constant 819 : i32
    %787 = arith.cmpi sge, %786, %c819_i32_180 : i32
    %788 = arith.select %787, %779, %775 : f32
    %789 = arith.minimumf %777, %779 : f32
    %790 = arith.select %787, %777, %789 : f32
    %cst_181 = arith.constant 3.000000e+00 : f32
    %791 = arith.mulf %764, %cst_181 : f32
    %792 = arith.addf %760, %791 : f32
    %793 = vector.broadcast %792 : f32 to vector<8x128xf32>
    %794 = arith.cmpf oge, %10, %793 : vector<8x128xf32>
    %795 = arith.extui %794 : vector<8x128xi1> to vector<8x128xi32>
    %796 = vector.shape_cast %795 : vector<8x128xi32> to vector<1x8x128xi32>
    %cst_182 = arith.constant dense<0> : vector<1xi32>
    %797 = vector.multi_reduction <add>, %796, %cst_182 [1, 2] : vector<1x8x128xi32> to vector<1xi32>
    %798 = vector.shape_cast %797 : vector<1xi32> to vector<1x1x1xi32>
    %799 = vector.extract %798[0, 0, 0] : i32 from vector<1x1x1xi32>
    %c819_i32_183 = arith.constant 819 : i32
    %800 = arith.cmpi sge, %799, %c819_i32_183 : i32
    %801 = arith.select %800, %792, %788 : f32
    %802 = arith.minimumf %790, %792 : f32
    %803 = arith.select %800, %790, %802 : f32
    %cst_184 = arith.constant 4.000000e+00 : f32
    %804 = arith.mulf %764, %cst_184 : f32
    %805 = arith.addf %760, %804 : f32
    %806 = vector.broadcast %805 : f32 to vector<8x128xf32>
    %807 = arith.cmpf oge, %10, %806 : vector<8x128xf32>
    %808 = arith.extui %807 : vector<8x128xi1> to vector<8x128xi32>
    %809 = vector.shape_cast %808 : vector<8x128xi32> to vector<1x8x128xi32>
    %cst_185 = arith.constant dense<0> : vector<1xi32>
    %810 = vector.multi_reduction <add>, %809, %cst_185 [1, 2] : vector<1x8x128xi32> to vector<1xi32>
    %811 = vector.shape_cast %810 : vector<1xi32> to vector<1x1x1xi32>
    %812 = vector.extract %811[0, 0, 0] : i32 from vector<1x1x1xi32>
    %c819_i32_186 = arith.constant 819 : i32
    %813 = arith.cmpi sge, %812, %c819_i32_186 : i32
    %814 = arith.select %813, %805, %801 : f32
    %815 = arith.minimumf %803, %805 : f32
    %816 = arith.select %813, %803, %815 : f32
    %cst_187 = arith.constant 5.000000e+00 : f32
    %817 = arith.mulf %764, %cst_187 : f32
    %818 = arith.addf %760, %817 : f32
    %819 = vector.broadcast %818 : f32 to vector<8x128xf32>
    %820 = arith.cmpf oge, %10, %819 : vector<8x128xf32>
    %821 = arith.extui %820 : vector<8x128xi1> to vector<8x128xi32>
    %822 = vector.shape_cast %821 : vector<8x128xi32> to vector<1x8x128xi32>
    %cst_188 = arith.constant dense<0> : vector<1xi32>
    %823 = vector.multi_reduction <add>, %822, %cst_188 [1, 2] : vector<1x8x128xi32> to vector<1xi32>
    %824 = vector.shape_cast %823 : vector<1xi32> to vector<1x1x1xi32>
    %825 = vector.extract %824[0, 0, 0] : i32 from vector<1x1x1xi32>
    %c819_i32_189 = arith.constant 819 : i32
    %826 = arith.cmpi sge, %825, %c819_i32_189 : i32
    %827 = arith.select %826, %818, %814 : f32
    %828 = arith.minimumf %816, %818 : f32
    %829 = arith.select %826, %816, %828 : f32
    %cst_190 = arith.constant 6.000000e+00 : f32
    %830 = arith.mulf %764, %cst_190 : f32
    %831 = arith.addf %760, %830 : f32
    %832 = vector.broadcast %831 : f32 to vector<8x128xf32>
    %833 = arith.cmpf oge, %10, %832 : vector<8x128xf32>
    %834 = arith.extui %833 : vector<8x128xi1> to vector<8x128xi32>
    %835 = vector.shape_cast %834 : vector<8x128xi32> to vector<1x8x128xi32>
    %cst_191 = arith.constant dense<0> : vector<1xi32>
    %836 = vector.multi_reduction <add>, %835, %cst_191 [1, 2] : vector<1x8x128xi32> to vector<1xi32>
    %837 = vector.shape_cast %836 : vector<1xi32> to vector<1x1x1xi32>
    %838 = vector.extract %837[0, 0, 0] : i32 from vector<1x1x1xi32>
    %c819_i32_192 = arith.constant 819 : i32
    %839 = arith.cmpi sge, %838, %c819_i32_192 : i32
    %840 = arith.select %839, %831, %827 : f32
    %841 = arith.minimumf %829, %831 : f32
    %842 = arith.select %839, %829, %841 : f32
    %cst_193 = arith.constant 7.000000e+00 : f32
    %843 = arith.mulf %764, %cst_193 : f32
    %844 = arith.addf %760, %843 : f32
    %845 = vector.broadcast %844 : f32 to vector<8x128xf32>
    %846 = arith.cmpf oge, %10, %845 : vector<8x128xf32>
    %847 = arith.extui %846 : vector<8x128xi1> to vector<8x128xi32>
    %848 = vector.shape_cast %847 : vector<8x128xi32> to vector<1x8x128xi32>
    %cst_194 = arith.constant dense<0> : vector<1xi32>
    %849 = vector.multi_reduction <add>, %848, %cst_194 [1, 2] : vector<1x8x128xi32> to vector<1xi32>
    %850 = vector.shape_cast %849 : vector<1xi32> to vector<1x1x1xi32>
    %851 = vector.extract %850[0, 0, 0] : i32 from vector<1x1x1xi32>
    %c819_i32_195 = arith.constant 819 : i32
    %852 = arith.cmpi sge, %851, %c819_i32_195 : i32
    %853 = arith.select %852, %844, %840 : f32
    %854 = arith.minimumf %842, %844 : f32
    %855 = arith.select %852, %842, %854 : f32
    %c9_i32 = arith.constant 9 : i32
    %856 = arith.subf %855, %853 : f32
    %857 = arith.mulf %856, %cst_7 : f32
    %cst_196 = arith.constant 1.000000e+00 : f32
    %858 = arith.mulf %857, %cst_196 : f32
    %859 = arith.addf %853, %858 : f32
    %860 = vector.broadcast %859 : f32 to vector<8x128xf32>
    %861 = arith.cmpf oge, %10, %860 : vector<8x128xf32>
    %862 = arith.extui %861 : vector<8x128xi1> to vector<8x128xi32>
    %863 = vector.shape_cast %862 : vector<8x128xi32> to vector<1x8x128xi32>
    %cst_197 = arith.constant dense<0> : vector<1xi32>
    %864 = vector.multi_reduction <add>, %863, %cst_197 [1, 2] : vector<1x8x128xi32> to vector<1xi32>
    %865 = vector.shape_cast %864 : vector<1xi32> to vector<1x1x1xi32>
    %866 = vector.extract %865[0, 0, 0] : i32 from vector<1x1x1xi32>
    %c819_i32_198 = arith.constant 819 : i32
    %867 = arith.cmpi sge, %866, %c819_i32_198 : i32
    %868 = arith.select %867, %859, %853 : f32
    %869 = arith.minimumf %855, %859 : f32
    %870 = arith.select %867, %855, %869 : f32
    %cst_199 = arith.constant 2.000000e+00 : f32
    %871 = arith.mulf %857, %cst_199 : f32
    %872 = arith.addf %853, %871 : f32
    %873 = vector.broadcast %872 : f32 to vector<8x128xf32>
    %874 = arith.cmpf oge, %10, %873 : vector<8x128xf32>
    %875 = arith.extui %874 : vector<8x128xi1> to vector<8x128xi32>
    %876 = vector.shape_cast %875 : vector<8x128xi32> to vector<1x8x128xi32>
    %cst_200 = arith.constant dense<0> : vector<1xi32>
    %877 = vector.multi_reduction <add>, %876, %cst_200 [1, 2] : vector<1x8x128xi32> to vector<1xi32>
    %878 = vector.shape_cast %877 : vector<1xi32> to vector<1x1x1xi32>
    %879 = vector.extract %878[0, 0, 0] : i32 from vector<1x1x1xi32>
    %c819_i32_201 = arith.constant 819 : i32
    %880 = arith.cmpi sge, %879, %c819_i32_201 : i32
    %881 = arith.select %880, %872, %868 : f32
    %882 = arith.minimumf %870, %872 : f32
    %883 = arith.select %880, %870, %882 : f32
    %cst_202 = arith.constant 3.000000e+00 : f32
    %884 = arith.mulf %857, %cst_202 : f32
    %885 = arith.addf %853, %884 : f32
    %886 = vector.broadcast %885 : f32 to vector<8x128xf32>
    %887 = arith.cmpf oge, %10, %886 : vector<8x128xf32>
    %888 = arith.extui %887 : vector<8x128xi1> to vector<8x128xi32>
    %889 = vector.shape_cast %888 : vector<8x128xi32> to vector<1x8x128xi32>
    %cst_203 = arith.constant dense<0> : vector<1xi32>
    %890 = vector.multi_reduction <add>, %889, %cst_203 [1, 2] : vector<1x8x128xi32> to vector<1xi32>
    %891 = vector.shape_cast %890 : vector<1xi32> to vector<1x1x1xi32>
    %892 = vector.extract %891[0, 0, 0] : i32 from vector<1x1x1xi32>
    %c819_i32_204 = arith.constant 819 : i32
    %893 = arith.cmpi sge, %892, %c819_i32_204 : i32
    %894 = arith.select %893, %885, %881 : f32
    %895 = arith.minimumf %883, %885 : f32
    %896 = arith.select %893, %883, %895 : f32
    %cst_205 = arith.constant 4.000000e+00 : f32
    %897 = arith.mulf %857, %cst_205 : f32
    %898 = arith.addf %853, %897 : f32
    %899 = vector.broadcast %898 : f32 to vector<8x128xf32>
    %900 = arith.cmpf oge, %10, %899 : vector<8x128xf32>
    %901 = arith.extui %900 : vector<8x128xi1> to vector<8x128xi32>
    %902 = vector.shape_cast %901 : vector<8x128xi32> to vector<1x8x128xi32>
    %cst_206 = arith.constant dense<0> : vector<1xi32>
    %903 = vector.multi_reduction <add>, %902, %cst_206 [1, 2] : vector<1x8x128xi32> to vector<1xi32>
    %904 = vector.shape_cast %903 : vector<1xi32> to vector<1x1x1xi32>
    %905 = vector.extract %904[0, 0, 0] : i32 from vector<1x1x1xi32>
    %c819_i32_207 = arith.constant 819 : i32
    %906 = arith.cmpi sge, %905, %c819_i32_207 : i32
    %907 = arith.select %906, %898, %894 : f32
    %908 = arith.minimumf %896, %898 : f32
    %909 = arith.select %906, %896, %908 : f32
    %cst_208 = arith.constant 5.000000e+00 : f32
    %910 = arith.mulf %857, %cst_208 : f32
    %911 = arith.addf %853, %910 : f32
    %912 = vector.broadcast %911 : f32 to vector<8x128xf32>
    %913 = arith.cmpf oge, %10, %912 : vector<8x128xf32>
    %914 = arith.extui %913 : vector<8x128xi1> to vector<8x128xi32>
    %915 = vector.shape_cast %914 : vector<8x128xi32> to vector<1x8x128xi32>
    %cst_209 = arith.constant dense<0> : vector<1xi32>
    %916 = vector.multi_reduction <add>, %915, %cst_209 [1, 2] : vector<1x8x128xi32> to vector<1xi32>
    %917 = vector.shape_cast %916 : vector<1xi32> to vector<1x1x1xi32>
    %918 = vector.extract %917[0, 0, 0] : i32 from vector<1x1x1xi32>
    %c819_i32_210 = arith.constant 819 : i32
    %919 = arith.cmpi sge, %918, %c819_i32_210 : i32
    %920 = arith.select %919, %911, %907 : f32
    %921 = arith.minimumf %909, %911 : f32
    %922 = arith.select %919, %909, %921 : f32
    %cst_211 = arith.constant 6.000000e+00 : f32
    %923 = arith.mulf %857, %cst_211 : f32
    %924 = arith.addf %853, %923 : f32
    %925 = vector.broadcast %924 : f32 to vector<8x128xf32>
    %926 = arith.cmpf oge, %10, %925 : vector<8x128xf32>
    %927 = arith.extui %926 : vector<8x128xi1> to vector<8x128xi32>
    %928 = vector.shape_cast %927 : vector<8x128xi32> to vector<1x8x128xi32>
    %cst_212 = arith.constant dense<0> : vector<1xi32>
    %929 = vector.multi_reduction <add>, %928, %cst_212 [1, 2] : vector<1x8x128xi32> to vector<1xi32>
    %930 = vector.shape_cast %929 : vector<1xi32> to vector<1x1x1xi32>
    %931 = vector.extract %930[0, 0, 0] : i32 from vector<1x1x1xi32>
    %c819_i32_213 = arith.constant 819 : i32
    %932 = arith.cmpi sge, %931, %c819_i32_213 : i32
    %933 = arith.select %932, %924, %920 : f32
    %934 = arith.minimumf %922, %924 : f32
    %935 = arith.select %932, %922, %934 : f32
    %cst_214 = arith.constant 7.000000e+00 : f32
    %936 = arith.mulf %857, %cst_214 : f32
    %937 = arith.addf %853, %936 : f32
    %938 = vector.broadcast %937 : f32 to vector<8x128xf32>
    %939 = arith.cmpf oge, %10, %938 : vector<8x128xf32>
    %940 = arith.extui %939 : vector<8x128xi1> to vector<8x128xi32>
    %941 = vector.shape_cast %940 : vector<8x128xi32> to vector<1x8x128xi32>
    %cst_215 = arith.constant dense<0> : vector<1xi32>
    %942 = vector.multi_reduction <add>, %941, %cst_215 [1, 2] : vector<1x8x128xi32> to vector<1xi32>
    %943 = vector.shape_cast %942 : vector<1xi32> to vector<1x1x1xi32>
    %944 = vector.extract %943[0, 0, 0] : i32 from vector<1x1x1xi32>
    %c819_i32_216 = arith.constant 819 : i32
    %945 = arith.cmpi sge, %944, %c819_i32_216 : i32
    %946 = arith.select %945, %937, %933 : f32
    %947 = arith.minimumf %935, %937 : f32
    %948 = arith.select %945, %935, %947 : f32
    %c10_i32 = arith.constant 10 : i32
    %949 = arith.subf %948, %946 : f32
    %950 = arith.mulf %949, %cst_7 : f32
    %cst_217 = arith.constant 1.000000e+00 : f32
    %951 = arith.mulf %950, %cst_217 : f32
    %952 = arith.addf %946, %951 : f32
    %953 = vector.broadcast %952 : f32 to vector<8x128xf32>
    %954 = arith.cmpf oge, %10, %953 : vector<8x128xf32>
    %955 = arith.extui %954 : vector<8x128xi1> to vector<8x128xi32>
    %956 = vector.shape_cast %955 : vector<8x128xi32> to vector<1x8x128xi32>
    %cst_218 = arith.constant dense<0> : vector<1xi32>
    %957 = vector.multi_reduction <add>, %956, %cst_218 [1, 2] : vector<1x8x128xi32> to vector<1xi32>
    %958 = vector.shape_cast %957 : vector<1xi32> to vector<1x1x1xi32>
    %959 = vector.extract %958[0, 0, 0] : i32 from vector<1x1x1xi32>
    %c819_i32_219 = arith.constant 819 : i32
    %960 = arith.cmpi sge, %959, %c819_i32_219 : i32
    %961 = arith.select %960, %952, %946 : f32
    %962 = arith.minimumf %948, %952 : f32
    %963 = arith.select %960, %948, %962 : f32
    %cst_220 = arith.constant 2.000000e+00 : f32
    %964 = arith.mulf %950, %cst_220 : f32
    %965 = arith.addf %946, %964 : f32
    %966 = vector.broadcast %965 : f32 to vector<8x128xf32>
    %967 = arith.cmpf oge, %10, %966 : vector<8x128xf32>
    %968 = arith.extui %967 : vector<8x128xi1> to vector<8x128xi32>
    %969 = vector.shape_cast %968 : vector<8x128xi32> to vector<1x8x128xi32>
    %cst_221 = arith.constant dense<0> : vector<1xi32>
    %970 = vector.multi_reduction <add>, %969, %cst_221 [1, 2] : vector<1x8x128xi32> to vector<1xi32>
    %971 = vector.shape_cast %970 : vector<1xi32> to vector<1x1x1xi32>
    %972 = vector.extract %971[0, 0, 0] : i32 from vector<1x1x1xi32>
    %c819_i32_222 = arith.constant 819 : i32
    %973 = arith.cmpi sge, %972, %c819_i32_222 : i32
    %974 = arith.select %973, %965, %961 : f32
    %975 = arith.minimumf %963, %965 : f32
    %976 = arith.select %973, %963, %975 : f32
    %cst_223 = arith.constant 3.000000e+00 : f32
    %977 = arith.mulf %950, %cst_223 : f32
    %978 = arith.addf %946, %977 : f32
    %979 = vector.broadcast %978 : f32 to vector<8x128xf32>
    %980 = arith.cmpf oge, %10, %979 : vector<8x128xf32>
    %981 = arith.extui %980 : vector<8x128xi1> to vector<8x128xi32>
    %982 = vector.shape_cast %981 : vector<8x128xi32> to vector<1x8x128xi32>
    %cst_224 = arith.constant dense<0> : vector<1xi32>
    %983 = vector.multi_reduction <add>, %982, %cst_224 [1, 2] : vector<1x8x128xi32> to vector<1xi32>
    %984 = vector.shape_cast %983 : vector<1xi32> to vector<1x1x1xi32>
    %985 = vector.extract %984[0, 0, 0] : i32 from vector<1x1x1xi32>
    %c819_i32_225 = arith.constant 819 : i32
    %986 = arith.cmpi sge, %985, %c819_i32_225 : i32
    %987 = arith.select %986, %978, %974 : f32
    %988 = arith.minimumf %976, %978 : f32
    %989 = arith.select %986, %976, %988 : f32
    %cst_226 = arith.constant 4.000000e+00 : f32
    %990 = arith.mulf %950, %cst_226 : f32
    %991 = arith.addf %946, %990 : f32
    %992 = vector.broadcast %991 : f32 to vector<8x128xf32>
    %993 = arith.cmpf oge, %10, %992 : vector<8x128xf32>
    %994 = arith.extui %993 : vector<8x128xi1> to vector<8x128xi32>
    %995 = vector.shape_cast %994 : vector<8x128xi32> to vector<1x8x128xi32>
    %cst_227 = arith.constant dense<0> : vector<1xi32>
    %996 = vector.multi_reduction <add>, %995, %cst_227 [1, 2] : vector<1x8x128xi32> to vector<1xi32>
    %997 = vector.shape_cast %996 : vector<1xi32> to vector<1x1x1xi32>
    %998 = vector.extract %997[0, 0, 0] : i32 from vector<1x1x1xi32>
    %c819_i32_228 = arith.constant 819 : i32
    %999 = arith.cmpi sge, %998, %c819_i32_228 : i32
    %1000 = arith.select %999, %991, %987 : f32
    %1001 = arith.minimumf %989, %991 : f32
    %1002 = arith.select %999, %989, %1001 : f32
    %cst_229 = arith.constant 5.000000e+00 : f32
    %1003 = arith.mulf %950, %cst_229 : f32
    %1004 = arith.addf %946, %1003 : f32
    %1005 = vector.broadcast %1004 : f32 to vector<8x128xf32>
    %1006 = arith.cmpf oge, %10, %1005 : vector<8x128xf32>
    %1007 = arith.extui %1006 : vector<8x128xi1> to vector<8x128xi32>
    %1008 = vector.shape_cast %1007 : vector<8x128xi32> to vector<1x8x128xi32>
    %cst_230 = arith.constant dense<0> : vector<1xi32>
    %1009 = vector.multi_reduction <add>, %1008, %cst_230 [1, 2] : vector<1x8x128xi32> to vector<1xi32>
    %1010 = vector.shape_cast %1009 : vector<1xi32> to vector<1x1x1xi32>
    %1011 = vector.extract %1010[0, 0, 0] : i32 from vector<1x1x1xi32>
    %c819_i32_231 = arith.constant 819 : i32
    %1012 = arith.cmpi sge, %1011, %c819_i32_231 : i32
    %1013 = arith.select %1012, %1004, %1000 : f32
    %1014 = arith.minimumf %1002, %1004 : f32
    %1015 = arith.select %1012, %1002, %1014 : f32
    %cst_232 = arith.constant 6.000000e+00 : f32
    %1016 = arith.mulf %950, %cst_232 : f32
    %1017 = arith.addf %946, %1016 : f32
    %1018 = vector.broadcast %1017 : f32 to vector<8x128xf32>
    %1019 = arith.cmpf oge, %10, %1018 : vector<8x128xf32>
    %1020 = arith.extui %1019 : vector<8x128xi1> to vector<8x128xi32>
    %1021 = vector.shape_cast %1020 : vector<8x128xi32> to vector<1x8x128xi32>
    %cst_233 = arith.constant dense<0> : vector<1xi32>
    %1022 = vector.multi_reduction <add>, %1021, %cst_233 [1, 2] : vector<1x8x128xi32> to vector<1xi32>
    %1023 = vector.shape_cast %1022 : vector<1xi32> to vector<1x1x1xi32>
    %1024 = vector.extract %1023[0, 0, 0] : i32 from vector<1x1x1xi32>
    %c819_i32_234 = arith.constant 819 : i32
    %1025 = arith.cmpi sge, %1024, %c819_i32_234 : i32
    %1026 = arith.select %1025, %1017, %1013 : f32
    %1027 = arith.minimumf %1015, %1017 : f32
    %1028 = arith.select %1025, %1015, %1027 : f32
    %cst_235 = arith.constant 7.000000e+00 : f32
    %1029 = arith.mulf %950, %cst_235 : f32
    %1030 = arith.addf %946, %1029 : f32
    %1031 = vector.broadcast %1030 : f32 to vector<8x128xf32>
    %1032 = arith.cmpf oge, %10, %1031 : vector<8x128xf32>
    %1033 = arith.extui %1032 : vector<8x128xi1> to vector<8x128xi32>
    %1034 = vector.shape_cast %1033 : vector<8x128xi32> to vector<1x8x128xi32>
    %cst_236 = arith.constant dense<0> : vector<1xi32>
    %1035 = vector.multi_reduction <add>, %1034, %cst_236 [1, 2] : vector<1x8x128xi32> to vector<1xi32>
    %1036 = vector.shape_cast %1035 : vector<1xi32> to vector<1x1x1xi32>
    %1037 = vector.extract %1036[0, 0, 0] : i32 from vector<1x1x1xi32>
    %c819_i32_237 = arith.constant 819 : i32
    %1038 = arith.cmpi sge, %1037, %c819_i32_237 : i32
    %1039 = arith.select %1038, %1030, %1026 : f32
    %1040 = arith.minimumf %1028, %1030 : f32
    %1041 = arith.select %1038, %1028, %1040 : f32
    %c11_i32 = arith.constant 11 : i32
    %1042 = arith.subf %1041, %1039 : f32
    %1043 = arith.mulf %1042, %cst_7 : f32
    %cst_238 = arith.constant 1.000000e+00 : f32
    %1044 = arith.mulf %1043, %cst_238 : f32
    %1045 = arith.addf %1039, %1044 : f32
    %1046 = vector.broadcast %1045 : f32 to vector<8x128xf32>
    %1047 = arith.cmpf oge, %10, %1046 : vector<8x128xf32>
    %1048 = arith.extui %1047 : vector<8x128xi1> to vector<8x128xi32>
    %1049 = vector.shape_cast %1048 : vector<8x128xi32> to vector<1x8x128xi32>
    %cst_239 = arith.constant dense<0> : vector<1xi32>
    %1050 = vector.multi_reduction <add>, %1049, %cst_239 [1, 2] : vector<1x8x128xi32> to vector<1xi32>
    %1051 = vector.shape_cast %1050 : vector<1xi32> to vector<1x1x1xi32>
    %1052 = vector.extract %1051[0, 0, 0] : i32 from vector<1x1x1xi32>
    %c819_i32_240 = arith.constant 819 : i32
    %1053 = arith.cmpi sge, %1052, %c819_i32_240 : i32
    %1054 = arith.select %1053, %1045, %1039 : f32
    %1055 = arith.minimumf %1041, %1045 : f32
    %1056 = arith.select %1053, %1041, %1055 : f32
    %cst_241 = arith.constant 2.000000e+00 : f32
    %1057 = arith.mulf %1043, %cst_241 : f32
    %1058 = arith.addf %1039, %1057 : f32
    %1059 = vector.broadcast %1058 : f32 to vector<8x128xf32>
    %1060 = arith.cmpf oge, %10, %1059 : vector<8x128xf32>
    %1061 = arith.extui %1060 : vector<8x128xi1> to vector<8x128xi32>
    %1062 = vector.shape_cast %1061 : vector<8x128xi32> to vector<1x8x128xi32>
    %cst_242 = arith.constant dense<0> : vector<1xi32>
    %1063 = vector.multi_reduction <add>, %1062, %cst_242 [1, 2] : vector<1x8x128xi32> to vector<1xi32>
    %1064 = vector.shape_cast %1063 : vector<1xi32> to vector<1x1x1xi32>
    %1065 = vector.extract %1064[0, 0, 0] : i32 from vector<1x1x1xi32>
    %c819_i32_243 = arith.constant 819 : i32
    %1066 = arith.cmpi sge, %1065, %c819_i32_243 : i32
    %1067 = arith.select %1066, %1058, %1054 : f32
    %1068 = arith.minimumf %1056, %1058 : f32
    %1069 = arith.select %1066, %1056, %1068 : f32
    %cst_244 = arith.constant 3.000000e+00 : f32
    %1070 = arith.mulf %1043, %cst_244 : f32
    %1071 = arith.addf %1039, %1070 : f32
    %1072 = vector.broadcast %1071 : f32 to vector<8x128xf32>
    %1073 = arith.cmpf oge, %10, %1072 : vector<8x128xf32>
    %1074 = arith.extui %1073 : vector<8x128xi1> to vector<8x128xi32>
    %1075 = vector.shape_cast %1074 : vector<8x128xi32> to vector<1x8x128xi32>
    %cst_245 = arith.constant dense<0> : vector<1xi32>
    %1076 = vector.multi_reduction <add>, %1075, %cst_245 [1, 2] : vector<1x8x128xi32> to vector<1xi32>
    %1077 = vector.shape_cast %1076 : vector<1xi32> to vector<1x1x1xi32>
    %1078 = vector.extract %1077[0, 0, 0] : i32 from vector<1x1x1xi32>
    %c819_i32_246 = arith.constant 819 : i32
    %1079 = arith.cmpi sge, %1078, %c819_i32_246 : i32
    %1080 = arith.select %1079, %1071, %1067 : f32
    %1081 = arith.minimumf %1069, %1071 : f32
    %1082 = arith.select %1079, %1069, %1081 : f32
    %cst_247 = arith.constant 4.000000e+00 : f32
    %1083 = arith.mulf %1043, %cst_247 : f32
    %1084 = arith.addf %1039, %1083 : f32
    %1085 = vector.broadcast %1084 : f32 to vector<8x128xf32>
    %1086 = arith.cmpf oge, %10, %1085 : vector<8x128xf32>
    %1087 = arith.extui %1086 : vector<8x128xi1> to vector<8x128xi32>
    %1088 = vector.shape_cast %1087 : vector<8x128xi32> to vector<1x8x128xi32>
    %cst_248 = arith.constant dense<0> : vector<1xi32>
    %1089 = vector.multi_reduction <add>, %1088, %cst_248 [1, 2] : vector<1x8x128xi32> to vector<1xi32>
    %1090 = vector.shape_cast %1089 : vector<1xi32> to vector<1x1x1xi32>
    %1091 = vector.extract %1090[0, 0, 0] : i32 from vector<1x1x1xi32>
    %c819_i32_249 = arith.constant 819 : i32
    %1092 = arith.cmpi sge, %1091, %c819_i32_249 : i32
    %1093 = arith.select %1092, %1084, %1080 : f32
    %1094 = arith.minimumf %1082, %1084 : f32
    %1095 = arith.select %1092, %1082, %1094 : f32
    %cst_250 = arith.constant 5.000000e+00 : f32
    %1096 = arith.mulf %1043, %cst_250 : f32
    %1097 = arith.addf %1039, %1096 : f32
    %1098 = vector.broadcast %1097 : f32 to vector<8x128xf32>
    %1099 = arith.cmpf oge, %10, %1098 : vector<8x128xf32>
    %1100 = arith.extui %1099 : vector<8x128xi1> to vector<8x128xi32>
    %1101 = vector.shape_cast %1100 : vector<8x128xi32> to vector<1x8x128xi32>
    %cst_251 = arith.constant dense<0> : vector<1xi32>
    %1102 = vector.multi_reduction <add>, %1101, %cst_251 [1, 2] : vector<1x8x128xi32> to vector<1xi32>
    %1103 = vector.shape_cast %1102 : vector<1xi32> to vector<1x1x1xi32>
    %1104 = vector.extract %1103[0, 0, 0] : i32 from vector<1x1x1xi32>
    %c819_i32_252 = arith.constant 819 : i32
    %1105 = arith.cmpi sge, %1104, %c819_i32_252 : i32
    %1106 = arith.select %1105, %1097, %1093 : f32
    %1107 = arith.minimumf %1095, %1097 : f32
    %1108 = arith.select %1105, %1095, %1107 : f32
    %cst_253 = arith.constant 6.000000e+00 : f32
    %1109 = arith.mulf %1043, %cst_253 : f32
    %1110 = arith.addf %1039, %1109 : f32
    %1111 = vector.broadcast %1110 : f32 to vector<8x128xf32>
    %1112 = arith.cmpf oge, %10, %1111 : vector<8x128xf32>
    %1113 = arith.extui %1112 : vector<8x128xi1> to vector<8x128xi32>
    %1114 = vector.shape_cast %1113 : vector<8x128xi32> to vector<1x8x128xi32>
    %cst_254 = arith.constant dense<0> : vector<1xi32>
    %1115 = vector.multi_reduction <add>, %1114, %cst_254 [1, 2] : vector<1x8x128xi32> to vector<1xi32>
    %1116 = vector.shape_cast %1115 : vector<1xi32> to vector<1x1x1xi32>
    %1117 = vector.extract %1116[0, 0, 0] : i32 from vector<1x1x1xi32>
    %c819_i32_255 = arith.constant 819 : i32
    %1118 = arith.cmpi sge, %1117, %c819_i32_255 : i32
    %1119 = arith.select %1118, %1110, %1106 : f32
    %1120 = arith.minimumf %1108, %1110 : f32
    %1121 = arith.select %1118, %1108, %1120 : f32
    %cst_256 = arith.constant 7.000000e+00 : f32
    %1122 = arith.mulf %1043, %cst_256 : f32
    %1123 = arith.addf %1039, %1122 : f32
    %1124 = vector.broadcast %1123 : f32 to vector<8x128xf32>
    %1125 = arith.cmpf oge, %10, %1124 : vector<8x128xf32>
    %1126 = arith.extui %1125 : vector<8x128xi1> to vector<8x128xi32>
    %1127 = vector.shape_cast %1126 : vector<8x128xi32> to vector<1x8x128xi32>
    %cst_257 = arith.constant dense<0> : vector<1xi32>
    %1128 = vector.multi_reduction <add>, %1127, %cst_257 [1, 2] : vector<1x8x128xi32> to vector<1xi32>
    %1129 = vector.shape_cast %1128 : vector<1xi32> to vector<1x1x1xi32>
    %1130 = vector.extract %1129[0, 0, 0] : i32 from vector<1x1x1xi32>
    %c819_i32_258 = arith.constant 819 : i32
    %1131 = arith.cmpi sge, %1130, %c819_i32_258 : i32
    %1132 = arith.select %1131, %1123, %1119 : f32
    %1133 = arith.minimumf %1121, %1123 : f32
    %1134 = arith.select %1131, %1121, %1133 : f32
    %1135 = vector.broadcast %1132 : f32 to vector<8x128xf32>
    %1136 = arith.cmpf oge, %10, %1135 : vector<8x128xf32>
    %1137 = arith.extui %1136 : vector<8x128xi1> to vector<8x128xi32>
    %1138 = arith.sitofp %1137 : vector<8x128xi32> to vector<8x128xf32>
    %c0_259 = arith.constant 0 : index
    %c0_260 = arith.constant 0 : index
    %1139 = vector.load %arg2[%c0_259, %c0_260] : memref<8x128xf32, #tpu.memory_space<vmem>>, vector<8x128xf32>
    tpu.vector_store %arg2[%c0_259, %c0_260], %1138 {strides = array<i32>} : memref<8x128xf32, #tpu.memory_space<vmem>>, vector<8x128xf32>,
    return
  }
}

</mosaic_0001>

<llo_original>
// kernel: tpu_custom_call.1
$region0: #{tpu_custom_call.1}
  #allocation0 [shape = 'u32[]', space=smem, size = 0x4, offset = 0x4, fixed_abs, tag = 'smem constant byte address 0x4 - core index']
  #allocation1 [shape = 'u32[144,128]{1,0:T(1,128)}', space=vmem, size = 0x12000, scoped, tag = 'internal scratch']
  %s0 = inlined_call_operand.hbm [shape: f32[8,128], index: 0, kind: input, shape index: {}]
  %s1 = inlined_call_operand.hbm [shape: f32[8,128], index: 1, kind: input, shape index: {}]
  %s2 = inlined_call_operand.hbm [shape: f32[8,128], index: 2, kind: output, shape index: {}]
  %s3 = sld [smem:[#allocation0]]
  $region26: #{tpu_custom_call.1} parent=0
    _
  %s5 = ssub.s32 1, %s3
  %s6 = scalar_select 0, %s5, %s3
  $region1: #{tpu_custom_call.1} parent=0
    #allocation2 [shape = 'u8[4096]{0}', space=vmem, size = 0x1000, scoped, tag = 'input window, operand 0, single buffered']
    #allocation3 [shape = 's32[1]{0}', space=sflag, size = 0x4, scoped, tag = 'scoped memory for tpu_custom_call.1']
    #allocation4 [shape = 's32[1]{0}', space=sflag, size = 0x4, scoped, tag = 'scoped memory for tpu_custom_call.1']
    #allocation5 [shape = 'u8[4096]{0}', space=vmem, size = 0x1000, scoped, tag = 'input window, operand 1, single buffered']
    #allocation6 [shape = 's32[1]{0}', space=sflag, size = 0x4, scoped, tag = 'scoped memory for tpu_custom_call.1']
    #allocation7 [shape = 'u8[4096]{0}', space=vmem, size = 0x1000, scoped, tag = 'output window, operand 0, single buffered']
    %7 = vsyncpa [#allocation3], 0
    %8 = vsyncpa [#allocation6], 0
    %9 = vsyncpa [#allocation4], 0
    // Predicated region
    $region2: #{tpu_custom_call.1} parent=1 // pred_check
      _
    $region3: #{tpu_custom_call.1} parent=1 // pred_check_branch
      %11 = sbr.rel (0) target = $region5
    $region4: #{tpu_custom_call.1} parent=1 // pred_region
      %s13 = ssub.s32 128, 128
      %14 = vsyncadd [#allocation3], %s13
      %s16 = sshll.u32 [#allocation2], 4
      %s17 = int_to_ptr.vmem [resolvable:$true] %s16
      %19 = dma.hbm_to_vmem [thread:$0]  %s0, 128, %s17, [#allocation3]
    $region5: #{tpu_custom_call.1} parent=1 // pred_fallthru
      _
    // Predicated region
    $region6: #{tpu_custom_call.1} parent=1 // pred_check
      _
    $region7: #{tpu_custom_call.1} parent=1 // pred_check_branch
      %21 = sbr.rel (0) target = $region9
    $region8: #{tpu_custom_call.1} parent=1 // pred_region
      %s23 = ssub.s32 128, 128
      %24 = vsyncadd [#allocation6], %s23
      %s26 = sshll.u32 [#allocation5], 4
      %s27 = int_to_ptr.vmem [resolvable:$true] %s26
      %29 = dma.hbm_to_vmem [thread:$0]  %s1, 128, %s27, [#allocation6]
    $region9: #{tpu_custom_call.1} parent=1 // pred_fallthru
      _
    // Predicated region
    $region10: #{tpu_custom_call.1} parent=1 // pred_check
      _
    $region11: #{tpu_custom_call.1} parent=1 // pred_check_branch
      %31 = sbr.rel (0) target = $region13
    $region12: #{tpu_custom_call.1} parent=1 // pred_region
      %32 = dma.done [#allocation3], 128
    $region13: #{tpu_custom_call.1} parent=1 // pred_fallthru
      _
    // Predicated region
    $region14: #{tpu_custom_call.1} parent=1 // pred_check
      _
    $region15: #{tpu_custom_call.1} parent=1 // pred_check_branch
      %34 = sbr.rel (0) target = $region17
    $region16: #{tpu_custom_call.1} parent=1 // pred_region
      %35 = dma.done [#allocation6], 128
    $region17: #{tpu_custom_call.1} parent=1 // pred_fallthru
      _
    %v36 = vld [vmem:[#allocation5] sm:$0xff]
    %v37 = vadd.f32 %v36, 1e-10
    %v38 = vlog2.pop %v37
    %v39 = vmul.f32 %v38, 0.6931472
    %v40 = vsub.f32 0.0, %v39
    %v41 = vlog2.pop %v40
    %v42 = vmul.f32 %v41, 0.6931472
    %v43 = vsub.f32 0.0, %v42
    %v44 = vld [vmem:[#allocation2] sm:$0xff]
    %v45 = vadd.f32 %v44, %v43
    %46 = vmin.xlane.f32.xlu0 %v45
    %v47 = vpop.xlane.xlu0 %46
    %v48 = vrot.slane %v47, 4
    %v49 = vmin.f32 %v47, %v48
    %v50 = vrot.slane %v49, 2
    %v51 = vmin.f32 %v49, %v50
    %v52 = vrot.slane %v51, 1
    %v53 = vmin.f32 %v51, %v52
    %s54 = vtos %v53
    %55 = vmax.xlane.f32.xlu0 %v45
    %v56 = vpop.xlane.xlu0 %55
    %v57 = vrot.slane %v56, 4
    %v58 = vmax.f32 %v56, %v57
    %v59 = vrot.slane %v58, 2
    %v60 = vmax.f32 %v58, %v59
    %v61 = vrot.slane %v60, 1
    %v62 = vmax.f32 %v60, %v61
    %s63 = vtos %v62
    %s64 = ssub.f32 %s63, %s54
    %s65 = smul.f32 %s64, 0.125
    %s66 = sadd.f32 %s54, %s65
    %v67 = vstv %s66
    %vm68 = vcmp.ge.f32.partialorder %v45, %v67
    %v69 = vsel %vm68, 1, 0
    %v70 = vand.u32 %v69, 65535
    %v71 = vshrl.u32 %v69, 16
    %v72 = vcvt.s32.f32 %v70
    %v73 = vcvt.s32.f32 %v71
    %74 = vadd.xlane.f32.xlu0 %v72
    %v75 = vpop.xlane.xlu0 %74
    %76 = vadd.xlane.f32.xlu0 %v73
    %v77 = vpop.xlane.xlu0 %76
    %v78 = vcvt.f32.s32 %v75
    %v79 = vcvt.f32.s32 %v77
    %v80 = vshll.u32 %v79, 16
    %v81 = vadd.s32 %v80, %v78
    %v82 = vrot.slane %v81, 4
    %v83 = vadd.s32 %v81, %v82
    %v84 = vrot.slane %v83, 2
    %v85 = vadd.s32 %v83, %v84
    %v86 = vrot.slane %v85, 1
    %v87 = vadd.s32 %v85, %v86
    %s88 = vtos %v87
    %p89 = scmp.ge.s32.totalorder %s88, 819
    %s90 = scalar_select %p89, %s66, %s54
    %s91 = smin.f32 %s63, %s66
    %s92 = scalar_select %p89, %s63, %s91
    %s93 = smul.f32 %s65, 2.0
    %s94 = sadd.f32 %s54, %s93
    %v95 = vstv %s94
    %vm96 = vcmp.ge.f32.partialorder %v45, %v95
    %v97 = vsel %vm96, 1, 0
    %v98 = vand.u32 %v97, 65535
    %v99 = vshrl.u32 %v97, 16
    %v100 = vcvt.s32.f32 %v98
    %v101 = vcvt.s32.f32 %v99
    %102 = vadd.xlane.f32.xlu0 %v100
    %v103 = vpop.xlane.xlu0 %102
    %104 = vadd.xlane.f32.xlu0 %v101
    %v105 = vpop.xlane.xlu0 %104
    %v106 = vcvt.f32.s32 %v103
    %v107 = vcvt.f32.s32 %v105
    %v108 = vshll.u32 %v107, 16
    %v109 = vadd.s32 %v108, %v106
    %v110 = vrot.slane %v109, 4
    %v111 = vadd.s32 %v109, %v110
    %v112 = vrot.slane %v111, 2
    %v113 = vadd.s32 %v111, %v112
    %v114 = vrot.slane %v113, 1
    %v115 = vadd.s32 %v113, %v114
    %s116 = vtos %v115
    %p117 = scmp.ge.s32.totalorder %s116, 819
    %s118 = scalar_select %p117, %s94, %s90
    %s119 = smin.f32 %s92, %s94
    %s120 = scalar_select %p117, %s92, %s119
    %s121 = smul.f32 %s65, 3.0
    %s122 = sadd.f32 %s54, %s121
    %v123 = vstv %s122
    %vm124 = vcmp.ge.f32.partialorder %v45, %v123
    %v125 = vsel %vm124, 1, 0
    %v126 = vand.u32 %v125, 65535
    %v127 = vshrl.u32 %v125, 16
    %v128 = vcvt.s32.f32 %v126
    %v129 = vcvt.s32.f32 %v127
    %130 = vadd.xlane.f32.xlu0 %v128
    %v131 = vpop.xlane.xlu0 %130
    %132 = vadd.xlane.f32.xlu0 %v129
    %v133 = vpop.xlane.xlu0 %132
    %v134 = vcvt.f32.s32 %v131
    %v135 = vcvt.f32.s32 %v133
    %v136 = vshll.u32 %v135, 16
    %v137 = vadd.s32 %v136, %v134
    %v138 = vrot.slane %v137, 4
    %v139 = vadd.s32 %v137, %v138
    %v140 = vrot.slane %v139, 2
    %v141 = vadd.s32 %v139, %v140
    %v142 = vrot.slane %v141, 1
    %v143 = vadd.s32 %v141, %v142
    %s144 = vtos %v143
    %p145 = scmp.ge.s32.totalorder %s144, 819
    %s146 = scalar_select %p145, %s122, %s118
    %s147 = smin.f32 %s120, %s122
    %s148 = scalar_select %p145, %s120, %s147
    %s149 = smul.f32 %s65, 4.0
    %s150 = sadd.f32 %s54, %s149
    %v151 = vstv %s150
    %vm152 = vcmp.ge.f32.partialorder %v45, %v151
    %v153 = vsel %vm152, 1, 0
    %v154 = vand.u32 %v153, 65535
    %v155 = vshrl.u32 %v153, 16
    %v156 = vcvt.s32.f32 %v154
    %v157 = vcvt.s32.f32 %v155
    %158 = vadd.xlane.f32.xlu0 %v156
    %v159 = vpop.xlane.xlu0 %158
    %160 = vadd.xlane.f32.xlu0 %v157
    %v161 = vpop.xlane.xlu0 %160
    %v162 = vcvt.f32.s32 %v159
    %v163 = vcvt.f32.s32 %v161
    %v164 = vshll.u32 %v163, 16
    %v165 = vadd.s32 %v164, %v162
    %v166 = vrot.slane %v165, 4
    %v167 = vadd.s32 %v165, %v166
    %v168 = vrot.slane %v167, 2
    %v169 = vadd.s32 %v167, %v168
    %v170 = vrot.slane %v169, 1
    %v171 = vadd.s32 %v169, %v170
    %s172 = vtos %v171
    %p173 = scmp.ge.s32.totalorder %s172, 819
    %s174 = scalar_select %p173, %s150, %s146
    %s175 = smin.f32 %s148, %s150
    %s176 = scalar_select %p173, %s148, %s175
    %s177 = smul.f32 %s65, 5.0
    %s178 = sadd.f32 %s54, %s177
    %v179 = vstv %s178
    %vm180 = vcmp.ge.f32.partialorder %v45, %v179
    %v181 = vsel %vm180, 1, 0
    %v182 = vand.u32 %v181, 65535
    %v183 = vshrl.u32 %v181, 16
    %v184 = vcvt.s32.f32 %v182
    %v185 = vcvt.s32.f32 %v183
    %186 = vadd.xlane.f32.xlu0 %v184
    %v187 = vpop.xlane.xlu0 %186
    %188 = vadd.xlane.f32.xlu0 %v185
    %v189 = vpop.xlane.xlu0 %188
    %v190 = vcvt.f32.s32 %v187
    %v191 = vcvt.f32.s32 %v189
    %v192 = vshll.u32 %v191, 16
    %v193 = vadd.s32 %v192, %v190
    %v194 = vrot.slane %v193, 4
    %v195 = vadd.s32 %v193, %v194
    %v196 = vrot.slane %v195, 2
    %v197 = vadd.s32 %v195, %v196
    %v198 = vrot.slane %v197, 1
    %v199 = vadd.s32 %v197, %v198
    %s200 = vtos %v199
    %p201 = scmp.ge.s32.totalorder %s200, 819
    %s202 = scalar_select %p201, %s178, %s174
    %s203 = smin.f32 %s176, %s178
    %s204 = scalar_select %p201, %s176, %s203
    %s205 = smul.f32 %s65, 6.0
    %s206 = sadd.f32 %s54, %s205
    %v207 = vstv %s206
    %vm208 = vcmp.ge.f32.partialorder %v45, %v207
    %v209 = vsel %vm208, 1, 0
    %v210 = vand.u32 %v209, 65535
    %v211 = vshrl.u32 %v209, 16
    %v212 = vcvt.s32.f32 %v210
    %v213 = vcvt.s32.f32 %v211
    %214 = vadd.xlane.f32.xlu0 %v212
    %v215 = vpop.xlane.xlu0 %214
    %216 = vadd.xlane.f32.xlu0 %v213
    %v217 = vpop.xlane.xlu0 %216
    %v218 = vcvt.f32.s32 %v215
    %v219 = vcvt.f32.s32 %v217
    %v220 = vshll.u32 %v219, 16
    %v221 = vadd.s32 %v220, %v218
    %v222 = vrot.slane %v221, 4
    %v223 = vadd.s32 %v221, %v222
    %v224 = vrot.slane %v223, 2
    %v225 = vadd.s32 %v223, %v224
    %v226 = vrot.slane %v225, 1
    %v227 = vadd.s32 %v225, %v226
    %s228 = vtos %v227
    %p229 = scmp.ge.s32.totalorder %s228, 819
    %s230 = scalar_select %p229, %s206, %s202
    %s231 = smin.f32 %s204, %s206
    %s232 = scalar_select %p229, %s204, %s231
    %s233 = smul.f32 %s65, 7.0
    %s234 = sadd.f32 %s54, %s233
    %v235 = vstv %s234
    %vm236 = vcmp.ge.f32.partialorder %v45, %v235
    %v237 = vsel %vm236, 1, 0
    %v238 = vand.u32 %v237, 65535
    %v239 = vshrl.u32 %v237, 16
    %v240 = vcvt.s32.f32 %v238
    %v241 = vcvt.s32.f32 %v239
    %242 = vadd.xlane.f32.xlu0 %v240
    %v243 = vpop.xlane.xlu0 %242
    %244 = vadd.xlane.f32.xlu0 %v241
    %v245 = vpop.xlane.xlu0 %244
    %v246 = vcvt.f32.s32 %v243
    %v247 = vcvt.f32.s32 %v245
    %v248 = vshll.u32 %v247, 16
    %v249 = vadd.s32 %v248, %v246
    %v250 = vrot.slane %v249, 4
    %v251 = vadd.s32 %v249, %v250
    %v252 = vrot.slane %v251, 2
    %v253 = vadd.s32 %v251, %v252
    %v254 = vrot.slane %v253, 1
    %v255 = vadd.s32 %v253, %v254
    %s256 = vtos %v255
    %p257 = scmp.ge.s32.totalorder %s256, 819
    %s258 = scalar_select %p257, %s234, %s230
    %s259 = smin.f32 %s232, %s234
    %s260 = scalar_select %p257, %s232, %s259
    %s261 = ssub.f32 %s260, %s258
    %s262 = smul.f32 %s261, 0.125
    %s263 = sadd.f32 %s258, %s262
    %v264 = vstv %s263
    %vm265 = vcmp.ge.f32.partialorder %v45, %v264
    %v266 = vsel %vm265, 1, 0
    %v267 = vand.u32 %v266, 65535
    %v268 = vshrl.u32 %v266, 16
    %v269 = vcvt.s32.f32 %v267
    %v270 = vcvt.s32.f32 %v268
    %271 = vadd.xlane.f32.xlu0 %v269
    %v272 = vpop.xlane.xlu0 %271
    %273 = vadd.xlane.f32.xlu0 %v270
    %v274 = vpop.xlane.xlu0 %273
    %v275 = vcvt.f32.s32 %v272
    %v276 = vcvt.f32.s32 %v274
    %v277 = vshll.u32 %v276, 16
    %v278 = vadd.s32 %v277, %v275
    %v279 = vrot.slane %v278, 4
    %v280 = vadd.s32 %v278, %v279
    %v281 = vrot.slane %v280, 2
    %v282 = vadd.s32 %v280, %v281
    %v283 = vrot.slane %v282, 1
    %v284 = vadd.s32 %v282, %v283
    %s285 = vtos %v284
    %p286 = scmp.ge.s32.totalorder %s285, 819
    %s287 = scalar_select %p286, %s263, %s258
    %s288 = smin.f32 %s260, %s263
    %s289 = scalar_select %p286, %s260, %s288
    %s290 = smul.f32 %s262, 2.0
    %s291 = sadd.f32 %s258, %s290
    %v292 = vstv %s291
    %vm293 = vcmp.ge.f32.partialorder %v45, %v292
    %v294 = vsel %vm293, 1, 0
    %v295 = vand.u32 %v294, 65535
    %v296 = vshrl.u32 %v294, 16
    %v297 = vcvt.s32.f32 %v295
    %v298 = vcvt.s32.f32 %v296
    %299 = vadd.xlane.f32.xlu0 %v297
    %v300 = vpop.xlane.xlu0 %299
    %301 = vadd.xlane.f32.xlu0 %v298
    %v302 = vpop.xlane.xlu0 %301
    %v303 = vcvt.f32.s32 %v300
    %v304 = vcvt.f32.s32 %v302
    %v305 = vshll.u32 %v304, 16
    %v306 = vadd.s32 %v305, %v303
    %v307 = vrot.slane %v306, 4
    %v308 = vadd.s32 %v306, %v307
    %v309 = vrot.slane %v308, 2
    %v310 = vadd.s32 %v308, %v309
    %v311 = vrot.slane %v310, 1
    %v312 = vadd.s32 %v310, %v311
    %s313 = vtos %v312
    %p314 = scmp.ge.s32.totalorder %s313, 819
    %s315 = scalar_select %p314, %s291, %s287
    %s316 = smin.f32 %s289, %s291
    %s317 = scalar_select %p314, %s289, %s316
    %s318 = smul.f32 %s262, 3.0
    %s319 = sadd.f32 %s258, %s318
    %v320 = vstv %s319
    %vm321 = vcmp.ge.f32.partialorder %v45, %v320
    %v322 = vsel %vm321, 1, 0
    %v323 = vand.u32 %v322, 65535
    %v324 = vshrl.u32 %v322, 16
    %v325 = vcvt.s32.f32 %v323
    %v326 = vcvt.s32.f32 %v324
    %327 = vadd.xlane.f32.xlu0 %v325
    %v328 = vpop.xlane.xlu0 %327
    %329 = vadd.xlane.f32.xlu0 %v326
    %v330 = vpop.xlane.xlu0 %329
    %v331 = vcvt.f32.s32 %v328
    %v332 = vcvt.f32.s32 %v330
    %v333 = vshll.u32 %v332, 16
    %v334 = vadd.s32 %v333, %v331
    %v335 = vrot.slane %v334, 4
    %v336 = vadd.s32 %v334, %v335
    %v337 = vrot.slane %v336, 2
    %v338 = vadd.s32 %v336, %v337
    %v339 = vrot.slane %v338, 1
    %v340 = vadd.s32 %v338, %v339
    %s341 = vtos %v340
    %p342 = scmp.ge.s32.totalorder %s341, 819
    %s343 = scalar_select %p342, %s319, %s315
    %s344 = smin.f32 %s317, %s319
    %s345 = scalar_select %p342, %s317, %s344
    %s346 = smul.f32 %s262, 4.0
    %s347 = sadd.f32 %s258, %s346
    %v348 = vstv %s347
    %vm349 = vcmp.ge.f32.partialorder %v45, %v348
    %v350 = vsel %vm349, 1, 0
    %v351 = vand.u32 %v350, 65535
    %v352 = vshrl.u32 %v350, 16
    %v353 = vcvt.s32.f32 %v351
    %v354 = vcvt.s32.f32 %v352
    %355 = vadd.xlane.f32.xlu0 %v353
    %v356 = vpop.xlane.xlu0 %355
    %357 = vadd.xlane.f32.xlu0 %v354
    %v358 = vpop.xlane.xlu0 %357
    %v359 = vcvt.f32.s32 %v356
    %v360 = vcvt.f32.s32 %v358
    %v361 = vshll.u32 %v360, 16
    %v362 = vadd.s32 %v361, %v359
    %v363 = vrot.slane %v362, 4
    %v364 = vadd.s32 %v362, %v363
    %v365 = vrot.slane %v364, 2
    %v366 = vadd.s32 %v364, %v365
    %v367 = vrot.slane %v366, 1
    %v368 = vadd.s32 %v366, %v367
    %s369 = vtos %v368
    %p370 = scmp.ge.s32.totalorder %s369, 819
    %s371 = scalar_select %p370, %s347, %s343
    %s372 = smin.f32 %s345, %s347
    %s373 = scalar_select %p370, %s345, %s372
    %s374 = smul.f32 %s262, 5.0
    %s375 = sadd.f32 %s258, %s374
    %v376 = vstv %s375
    %vm377 = vcmp.ge.f32.partialorder %v45, %v376
    %v378 = vsel %vm377, 1, 0
    %v379 = vand.u32 %v378, 65535
    %v380 = vshrl.u32 %v378, 16
    %v381 = vcvt.s32.f32 %v379
    %v382 = vcvt.s32.f32 %v380
    %383 = vadd.xlane.f32.xlu0 %v381
    %v384 = vpop.xlane.xlu0 %383
    %385 = vadd.xlane.f32.xlu0 %v382
    %v386 = vpop.xlane.xlu0 %385
    %v387 = vcvt.f32.s32 %v384
    %v388 = vcvt.f32.s32 %v386
    %v389 = vshll.u32 %v388, 16
    %v390 = vadd.s32 %v389, %v387
    %v391 = vrot.slane %v390, 4
    %v392 = vadd.s32 %v390, %v391
    %v393 = vrot.slane %v392, 2
    %v394 = vadd.s32 %v392, %v393
    %v395 = vrot.slane %v394, 1
    %v396 = vadd.s32 %v394, %v395
    %s397 = vtos %v396
    %p398 = scmp.ge.s32.totalorder %s397, 819
    %s399 = scalar_select %p398, %s375, %s371
    %s400 = smin.f32 %s373, %s375
    %s401 = scalar_select %p398, %s373, %s400
    %s402 = smul.f32 %s262, 6.0
    %s403 = sadd.f32 %s258, %s402
    %v404 = vstv %s403
    %vm405 = vcmp.ge.f32.partialorder %v45, %v404
    %v406 = vsel %vm405, 1, 0
    %v407 = vand.u32 %v406, 65535
    %v408 = vshrl.u32 %v406, 16
    %v409 = vcvt.s32.f32 %v407
    %v410 = vcvt.s32.f32 %v408
    %411 = vadd.xlane.f32.xlu0 %v409
    %v412 = vpop.xlane.xlu0 %411
    %413 = vadd.xlane.f32.xlu0 %v410
    %v414 = vpop.xlane.xlu0 %413
    %v415 = vcvt.f32.s32 %v412
    %v416 = vcvt.f32.s32 %v414
    %v417 = vshll.u32 %v416, 16
    %v418 = vadd.s32 %v417, %v415
    %v419 = vrot.slane %v418, 4
    %v420 = vadd.s32 %v418, %v419
    %v421 = vrot.slane %v420, 2
    %v422 = vadd.s32 %v420, %v421
    %v423 = vrot.slane %v422, 1
    %v424 = vadd.s32 %v422, %v423
    %s425 = vtos %v424
    %p426 = scmp.ge.s32.totalorder %s425, 819
    %s427 = scalar_select %p426, %s403, %s399
    %s428 = smin.f32 %s401, %s403
    %s429 = scalar_select %p426, %s401, %s428
    %s430 = smul.f32 %s262, 7.0
    %s431 = sadd.f32 %s258, %s430
    %v432 = vstv %s431
    %vm433 = vcmp.ge.f32.partialorder %v45, %v432
    %v434 = vsel %vm433, 1, 0
    %v435 = vand.u32 %v434, 65535
    %v436 = vshrl.u32 %v434, 16
    %v437 = vcvt.s32.f32 %v435
    %v438 = vcvt.s32.f32 %v436
    %439 = vadd.xlane.f32.xlu0 %v437
    %v440 = vpop.xlane.xlu0 %439
    %441 = vadd.xlane.f32.xlu0 %v438
    %v442 = vpop.xlane.xlu0 %441
    %v443 = vcvt.f32.s32 %v440
    %v444 = vcvt.f32.s32 %v442
    %v445 = vshll.u32 %v444, 16
    %v446 = vadd.s32 %v445, %v443
    %v447 = vrot.slane %v446, 4
    %v448 = vadd.s32 %v446, %v447
    %v449 = vrot.slane %v448, 2
    %v450 = vadd.s32 %v448, %v449
    %v451 = vrot.slane %v450, 1
    %v452 = vadd.s32 %v450, %v451
    %s453 = vtos %v452
    %p454 = scmp.ge.s32.totalorder %s453, 819
    %s455 = scalar_select %p454, %s431, %s427
    %s456 = smin.f32 %s429, %s431
    %s457 = scalar_select %p454, %s429, %s456
    %s458 = ssub.f32 %s457, %s455
    %s459 = smul.f32 %s458, 0.125
    %s460 = sadd.f32 %s455, %s459
    %v461 = vstv %s460
    %vm462 = vcmp.ge.f32.partialorder %v45, %v461
    %v463 = vsel %vm462, 1, 0
    %v464 = vand.u32 %v463, 65535
    %v465 = vshrl.u32 %v463, 16
    %v466 = vcvt.s32.f32 %v464
    %v467 = vcvt.s32.f32 %v465
    %468 = vadd.xlane.f32.xlu0 %v466
    %v469 = vpop.xlane.xlu0 %468
    %470 = vadd.xlane.f32.xlu0 %v467
    %v471 = vpop.xlane.xlu0 %470
    %v472 = vcvt.f32.s32 %v469
    %v473 = vcvt.f32.s32 %v471
    %v474 = vshll.u32 %v473, 16
    %v475 = vadd.s32 %v474, %v472
    %v476 = vrot.slane %v475, 4
    %v477 = vadd.s32 %v475, %v476
    %v478 = vrot.slane %v477, 2
    %v479 = vadd.s32 %v477, %v478
    %v480 = vrot.slane %v479, 1
    %v481 = vadd.s32 %v479, %v480
    %s482 = vtos %v481
    %p483 = scmp.ge.s32.totalorder %s482, 819
    %s484 = scalar_select %p483, %s460, %s455
    %s485 = smin.f32 %s457, %s460
    %s486 = scalar_select %p483, %s457, %s485
    %s487 = smul.f32 %s459, 2.0
    %s488 = sadd.f32 %s455, %s487
    %v489 = vstv %s488
    %vm490 = vcmp.ge.f32.partialorder %v45, %v489
    %v491 = vsel %vm490, 1, 0
    %v492 = vand.u32 %v491, 65535
    %v493 = vshrl.u32 %v491, 16
    %v494 = vcvt.s32.f32 %v492
    %v495 = vcvt.s32.f32 %v493
    %496 = vadd.xlane.f32.xlu0 %v494
    %v497 = vpop.xlane.xlu0 %496
    %498 = vadd.xlane.f32.xlu0 %v495
    %v499 = vpop.xlane.xlu0 %498
    %v500 = vcvt.f32.s32 %v497
    %v501 = vcvt.f32.s32 %v499
    %v502 = vshll.u32 %v501, 16
    %v503 = vadd.s32 %v502, %v500
    %v504 = vrot.slane %v503, 4
    %v505 = vadd.s32 %v503, %v504
    %v506 = vrot.slane %v505, 2
    %v507 = vadd.s32 %v505, %v506
    %v508 = vrot.slane %v507, 1
    %v509 = vadd.s32 %v507, %v508
    %s510 = vtos %v509
    %p511 = scmp.ge.s32.totalorder %s510, 819
    %s512 = scalar_select %p511, %s488, %s484
    %s513 = smin.f32 %s486, %s488
    %s514 = scalar_select %p511, %s486, %s513
    %s515 = smul.f32 %s459, 3.0
    %s516 = sadd.f32 %s455, %s515
    %v517 = vstv %s516
    %vm518 = vcmp.ge.f32.partialorder %v45, %v517
    %v519 = vsel %vm518, 1, 0
    %v520 = vand.u32 %v519, 65535
    %v521 = vshrl.u32 %v519, 16
    %v522 = vcvt.s32.f32 %v520
    %v523 = vcvt.s32.f32 %v521
    %524 = vadd.xlane.f32.xlu0 %v522
    %v525 = vpop.xlane.xlu0 %524
    %526 = vadd.xlane.f32.xlu0 %v523
    %v527 = vpop.xlane.xlu0 %526
    %v528 = vcvt.f32.s32 %v525
    %v529 = vcvt.f32.s32 %v527
    %v530 = vshll.u32 %v529, 16
    %v531 = vadd.s32 %v530, %v528
    %v532 = vrot.slane %v531, 4
    %v533 = vadd.s32 %v531, %v532
    %v534 = vrot.slane %v533, 2
    %v535 = vadd.s32 %v533, %v534
    %v536 = vrot.slane %v535, 1
    %v537 = vadd.s32 %v535, %v536
    %s538 = vtos %v537
    %p539 = scmp.ge.s32.totalorder %s538, 819
    %s540 = scalar_select %p539, %s516, %s512
    %s541 = smin.f32 %s514, %s516
    %s542 = scalar_select %p539, %s514, %s541
    %s543 = smul.f32 %s459, 4.0
    %s544 = sadd.f32 %s455, %s543
    %v545 = vstv %s544
    %vm546 = vcmp.ge.f32.partialorder %v45, %v545
    %v547 = vsel %vm546, 1, 0
    %v548 = vand.u32 %v547, 65535
    %v549 = vshrl.u32 %v547, 16
    %v550 = vcvt.s32.f32 %v548
    %v551 = vcvt.s32.f32 %v549
    %552 = vadd.xlane.f32.xlu0 %v550
    %v553 = vpop.xlane.xlu0 %552
    %554 = vadd.xlane.f32.xlu0 %v551
    %v555 = vpop.xlane.xlu0 %554
    %v556 = vcvt.f32.s32 %v553
    %v557 = vcvt.f32.s32 %v555
    %v558 = vshll.u32 %v557, 16
    %v559 = vadd.s32 %v558, %v556
    %v560 = vrot.slane %v559, 4
    %v561 = vadd.s32 %v559, %v560
    %v562 = vrot.slane %v561, 2
    %v563 = vadd.s32 %v561, %v562
    %v564 = vrot.slane %v563, 1
    %v565 = vadd.s32 %v563, %v564
    %s566 = vtos %v565
    %p567 = scmp.ge.s32.totalorder %s566, 819
    %s568 = scalar_select %p567, %s544, %s540
    %s569 = smin.f32 %s542, %s544
    %s570 = scalar_select %p567, %s542, %s569
    %s571 = smul.f32 %s459, 5.0
    %s572 = sadd.f32 %s455, %s571
    %v573 = vstv %s572
    %vm574 = vcmp.ge.f32.partialorder %v45, %v573
    %v575 = vsel %vm574, 1, 0
    %v576 = vand.u32 %v575, 65535
    %v577 = vshrl.u32 %v575, 16
    %v578 = vcvt.s32.f32 %v576
    %v579 = vcvt.s32.f32 %v577
    %580 = vadd.xlane.f32.xlu0 %v578
    %v581 = vpop.xlane.xlu0 %580
    %582 = vadd.xlane.f32.xlu0 %v579
    %v583 = vpop.xlane.xlu0 %582
    %v584 = vcvt.f32.s32 %v581
    %v585 = vcvt.f32.s32 %v583
    %v586 = vshll.u32 %v585, 16
    %v587 = vadd.s32 %v586, %v584
    %v588 = vrot.slane %v587, 4
    %v589 = vadd.s32 %v587, %v588
    %v590 = vrot.slane %v589, 2
    %v591 = vadd.s32 %v589, %v590
    %v592 = vrot.slane %v591, 1
    %v593 = vadd.s32 %v591, %v592
    %s594 = vtos %v593
    %p595 = scmp.ge.s32.totalorder %s594, 819
    %s596 = scalar_select %p595, %s572, %s568
    %s597 = smin.f32 %s570, %s572
    %s598 = scalar_select %p595, %s570, %s597
    %s599 = smul.f32 %s459, 6.0
    %s600 = sadd.f32 %s455, %s599
    %v601 = vstv %s600
    %vm602 = vcmp.ge.f32.partialorder %v45, %v601
    %v603 = vsel %vm602, 1, 0
    %v604 = vand.u32 %v603, 65535
    %v605 = vshrl.u32 %v603, 16
    %v606 = vcvt.s32.f32 %v604
    %v607 = vcvt.s32.f32 %v605
    %608 = vadd.xlane.f32.xlu0 %v606
    %v609 = vpop.xlane.xlu0 %608
    %610 = vadd.xlane.f32.xlu0 %v607
    %v611 = vpop.xlane.xlu0 %610
    %v612 = vcvt.f32.s32 %v609
    %v613 = vcvt.f32.s32 %v611
    %v614 = vshll.u32 %v613, 16
    %v615 = vadd.s32 %v614, %v612
    %v616 = vrot.slane %v615, 4
    %v617 = vadd.s32 %v615, %v616
    %v618 = vrot.slane %v617, 2
    %v619 = vadd.s32 %v617, %v618
    %v620 = vrot.slane %v619, 1
    %v621 = vadd.s32 %v619, %v620
    %s622 = vtos %v621
    %p623 = scmp.ge.s32.totalorder %s622, 819
    %s624 = scalar_select %p623, %s600, %s596
    %s625 = smin.f32 %s598, %s600
    %s626 = scalar_select %p623, %s598, %s625
    %s627 = smul.f32 %s459, 7.0
    %s628 = sadd.f32 %s455, %s627
    %v629 = vstv %s628
    %vm630 = vcmp.ge.f32.partialorder %v45, %v629
    %v631 = vsel %vm630, 1, 0
    %v632 = vand.u32 %v631, 65535
    %v633 = vshrl.u32 %v631, 16
    %v634 = vcvt.s32.f32 %v632
    %v635 = vcvt.s32.f32 %v633
    %636 = vadd.xlane.f32.xlu0 %v634
    %v637 = vpop.xlane.xlu0 %636
    %638 = vadd.xlane.f32.xlu0 %v635
    %v639 = vpop.xlane.xlu0 %638
    %v640 = vcvt.f32.s32 %v637
    %v641 = vcvt.f32.s32 %v639
    %v642 = vshll.u32 %v641, 16
    %v643 = vadd.s32 %v642, %v640
    %v644 = vrot.slane %v643, 4
    %v645 = vadd.s32 %v643, %v644
    %v646 = vrot.slane %v645, 2
    %v647 = vadd.s32 %v645, %v646
    %v648 = vrot.slane %v647, 1
    %v649 = vadd.s32 %v647, %v648
    %s650 = vtos %v649
    %p651 = scmp.ge.s32.totalorder %s650, 819
    %s652 = scalar_select %p651, %s628, %s624
    %s653 = smin.f32 %s626, %s628
    %s654 = scalar_select %p651, %s626, %s653
    %s655 = ssub.f32 %s654, %s652
    %s656 = smul.f32 %s655, 0.125
    %s657 = sadd.f32 %s652, %s656
    %v658 = vstv %s657
    %vm659 = vcmp.ge.f32.partialorder %v45, %v658
    %v660 = vsel %vm659, 1, 0
    %v661 = vand.u32 %v660, 65535
    %v662 = vshrl.u32 %v660, 16
    %v663 = vcvt.s32.f32 %v661
    %v664 = vcvt.s32.f32 %v662
    %665 = vadd.xlane.f32.xlu0 %v663
    %v666 = vpop.xlane.xlu0 %665
    %667 = vadd.xlane.f32.xlu0 %v664
    %v668 = vpop.xlane.xlu0 %667
    %v669 = vcvt.f32.s32 %v666
    %v670 = vcvt.f32.s32 %v668
    %v671 = vshll.u32 %v670, 16
    %v672 = vadd.s32 %v671, %v669
    %v673 = vrot.slane %v672, 4
    %v674 = vadd.s32 %v672, %v673
    %v675 = vrot.slane %v674, 2
    %v676 = vadd.s32 %v674, %v675
    %v677 = vrot.slane %v676, 1
    %v678 = vadd.s32 %v676, %v677
    %s679 = vtos %v678
    %p680 = scmp.ge.s32.totalorder %s679, 819
    %s681 = scalar_select %p680, %s657, %s652
    %s682 = smin.f32 %s654, %s657
    %s683 = scalar_select %p680, %s654, %s682
    %s684 = smul.f32 %s656, 2.0
    %s685 = sadd.f32 %s652, %s684
    %v686 = vstv %s685
    %vm687 = vcmp.ge.f32.partialorder %v45, %v686
    %v688 = vsel %vm687, 1, 0
    %v689 = vand.u32 %v688, 65535
    %v690 = vshrl.u32 %v688, 16
    %v691 = vcvt.s32.f32 %v689
    %v692 = vcvt.s32.f32 %v690
    %693 = vadd.xlane.f32.xlu0 %v691
    %v694 = vpop.xlane.xlu0 %693
    %695 = vadd.xlane.f32.xlu0 %v692
    %v696 = vpop.xlane.xlu0 %695
    %v697 = vcvt.f32.s32 %v694
    %v698 = vcvt.f32.s32 %v696
    %v699 = vshll.u32 %v698, 16
    %v700 = vadd.s32 %v699, %v697
    %v701 = vrot.slane %v700, 4
    %v702 = vadd.s32 %v700, %v701
    %v703 = vrot.slane %v702, 2
    %v704 = vadd.s32 %v702, %v703
    %v705 = vrot.slane %v704, 1
    %v706 = vadd.s32 %v704, %v705
    %s707 = vtos %v706
    %p708 = scmp.ge.s32.totalorder %s707, 819
    %s709 = scalar_select %p708, %s685, %s681
    %s710 = smin.f32 %s683, %s685
    %s711 = scalar_select %p708, %s683, %s710
    %s712 = smul.f32 %s656, 3.0
    %s713 = sadd.f32 %s652, %s712
    %v714 = vstv %s713
    %vm715 = vcmp.ge.f32.partialorder %v45, %v714
    %v716 = vsel %vm715, 1, 0
    %v717 = vand.u32 %v716, 65535
    %v718 = vshrl.u32 %v716, 16
    %v719 = vcvt.s32.f32 %v717
    %v720 = vcvt.s32.f32 %v718
    %721 = vadd.xlane.f32.xlu0 %v719
    %v722 = vpop.xlane.xlu0 %721
    %723 = vadd.xlane.f32.xlu0 %v720
    %v724 = vpop.xlane.xlu0 %723
    %v725 = vcvt.f32.s32 %v722
    %v726 = vcvt.f32.s32 %v724
    %v727 = vshll.u32 %v726, 16
    %v728 = vadd.s32 %v727, %v725
    %v729 = vrot.slane %v728, 4
    %v730 = vadd.s32 %v728, %v729
    %v731 = vrot.slane %v730, 2
    %v732 = vadd.s32 %v730, %v731
    %v733 = vrot.slane %v732, 1
    %v734 = vadd.s32 %v732, %v733
    %s735 = vtos %v734
    %p736 = scmp.ge.s32.totalorder %s735, 819
    %s737 = scalar_select %p736, %s713, %s709
    %s738 = smin.f32 %s711, %s713
    %s739 = scalar_select %p736, %s711, %s738
    %s740 = smul.f32 %s656, 4.0
    %s741 = sadd.f32 %s652, %s740
    %v742 = vstv %s741
    %vm743 = vcmp.ge.f32.partialorder %v45, %v742
    %v744 = vsel %vm743, 1, 0
    %v745 = vand.u32 %v744, 65535
    %v746 = vshrl.u32 %v744, 16
    %v747 = vcvt.s32.f32 %v745
    %v748 = vcvt.s32.f32 %v746
    %749 = vadd.xlane.f32.xlu0 %v747
    %v750 = vpop.xlane.xlu0 %749
    %751 = vadd.xlane.f32.xlu0 %v748
    %v752 = vpop.xlane.xlu0 %751
    %v753 = vcvt.f32.s32 %v750
    %v754 = vcvt.f32.s32 %v752
    %v755 = vshll.u32 %v754, 16
    %v756 = vadd.s32 %v755, %v753
    %v757 = vrot.slane %v756, 4
    %v758 = vadd.s32 %v756, %v757
    %v759 = vrot.slane %v758, 2
    %v760 = vadd.s32 %v758, %v759
    %v761 = vrot.slane %v760, 1
    %v762 = vadd.s32 %v760, %v761
    %s763 = vtos %v762
    %p764 = scmp.ge.s32.totalorder %s763, 819
    %s765 = scalar_select %p764, %s741, %s737
    %s766 = smin.f32 %s739, %s741
    %s767 = scalar_select %p764, %s739, %s766
    %s768 = smul.f32 %s656, 5.0
    %s769 = sadd.f32 %s652, %s768
    %v770 = vstv %s769
    %vm771 = vcmp.ge.f32.partialorder %v45, %v770
    %v772 = vsel %vm771, 1, 0
    %v773 = vand.u32 %v772, 65535
    %v774 = vshrl.u32 %v772, 16
    %v775 = vcvt.s32.f32 %v773
    %v776 = vcvt.s32.f32 %v774
    %777 = vadd.xlane.f32.xlu0 %v775
    %v778 = vpop.xlane.xlu0 %777
    %779 = vadd.xlane.f32.xlu0 %v776
    %v780 = vpop.xlane.xlu0 %779
    %v781 = vcvt.f32.s32 %v778
    %v782 = vcvt.f32.s32 %v780
    %v783 = vshll.u32 %v782, 16
    %v784 = vadd.s32 %v783, %v781
    %v785 = vrot.slane %v784, 4
    %v786 = vadd.s32 %v784, %v785
    %v787 = vrot.slane %v786, 2
    %v788 = vadd.s32 %v786, %v787
    %v789 = vrot.slane %v788, 1
    %v790 = vadd.s32 %v788, %v789
    %s791 = vtos %v790
    %p792 = scmp.ge.s32.totalorder %s791, 819
    %s793 = scalar_select %p792, %s769, %s765
    %s794 = smin.f32 %s767, %s769
    %s795 = scalar_select %p792, %s767, %s794
    %s796 = smul.f32 %s656, 6.0
    %s797 = sadd.f32 %s652, %s796
    %v798 = vstv %s797
    %vm799 = vcmp.ge.f32.partialorder %v45, %v798
    %v800 = vsel %vm799, 1, 0
    %v801 = vand.u32 %v800, 65535
    %v802 = vshrl.u32 %v800, 16
    %v803 = vcvt.s32.f32 %v801
    %v804 = vcvt.s32.f32 %v802
    %805 = vadd.xlane.f32.xlu0 %v803
    %v806 = vpop.xlane.xlu0 %805
    %807 = vadd.xlane.f32.xlu0 %v804
    %v808 = vpop.xlane.xlu0 %807
    %v809 = vcvt.f32.s32 %v806
    %v810 = vcvt.f32.s32 %v808
    %v811 = vshll.u32 %v810, 16
    %v812 = vadd.s32 %v811, %v809
    %v813 = vrot.slane %v812, 4
    %v814 = vadd.s32 %v812, %v813
    %v815 = vrot.slane %v814, 2
    %v816 = vadd.s32 %v814, %v815
    %v817 = vrot.slane %v816, 1
    %v818 = vadd.s32 %v816, %v817
    %s819 = vtos %v818
    %p820 = scmp.ge.s32.totalorder %s819, 819
    %s821 = scalar_select %p820, %s797, %s793
    %s822 = smin.f32 %s795, %s797
    %s823 = scalar_select %p820, %s795, %s822
    %s824 = smul.f32 %s656, 7.0
    %s825 = sadd.f32 %s652, %s824
    %v826 = vstv %s825
    %vm827 = vcmp.ge.f32.partialorder %v45, %v826
    %v828 = vsel %vm827, 1, 0
    %v829 = vand.u32 %v828, 65535
    %v830 = vshrl.u32 %v828, 16
    %v831 = vcvt.s32.f32 %v829
    %v832 = vcvt.s32.f32 %v830
    %833 = vadd.xlane.f32.xlu0 %v831
    %v834 = vpop.xlane.xlu0 %833
    %835 = vadd.xlane.f32.xlu0 %v832
    %v836 = vpop.xlane.xlu0 %835
    %v837 = vcvt.f32.s32 %v834
    %v838 = vcvt.f32.s32 %v836
    %v839 = vshll.u32 %v838, 16
    %v840 = vadd.s32 %v839, %v837
    %v841 = vrot.slane %v840, 4
    %v842 = vadd.s32 %v840, %v841
    %v843 = vrot.slane %v842, 2
    %v844 = vadd.s32 %v842, %v843
    %v845 = vrot.slane %v844, 1
    %v846 = vadd.s32 %v844, %v845
    %s847 = vtos %v846
    %p848 = scmp.ge.s32.totalorder %s847, 819
    %s849 = scalar_select %p848, %s825, %s821
    %s850 = smin.f32 %s823, %s825
    %s851 = scalar_select %p848, %s823, %s850
    %s852 = ssub.f32 %s851, %s849
    %s853 = smul.f32 %s852, 0.125
    %s854 = sadd.f32 %s849, %s853
    %v855 = vstv %s854
    %vm856 = vcmp.ge.f32.partialorder %v45, %v855
    %v857 = vsel %vm856, 1, 0
    %v858 = vand.u32 %v857, 65535
    %v859 = vshrl.u32 %v857, 16
    %v860 = vcvt.s32.f32 %v858
    %v861 = vcvt.s32.f32 %v859
    %862 = vadd.xlane.f32.xlu0 %v860
    %v863 = vpop.xlane.xlu0 %862
    %864 = vadd.xlane.f32.xlu0 %v861
    %v865 = vpop.xlane.xlu0 %864
    %v866 = vcvt.f32.s32 %v863
    %v867 = vcvt.f32.s32 %v865
    %v868 = vshll.u32 %v867, 16
    %v869 = vadd.s32 %v868, %v866
    %v870 = vrot.slane %v869, 4
    %v871 = vadd.s32 %v869, %v870
    %v872 = vrot.slane %v871, 2
    %v873 = vadd.s32 %v871, %v872
    %v874 = vrot.slane %v873, 1
    %v875 = vadd.s32 %v873, %v874
    %s876 = vtos %v875
    %p877 = scmp.ge.s32.totalorder %s876, 819
    %s878 = scalar_select %p877, %s854, %s849
    %s879 = smin.f32 %s851, %s854
    %s880 = scalar_select %p877, %s851, %s879
    %s881 = smul.f32 %s853, 2.0
    %s882 = sadd.f32 %s849, %s881
    %v883 = vstv %s882
    %vm884 = vcmp.ge.f32.partialorder %v45, %v883
    %v885 = vsel %vm884, 1, 0
    %v886 = vand.u32 %v885, 65535
    %v887 = vshrl.u32 %v885, 16
    %v888 = vcvt.s32.f32 %v886
    %v889 = vcvt.s32.f32 %v887
    %890 = vadd.xlane.f32.xlu0 %v888
    %v891 = vpop.xlane.xlu0 %890
    %892 = vadd.xlane.f32.xlu0 %v889
    %v893 = vpop.xlane.xlu0 %892
    %v894 = vcvt.f32.s32 %v891
    %v895 = vcvt.f32.s32 %v893
    %v896 = vshll.u32 %v895, 16
    %v897 = vadd.s32 %v896, %v894
    %v898 = vrot.slane %v897, 4
    %v899 = vadd.s32 %v897, %v898
    %v900 = vrot.slane %v899, 2
    %v901 = vadd.s32 %v899, %v900
    %v902 = vrot.slane %v901, 1
    %v903 = vadd.s32 %v901, %v902
    %s904 = vtos %v903
    %p905 = scmp.ge.s32.totalorder %s904, 819
    %s906 = scalar_select %p905, %s882, %s878
    %s907 = smin.f32 %s880, %s882
    %s908 = scalar_select %p905, %s880, %s907
    %s909 = smul.f32 %s853, 3.0
    %s910 = sadd.f32 %s849, %s909
    %v911 = vstv %s910
    %vm912 = vcmp.ge.f32.partialorder %v45, %v911
    %v913 = vsel %vm912, 1, 0
    %v914 = vand.u32 %v913, 65535
    %v915 = vshrl.u32 %v913, 16
    %v916 = vcvt.s32.f32 %v914
    %v917 = vcvt.s32.f32 %v915
    %918 = vadd.xlane.f32.xlu0 %v916
    %v919 = vpop.xlane.xlu0 %918
    %920 = vadd.xlane.f32.xlu0 %v917
    %v921 = vpop.xlane.xlu0 %920
    %v922 = vcvt.f32.s32 %v919
    %v923 = vcvt.f32.s32 %v921
    %v924 = vshll.u32 %v923, 16
    %v925 = vadd.s32 %v924, %v922
    %v926 = vrot.slane %v925, 4
    %v927 = vadd.s32 %v925, %v926
    %v928 = vrot.slane %v927, 2
    %v929 = vadd.s32 %v927, %v928
    %v930 = vrot.slane %v929, 1
    %v931 = vadd.s32 %v929, %v930
    %s932 = vtos %v931
    %p933 = scmp.ge.s32.totalorder %s932, 819
    %s934 = scalar_select %p933, %s910, %s906
    %s935 = smin.f32 %s908, %s910
    %s936 = scalar_select %p933, %s908, %s935
    %s937 = smul.f32 %s853, 4.0
    %s938 = sadd.f32 %s849, %s937
    %v939 = vstv %s938
    %vm940 = vcmp.ge.f32.partialorder %v45, %v939
    %v941 = vsel %vm940, 1, 0
    %v942 = vand.u32 %v941, 65535
    %v943 = vshrl.u32 %v941, 16
    %v944 = vcvt.s32.f32 %v942
    %v945 = vcvt.s32.f32 %v943
    %946 = vadd.xlane.f32.xlu0 %v944
    %v947 = vpop.xlane.xlu0 %946
    %948 = vadd.xlane.f32.xlu0 %v945
    %v949 = vpop.xlane.xlu0 %948
    %v950 = vcvt.f32.s32 %v947
    %v951 = vcvt.f32.s32 %v949
    %v952 = vshll.u32 %v951, 16
    %v953 = vadd.s32 %v952, %v950
    %v954 = vrot.slane %v953, 4
    %v955 = vadd.s32 %v953, %v954
    %v956 = vrot.slane %v955, 2
    %v957 = vadd.s32 %v955, %v956
    %v958 = vrot.slane %v957, 1
    %v959 = vadd.s32 %v957, %v958
    %s960 = vtos %v959
    %p961 = scmp.ge.s32.totalorder %s960, 819
    %s962 = scalar_select %p961, %s938, %s934
    %s963 = smin.f32 %s936, %s938
    %s964 = scalar_select %p961, %s936, %s963
    %s965 = smul.f32 %s853, 5.0
    %s966 = sadd.f32 %s849, %s965
    %v967 = vstv %s966
    %vm968 = vcmp.ge.f32.partialorder %v45, %v967
    %v969 = vsel %vm968, 1, 0
    %v970 = vand.u32 %v969, 65535
    %v971 = vshrl.u32 %v969, 16
    %v972 = vcvt.s32.f32 %v970
    %v973 = vcvt.s32.f32 %v971
    %974 = vadd.xlane.f32.xlu0 %v972
    %v975 = vpop.xlane.xlu0 %974
    %976 = vadd.xlane.f32.xlu0 %v973
    %v977 = vpop.xlane.xlu0 %976
    %v978 = vcvt.f32.s32 %v975
    %v979 = vcvt.f32.s32 %v977
    %v980 = vshll.u32 %v979, 16
    %v981 = vadd.s32 %v980, %v978
    %v982 = vrot.slane %v981, 4
    %v983 = vadd.s32 %v981, %v982
    %v984 = vrot.slane %v983, 2
    %v985 = vadd.s32 %v983, %v984
    %v986 = vrot.slane %v985, 1
    %v987 = vadd.s32 %v985, %v986
    %s988 = vtos %v987
    %p989 = scmp.ge.s32.totalorder %s988, 819
    %s990 = scalar_select %p989, %s966, %s962
    %s991 = smin.f32 %s964, %s966
    %s992 = scalar_select %p989, %s964, %s991
    %s993 = smul.f32 %s853, 6.0
    %s994 = sadd.f32 %s849, %s993
    %v995 = vstv %s994
    %vm996 = vcmp.ge.f32.partialorder %v45, %v995
    %v997 = vsel %vm996, 1, 0
    %v998 = vand.u32 %v997, 65535
    %v999 = vshrl.u32 %v997, 16
    %v1000 = vcvt.s32.f32 %v998
    %v1001 = vcvt.s32.f32 %v999
    %1002 = vadd.xlane.f32.xlu0 %v1000
    %v1003 = vpop.xlane.xlu0 %1002
    %1004 = vadd.xlane.f32.xlu0 %v1001
    %v1005 = vpop.xlane.xlu0 %1004
    %v1006 = vcvt.f32.s32 %v1003
    %v1007 = vcvt.f32.s32 %v1005
    %v1008 = vshll.u32 %v1007, 16
    %v1009 = vadd.s32 %v1008, %v1006
    %v1010 = vrot.slane %v1009, 4
    %v1011 = vadd.s32 %v1009, %v1010
    %v1012 = vrot.slane %v1011, 2
    %v1013 = vadd.s32 %v1011, %v1012
    %v1014 = vrot.slane %v1013, 1
    %v1015 = vadd.s32 %v1013, %v1014
    %s1016 = vtos %v1015
    %p1017 = scmp.ge.s32.totalorder %s1016, 819
    %s1018 = scalar_select %p1017, %s994, %s990
    %s1019 = smin.f32 %s992, %s994
    %s1020 = scalar_select %p1017, %s992, %s1019
    %s1021 = smul.f32 %s853, 7.0
    %s1022 = sadd.f32 %s849, %s1021
    %v1023 = vstv %s1022
    %vm1024 = vcmp.ge.f32.partialorder %v45, %v1023
    %v1025 = vsel %vm1024, 1, 0
    %v1026 = vand.u32 %v1025, 65535
    %v1027 = vshrl.u32 %v1025, 16
    %v1028 = vcvt.s32.f32 %v1026
    %v1029 = vcvt.s32.f32 %v1027
    %1030 = vadd.xlane.f32.xlu0 %v1028
    %v1031 = vpop.xlane.xlu0 %1030
    %1032 = vadd.xlane.f32.xlu0 %v1029
    %v1033 = vpop.xlane.xlu0 %1032
    %v1034 = vcvt.f32.s32 %v1031
    %v1035 = vcvt.f32.s32 %v1033
    %v1036 = vshll.u32 %v1035, 16
    %v1037 = vadd.s32 %v1036, %v1034
    %v1038 = vrot.slane %v1037, 4
    %v1039 = vadd.s32 %v1037, %v1038
    %v1040 = vrot.slane %v1039, 2
    %v1041 = vadd.s32 %v1039, %v1040
    %v1042 = vrot.slane %v1041, 1
    %v1043 = vadd.s32 %v1041, %v1042
    %s1044 = vtos %v1043
    %p1045 = scmp.ge.s32.totalorder %s1044, 819
    %s1046 = scalar_select %p1045, %s1022, %s1018
    %s1047 = smin.f32 %s1020, %s1022
    %s1048 = scalar_select %p1045, %s1020, %s1047
    %s1049 = ssub.f32 %s1048, %s1046
    %s1050 = smul.f32 %s1049, 0.125
    %s1051 = sadd.f32 %s1046, %s1050
    %v1052 = vstv %s1051
    %vm1053 = vcmp.ge.f32.partialorder %v45, %v1052
    %v1054 = vsel %vm1053, 1, 0
    %v1055 = vand.u32 %v1054, 65535
    %v1056 = vshrl.u32 %v1054, 16
    %v1057 = vcvt.s32.f32 %v1055
    %v1058 = vcvt.s32.f32 %v1056
    %1059 = vadd.xlane.f32.xlu0 %v1057
    %v1060 = vpop.xlane.xlu0 %1059
    %1061 = vadd.xlane.f32.xlu0 %v1058
    %v1062 = vpop.xlane.xlu0 %1061
    %v1063 = vcvt.f32.s32 %v1060
    %v1064 = vcvt.f32.s32 %v1062
    %v1065 = vshll.u32 %v1064, 16
    %v1066 = vadd.s32 %v1065, %v1063
    %v1067 = vrot.slane %v1066, 4
    %v1068 = vadd.s32 %v1066, %v1067
    %v1069 = vrot.slane %v1068, 2
    %v1070 = vadd.s32 %v1068, %v1069
    %v1071 = vrot.slane %v1070, 1
    %v1072 = vadd.s32 %v1070, %v1071
    %s1073 = vtos %v1072
    %p1074 = scmp.ge.s32.totalorder %s1073, 819
    %s1075 = scalar_select %p1074, %s1051, %s1046
    %s1076 = smin.f32 %s1048, %s1051
    %s1077 = scalar_select %p1074, %s1048, %s1076
    %s1078 = smul.f32 %s1050, 2.0
    %s1079 = sadd.f32 %s1046, %s1078
    %v1080 = vstv %s1079
    %vm1081 = vcmp.ge.f32.partialorder %v45, %v1080
    %v1082 = vsel %vm1081, 1, 0
    %v1083 = vand.u32 %v1082, 65535
    %v1084 = vshrl.u32 %v1082, 16
    %v1085 = vcvt.s32.f32 %v1083
    %v1086 = vcvt.s32.f32 %v1084
    %1087 = vadd.xlane.f32.xlu0 %v1085
    %v1088 = vpop.xlane.xlu0 %1087
    %1089 = vadd.xlane.f32.xlu0 %v1086
    %v1090 = vpop.xlane.xlu0 %1089
    %v1091 = vcvt.f32.s32 %v1088
    %v1092 = vcvt.f32.s32 %v1090
    %v1093 = vshll.u32 %v1092, 16
    %v1094 = vadd.s32 %v1093, %v1091
    %v1095 = vrot.slane %v1094, 4
    %v1096 = vadd.s32 %v1094, %v1095
    %v1097 = vrot.slane %v1096, 2
    %v1098 = vadd.s32 %v1096, %v1097
    %v1099 = vrot.slane %v1098, 1
    %v1100 = vadd.s32 %v1098, %v1099
    %s1101 = vtos %v1100
    %p1102 = scmp.ge.s32.totalorder %s1101, 819
    %s1103 = scalar_select %p1102, %s1079, %s1075
    %s1104 = smin.f32 %s1077, %s1079
    %s1105 = scalar_select %p1102, %s1077, %s1104
    %s1106 = smul.f32 %s1050, 3.0
    %s1107 = sadd.f32 %s1046, %s1106
    %v1108 = vstv %s1107
    %vm1109 = vcmp.ge.f32.partialorder %v45, %v1108
    %v1110 = vsel %vm1109, 1, 0
    %v1111 = vand.u32 %v1110, 65535
    %v1112 = vshrl.u32 %v1110, 16
    %v1113 = vcvt.s32.f32 %v1111
    %v1114 = vcvt.s32.f32 %v1112
    %1115 = vadd.xlane.f32.xlu0 %v1113
    %v1116 = vpop.xlane.xlu0 %1115
    %1117 = vadd.xlane.f32.xlu0 %v1114
    %v1118 = vpop.xlane.xlu0 %1117
    %v1119 = vcvt.f32.s32 %v1116
    %v1120 = vcvt.f32.s32 %v1118
    %v1121 = vshll.u32 %v1120, 16
    %v1122 = vadd.s32 %v1121, %v1119
    %v1123 = vrot.slane %v1122, 4
    %v1124 = vadd.s32 %v1122, %v1123
    %v1125 = vrot.slane %v1124, 2
    %v1126 = vadd.s32 %v1124, %v1125
    %v1127 = vrot.slane %v1126, 1
    %v1128 = vadd.s32 %v1126, %v1127
    %s1129 = vtos %v1128
    %p1130 = scmp.ge.s32.totalorder %s1129, 819
    %s1131 = scalar_select %p1130, %s1107, %s1103
    %s1132 = smin.f32 %s1105, %s1107
    %s1133 = scalar_select %p1130, %s1105, %s1132
    %s1134 = smul.f32 %s1050, 4.0
    %s1135 = sadd.f32 %s1046, %s1134
    %v1136 = vstv %s1135
    %vm1137 = vcmp.ge.f32.partialorder %v45, %v1136
    %v1138 = vsel %vm1137, 1, 0
    %v1139 = vand.u32 %v1138, 65535
    %v1140 = vshrl.u32 %v1138, 16
    %v1141 = vcvt.s32.f32 %v1139
    %v1142 = vcvt.s32.f32 %v1140
    %1143 = vadd.xlane.f32.xlu0 %v1141
    %v1144 = vpop.xlane.xlu0 %1143
    %1145 = vadd.xlane.f32.xlu0 %v1142
    %v1146 = vpop.xlane.xlu0 %1145
    %v1147 = vcvt.f32.s32 %v1144
    %v1148 = vcvt.f32.s32 %v1146
    %v1149 = vshll.u32 %v1148, 16
    %v1150 = vadd.s32 %v1149, %v1147
    %v1151 = vrot.slane %v1150, 4
    %v1152 = vadd.s32 %v1150, %v1151
    %v1153 = vrot.slane %v1152, 2
    %v1154 = vadd.s32 %v1152, %v1153
    %v1155 = vrot.slane %v1154, 1
    %v1156 = vadd.s32 %v1154, %v1155
    %s1157 = vtos %v1156
    %p1158 = scmp.ge.s32.totalorder %s1157, 819
    %s1159 = scalar_select %p1158, %s1135, %s1131
    %s1160 = smin.f32 %s1133, %s1135
    %s1161 = scalar_select %p1158, %s1133, %s1160
    %s1162 = smul.f32 %s1050, 5.0
    %s1163 = sadd.f32 %s1046, %s1162
    %v1164 = vstv %s1163
    %vm1165 = vcmp.ge.f32.partialorder %v45, %v1164
    %v1166 = vsel %vm1165, 1, 0
    %v1167 = vand.u32 %v1166, 65535
    %v1168 = vshrl.u32 %v1166, 16
    %v1169 = vcvt.s32.f32 %v1167
    %v1170 = vcvt.s32.f32 %v1168
    %1171 = vadd.xlane.f32.xlu0 %v1169
    %v1172 = vpop.xlane.xlu0 %1171
    %1173 = vadd.xlane.f32.xlu0 %v1170
    %v1174 = vpop.xlane.xlu0 %1173
    %v1175 = vcvt.f32.s32 %v1172
    %v1176 = vcvt.f32.s32 %v1174
    %v1177 = vshll.u32 %v1176, 16
    %v1178 = vadd.s32 %v1177, %v1175
    %v1179 = vrot.slane %v1178, 4
    %v1180 = vadd.s32 %v1178, %v1179
    %v1181 = vrot.slane %v1180, 2
    %v1182 = vadd.s32 %v1180, %v1181
    %v1183 = vrot.slane %v1182, 1
    %v1184 = vadd.s32 %v1182, %v1183
    %s1185 = vtos %v1184
    %p1186 = scmp.ge.s32.totalorder %s1185, 819
    %s1187 = scalar_select %p1186, %s1163, %s1159
    %s1188 = smin.f32 %s1161, %s1163
    %s1189 = scalar_select %p1186, %s1161, %s1188
    %s1190 = smul.f32 %s1050, 6.0
    %s1191 = sadd.f32 %s1046, %s1190
    %v1192 = vstv %s1191
    %vm1193 = vcmp.ge.f32.partialorder %v45, %v1192
    %v1194 = vsel %vm1193, 1, 0
    %v1195 = vand.u32 %v1194, 65535
    %v1196 = vshrl.u32 %v1194, 16
    %v1197 = vcvt.s32.f32 %v1195
    %v1198 = vcvt.s32.f32 %v1196
    %1199 = vadd.xlane.f32.xlu0 %v1197
    %v1200 = vpop.xlane.xlu0 %1199
    %1201 = vadd.xlane.f32.xlu0 %v1198
    %v1202 = vpop.xlane.xlu0 %1201
    %v1203 = vcvt.f32.s32 %v1200
    %v1204 = vcvt.f32.s32 %v1202
    %v1205 = vshll.u32 %v1204, 16
    %v1206 = vadd.s32 %v1205, %v1203
    %v1207 = vrot.slane %v1206, 4
    %v1208 = vadd.s32 %v1206, %v1207
    %v1209 = vrot.slane %v1208, 2
    %v1210 = vadd.s32 %v1208, %v1209
    %v1211 = vrot.slane %v1210, 1
    %v1212 = vadd.s32 %v1210, %v1211
    %s1213 = vtos %v1212
    %p1214 = scmp.ge.s32.totalorder %s1213, 819
    %s1215 = scalar_select %p1214, %s1191, %s1187
    %s1216 = smin.f32 %s1189, %s1191
    %s1217 = scalar_select %p1214, %s1189, %s1216
    %s1218 = smul.f32 %s1050, 7.0
    %s1219 = sadd.f32 %s1046, %s1218
    %v1220 = vstv %s1219
    %vm1221 = vcmp.ge.f32.partialorder %v45, %v1220
    %v1222 = vsel %vm1221, 1, 0
    %v1223 = vand.u32 %v1222, 65535
    %v1224 = vshrl.u32 %v1222, 16
    %v1225 = vcvt.s32.f32 %v1223
    %v1226 = vcvt.s32.f32 %v1224
    %1227 = vadd.xlane.f32.xlu0 %v1225
    %v1228 = vpop.xlane.xlu0 %1227
    %1229 = vadd.xlane.f32.xlu0 %v1226
    %v1230 = vpop.xlane.xlu0 %1229
    %v1231 = vcvt.f32.s32 %v1228
    %v1232 = vcvt.f32.s32 %v1230
    %v1233 = vshll.u32 %v1232, 16
    %v1234 = vadd.s32 %v1233, %v1231
    %v1235 = vrot.slane %v1234, 4
    %v1236 = vadd.s32 %v1234, %v1235
    %v1237 = vrot.slane %v1236, 2
    %v1238 = vadd.s32 %v1236, %v1237
    %v1239 = vrot.slane %v1238, 1
    %v1240 = vadd.s32 %v1238, %v1239
    %s1241 = vtos %v1240
    %p1242 = scmp.ge.s32.totalorder %s1241, 819
    %s1243 = scalar_select %p1242, %s1219, %s1215
    %s1244 = smin.f32 %s1217, %s1219
    %s1245 = scalar_select %p1242, %s1217, %s1244
    %s1246 = ssub.f32 %s1245, %s1243
    %s1247 = smul.f32 %s1246, 0.125
    %s1248 = sadd.f32 %s1243, %s1247
    %v1249 = vstv %s1248
    %vm1250 = vcmp.ge.f32.partialorder %v45, %v1249
    %v1251 = vsel %vm1250, 1, 0
    %v1252 = vand.u32 %v1251, 65535
    %v1253 = vshrl.u32 %v1251, 16
    %v1254 = vcvt.s32.f32 %v1252
    %v1255 = vcvt.s32.f32 %v1253
    %1256 = vadd.xlane.f32.xlu0 %v1254
    %v1257 = vpop.xlane.xlu0 %1256
    %1258 = vadd.xlane.f32.xlu0 %v1255
    %v1259 = vpop.xlane.xlu0 %1258
    %v1260 = vcvt.f32.s32 %v1257
    %v1261 = vcvt.f32.s32 %v1259
    %v1262 = vshll.u32 %v1261, 16
    %v1263 = vadd.s32 %v1262, %v1260
    %v1264 = vrot.slane %v1263, 4
    %v1265 = vadd.s32 %v1263, %v1264
    %v1266 = vrot.slane %v1265, 2
    %v1267 = vadd.s32 %v1265, %v1266
    %v1268 = vrot.slane %v1267, 1
    %v1269 = vadd.s32 %v1267, %v1268
    %s1270 = vtos %v1269
    %p1271 = scmp.ge.s32.totalorder %s1270, 819
    %s1272 = scalar_select %p1271, %s1248, %s1243
    %s1273 = smin.f32 %s1245, %s1248
    %s1274 = scalar_select %p1271, %s1245, %s1273
    %s1275 = smul.f32 %s1247, 2.0
    %s1276 = sadd.f32 %s1243, %s1275
    %v1277 = vstv %s1276
    %vm1278 = vcmp.ge.f32.partialorder %v45, %v1277
    %v1279 = vsel %vm1278, 1, 0
    %v1280 = vand.u32 %v1279, 65535
    %v1281 = vshrl.u32 %v1279, 16
    %v1282 = vcvt.s32.f32 %v1280
    %v1283 = vcvt.s32.f32 %v1281
    %1284 = vadd.xlane.f32.xlu0 %v1282
    %v1285 = vpop.xlane.xlu0 %1284
    %1286 = vadd.xlane.f32.xlu0 %v1283
    %v1287 = vpop.xlane.xlu0 %1286
    %v1288 = vcvt.f32.s32 %v1285
    %v1289 = vcvt.f32.s32 %v1287
    %v1290 = vshll.u32 %v1289, 16
    %v1291 = vadd.s32 %v1290, %v1288
    %v1292 = vrot.slane %v1291, 4
    %v1293 = vadd.s32 %v1291, %v1292
    %v1294 = vrot.slane %v1293, 2
    %v1295 = vadd.s32 %v1293, %v1294
    %v1296 = vrot.slane %v1295, 1
    %v1297 = vadd.s32 %v1295, %v1296
    %s1298 = vtos %v1297
    %p1299 = scmp.ge.s32.totalorder %s1298, 819
    %s1300 = scalar_select %p1299, %s1276, %s1272
    %s1301 = smin.f32 %s1274, %s1276
    %s1302 = scalar_select %p1299, %s1274, %s1301
    %s1303 = smul.f32 %s1247, 3.0
    %s1304 = sadd.f32 %s1243, %s1303
    %v1305 = vstv %s1304
    %vm1306 = vcmp.ge.f32.partialorder %v45, %v1305
    %v1307 = vsel %vm1306, 1, 0
    %v1308 = vand.u32 %v1307, 65535
    %v1309 = vshrl.u32 %v1307, 16
    %v1310 = vcvt.s32.f32 %v1308
    %v1311 = vcvt.s32.f32 %v1309
    %1312 = vadd.xlane.f32.xlu0 %v1310
    %v1313 = vpop.xlane.xlu0 %1312
    %1314 = vadd.xlane.f32.xlu0 %v1311
    %v1315 = vpop.xlane.xlu0 %1314
    %v1316 = vcvt.f32.s32 %v1313
    %v1317 = vcvt.f32.s32 %v1315
    %v1318 = vshll.u32 %v1317, 16
    %v1319 = vadd.s32 %v1318, %v1316
    %v1320 = vrot.slane %v1319, 4
    %v1321 = vadd.s32 %v1319, %v1320
    %v1322 = vrot.slane %v1321, 2
    %v1323 = vadd.s32 %v1321, %v1322
    %v1324 = vrot.slane %v1323, 1
    %v1325 = vadd.s32 %v1323, %v1324
    %s1326 = vtos %v1325
    %p1327 = scmp.ge.s32.totalorder %s1326, 819
    %s1328 = scalar_select %p1327, %s1304, %s1300
    %s1329 = smin.f32 %s1302, %s1304
    %s1330 = scalar_select %p1327, %s1302, %s1329
    %s1331 = smul.f32 %s1247, 4.0
    %s1332 = sadd.f32 %s1243, %s1331
    %v1333 = vstv %s1332
    %vm1334 = vcmp.ge.f32.partialorder %v45, %v1333
    %v1335 = vsel %vm1334, 1, 0
    %v1336 = vand.u32 %v1335, 65535
    %v1337 = vshrl.u32 %v1335, 16
    %v1338 = vcvt.s32.f32 %v1336
    %v1339 = vcvt.s32.f32 %v1337
    %1340 = vadd.xlane.f32.xlu0 %v1338
    %v1341 = vpop.xlane.xlu0 %1340
    %1342 = vadd.xlane.f32.xlu0 %v1339
    %v1343 = vpop.xlane.xlu0 %1342
    %v1344 = vcvt.f32.s32 %v1341
    %v1345 = vcvt.f32.s32 %v1343
    %v1346 = vshll.u32 %v1345, 16
    %v1347 = vadd.s32 %v1346, %v1344
    %v1348 = vrot.slane %v1347, 4
    %v1349 = vadd.s32 %v1347, %v1348
    %v1350 = vrot.slane %v1349, 2
    %v1351 = vadd.s32 %v1349, %v1350
    %v1352 = vrot.slane %v1351, 1
    %v1353 = vadd.s32 %v1351, %v1352
    %s1354 = vtos %v1353
    %p1355 = scmp.ge.s32.totalorder %s1354, 819
    %s1356 = scalar_select %p1355, %s1332, %s1328
    %s1357 = smin.f32 %s1330, %s1332
    %s1358 = scalar_select %p1355, %s1330, %s1357
    %s1359 = smul.f32 %s1247, 5.0
    %s1360 = sadd.f32 %s1243, %s1359
    %v1361 = vstv %s1360
    %vm1362 = vcmp.ge.f32.partialorder %v45, %v1361
    %v1363 = vsel %vm1362, 1, 0
    %v1364 = vand.u32 %v1363, 65535
    %v1365 = vshrl.u32 %v1363, 16
    %v1366 = vcvt.s32.f32 %v1364
    %v1367 = vcvt.s32.f32 %v1365
    %1368 = vadd.xlane.f32.xlu0 %v1366
    %v1369 = vpop.xlane.xlu0 %1368
    %1370 = vadd.xlane.f32.xlu0 %v1367
    %v1371 = vpop.xlane.xlu0 %1370
    %v1372 = vcvt.f32.s32 %v1369
    %v1373 = vcvt.f32.s32 %v1371
    %v1374 = vshll.u32 %v1373, 16
    %v1375 = vadd.s32 %v1374, %v1372
    %v1376 = vrot.slane %v1375, 4
    %v1377 = vadd.s32 %v1375, %v1376
    %v1378 = vrot.slane %v1377, 2
    %v1379 = vadd.s32 %v1377, %v1378
    %v1380 = vrot.slane %v1379, 1
    %v1381 = vadd.s32 %v1379, %v1380
    %s1382 = vtos %v1381
    %p1383 = scmp.ge.s32.totalorder %s1382, 819
    %s1384 = scalar_select %p1383, %s1360, %s1356
    %s1385 = smin.f32 %s1358, %s1360
    %s1386 = scalar_select %p1383, %s1358, %s1385
    %s1387 = smul.f32 %s1247, 6.0
    %s1388 = sadd.f32 %s1243, %s1387
    %v1389 = vstv %s1388
    %vm1390 = vcmp.ge.f32.partialorder %v45, %v1389
    %v1391 = vsel %vm1390, 1, 0
    %v1392 = vand.u32 %v1391, 65535
    %v1393 = vshrl.u32 %v1391, 16
    %v1394 = vcvt.s32.f32 %v1392
    %v1395 = vcvt.s32.f32 %v1393
    %1396 = vadd.xlane.f32.xlu0 %v1394
    %v1397 = vpop.xlane.xlu0 %1396
    %1398 = vadd.xlane.f32.xlu0 %v1395
    %v1399 = vpop.xlane.xlu0 %1398
    %v1400 = vcvt.f32.s32 %v1397
    %v1401 = vcvt.f32.s32 %v1399
    %v1402 = vshll.u32 %v1401, 16
    %v1403 = vadd.s32 %v1402, %v1400
    %v1404 = vrot.slane %v1403, 4
    %v1405 = vadd.s32 %v1403, %v1404
    %v1406 = vrot.slane %v1405, 2
    %v1407 = vadd.s32 %v1405, %v1406
    %v1408 = vrot.slane %v1407, 1
    %v1409 = vadd.s32 %v1407, %v1408
    %s1410 = vtos %v1409
    %p1411 = scmp.ge.s32.totalorder %s1410, 819
    %s1412 = scalar_select %p1411, %s1388, %s1384
    %s1413 = smin.f32 %s1386, %s1388
    %s1414 = scalar_select %p1411, %s1386, %s1413
    %s1415 = smul.f32 %s1247, 7.0
    %s1416 = sadd.f32 %s1243, %s1415
    %v1417 = vstv %s1416
    %vm1418 = vcmp.ge.f32.partialorder %v45, %v1417
    %v1419 = vsel %vm1418, 1, 0
    %v1420 = vand.u32 %v1419, 65535
    %v1421 = vshrl.u32 %v1419, 16
    %v1422 = vcvt.s32.f32 %v1420
    %v1423 = vcvt.s32.f32 %v1421
    %1424 = vadd.xlane.f32.xlu0 %v1422
    %v1425 = vpop.xlane.xlu0 %1424
    %1426 = vadd.xlane.f32.xlu0 %v1423
    %v1427 = vpop.xlane.xlu0 %1426
    %v1428 = vcvt.f32.s32 %v1425
    %v1429 = vcvt.f32.s32 %v1427
    %v1430 = vshll.u32 %v1429, 16
    %v1431 = vadd.s32 %v1430, %v1428
    %v1432 = vrot.slane %v1431, 4
    %v1433 = vadd.s32 %v1431, %v1432
    %v1434 = vrot.slane %v1433, 2
    %v1435 = vadd.s32 %v1433, %v1434
    %v1436 = vrot.slane %v1435, 1
    %v1437 = vadd.s32 %v1435, %v1436
    %s1438 = vtos %v1437
    %p1439 = scmp.ge.s32.totalorder %s1438, 819
    %s1440 = scalar_select %p1439, %s1416, %s1412
    %s1441 = smin.f32 %s1414, %s1416
    %s1442 = scalar_select %p1439, %s1414, %s1441
    %s1443 = ssub.f32 %s1442, %s1440
    %s1444 = smul.f32 %s1443, 0.125
    %s1445 = sadd.f32 %s1440, %s1444
    %v1446 = vstv %s1445
    %vm1447 = vcmp.ge.f32.partialorder %v45, %v1446
    %v1448 = vsel %vm1447, 1, 0
    %v1449 = vand.u32 %v1448, 65535
    %v1450 = vshrl.u32 %v1448, 16
    %v1451 = vcvt.s32.f32 %v1449
    %v1452 = vcvt.s32.f32 %v1450
    %1453 = vadd.xlane.f32.xlu0 %v1451
    %v1454 = vpop.xlane.xlu0 %1453
    %1455 = vadd.xlane.f32.xlu0 %v1452
    %v1456 = vpop.xlane.xlu0 %1455
    %v1457 = vcvt.f32.s32 %v1454
    %v1458 = vcvt.f32.s32 %v1456
    %v1459 = vshll.u32 %v1458, 16
    %v1460 = vadd.s32 %v1459, %v1457
    %v1461 = vrot.slane %v1460, 4
    %v1462 = vadd.s32 %v1460, %v1461
    %v1463 = vrot.slane %v1462, 2
    %v1464 = vadd.s32 %v1462, %v1463
    %v1465 = vrot.slane %v1464, 1
    %v1466 = vadd.s32 %v1464, %v1465
    %s1467 = vtos %v1466
    %p1468 = scmp.ge.s32.totalorder %s1467, 819
    %s1469 = scalar_select %p1468, %s1445, %s1440
    %s1470 = smin.f32 %s1442, %s1445
    %s1471 = scalar_select %p1468, %s1442, %s1470
    %s1472 = smul.f32 %s1444, 2.0
    %s1473 = sadd.f32 %s1440, %s1472
    %v1474 = vstv %s1473
    %vm1475 = vcmp.ge.f32.partialorder %v45, %v1474
    %v1476 = vsel %vm1475, 1, 0
    %v1477 = vand.u32 %v1476, 65535
    %v1478 = vshrl.u32 %v1476, 16
    %v1479 = vcvt.s32.f32 %v1477
    %v1480 = vcvt.s32.f32 %v1478
    %1481 = vadd.xlane.f32.xlu0 %v1479
    %v1482 = vpop.xlane.xlu0 %1481
    %1483 = vadd.xlane.f32.xlu0 %v1480
    %v1484 = vpop.xlane.xlu0 %1483
    %v1485 = vcvt.f32.s32 %v1482
    %v1486 = vcvt.f32.s32 %v1484
    %v1487 = vshll.u32 %v1486, 16
    %v1488 = vadd.s32 %v1487, %v1485
    %v1489 = vrot.slane %v1488, 4
    %v1490 = vadd.s32 %v1488, %v1489
    %v1491 = vrot.slane %v1490, 2
    %v1492 = vadd.s32 %v1490, %v1491
    %v1493 = vrot.slane %v1492, 1
    %v1494 = vadd.s32 %v1492, %v1493
    %s1495 = vtos %v1494
    %p1496 = scmp.ge.s32.totalorder %s1495, 819
    %s1497 = scalar_select %p1496, %s1473, %s1469
    %s1498 = smin.f32 %s1471, %s1473
    %s1499 = scalar_select %p1496, %s1471, %s1498
    %s1500 = smul.f32 %s1444, 3.0
    %s1501 = sadd.f32 %s1440, %s1500
    %v1502 = vstv %s1501
    %vm1503 = vcmp.ge.f32.partialorder %v45, %v1502
    %v1504 = vsel %vm1503, 1, 0
    %v1505 = vand.u32 %v1504, 65535
    %v1506 = vshrl.u32 %v1504, 16
    %v1507 = vcvt.s32.f32 %v1505
    %v1508 = vcvt.s32.f32 %v1506
    %1509 = vadd.xlane.f32.xlu0 %v1507
    %v1510 = vpop.xlane.xlu0 %1509
    %1511 = vadd.xlane.f32.xlu0 %v1508
    %v1512 = vpop.xlane.xlu0 %1511
    %v1513 = vcvt.f32.s32 %v1510
    %v1514 = vcvt.f32.s32 %v1512
    %v1515 = vshll.u32 %v1514, 16
    %v1516 = vadd.s32 %v1515, %v1513
    %v1517 = vrot.slane %v1516, 4
    %v1518 = vadd.s32 %v1516, %v1517
    %v1519 = vrot.slane %v1518, 2
    %v1520 = vadd.s32 %v1518, %v1519
    %v1521 = vrot.slane %v1520, 1
    %v1522 = vadd.s32 %v1520, %v1521
    %s1523 = vtos %v1522
    %p1524 = scmp.ge.s32.totalorder %s1523, 819
    %s1525 = scalar_select %p1524, %s1501, %s1497
    %s1526 = smin.f32 %s1499, %s1501
    %s1527 = scalar_select %p1524, %s1499, %s1526
    %s1528 = smul.f32 %s1444, 4.0
    %s1529 = sadd.f32 %s1440, %s1528
    %v1530 = vstv %s1529
    %vm1531 = vcmp.ge.f32.partialorder %v45, %v1530
    %v1532 = vsel %vm1531, 1, 0
    %v1533 = vand.u32 %v1532, 65535
    %v1534 = vshrl.u32 %v1532, 16
    %v1535 = vcvt.s32.f32 %v1533
    %v1536 = vcvt.s32.f32 %v1534
    %1537 = vadd.xlane.f32.xlu0 %v1535
    %v1538 = vpop.xlane.xlu0 %1537
    %1539 = vadd.xlane.f32.xlu0 %v1536
    %v1540 = vpop.xlane.xlu0 %1539
    %v1541 = vcvt.f32.s32 %v1538
    %v1542 = vcvt.f32.s32 %v1540
    %v1543 = vshll.u32 %v1542, 16
    %v1544 = vadd.s32 %v1543, %v1541
    %v1545 = vrot.slane %v1544, 4
    %v1546 = vadd.s32 %v1544, %v1545
    %v1547 = vrot.slane %v1546, 2
    %v1548 = vadd.s32 %v1546, %v1547
    %v1549 = vrot.slane %v1548, 1
    %v1550 = vadd.s32 %v1548, %v1549
    %s1551 = vtos %v1550
    %p1552 = scmp.ge.s32.totalorder %s1551, 819
    %s1553 = scalar_select %p1552, %s1529, %s1525
    %s1554 = smin.f32 %s1527, %s1529
    %s1555 = scalar_select %p1552, %s1527, %s1554
    %s1556 = smul.f32 %s1444, 5.0
    %s1557 = sadd.f32 %s1440, %s1556
    %v1558 = vstv %s1557
    %vm1559 = vcmp.ge.f32.partialorder %v45, %v1558
    %v1560 = vsel %vm1559, 1, 0
    %v1561 = vand.u32 %v1560, 65535
    %v1562 = vshrl.u32 %v1560, 16
    %v1563 = vcvt.s32.f32 %v1561
    %v1564 = vcvt.s32.f32 %v1562
    %1565 = vadd.xlane.f32.xlu0 %v1563
    %v1566 = vpop.xlane.xlu0 %1565
    %1567 = vadd.xlane.f32.xlu0 %v1564
    %v1568 = vpop.xlane.xlu0 %1567
    %v1569 = vcvt.f32.s32 %v1566
    %v1570 = vcvt.f32.s32 %v1568
    %v1571 = vshll.u32 %v1570, 16
    %v1572 = vadd.s32 %v1571, %v1569
    %v1573 = vrot.slane %v1572, 4
    %v1574 = vadd.s32 %v1572, %v1573
    %v1575 = vrot.slane %v1574, 2
    %v1576 = vadd.s32 %v1574, %v1575
    %v1577 = vrot.slane %v1576, 1
    %v1578 = vadd.s32 %v1576, %v1577
    %s1579 = vtos %v1578
    %p1580 = scmp.ge.s32.totalorder %s1579, 819
    %s1581 = scalar_select %p1580, %s1557, %s1553
    %s1582 = smin.f32 %s1555, %s1557
    %s1583 = scalar_select %p1580, %s1555, %s1582
    %s1584 = smul.f32 %s1444, 6.0
    %s1585 = sadd.f32 %s1440, %s1584
    %v1586 = vstv %s1585
    %vm1587 = vcmp.ge.f32.partialorder %v45, %v1586
    %v1588 = vsel %vm1587, 1, 0
    %v1589 = vand.u32 %v1588, 65535
    %v1590 = vshrl.u32 %v1588, 16
    %v1591 = vcvt.s32.f32 %v1589
    %v1592 = vcvt.s32.f32 %v1590
    %1593 = vadd.xlane.f32.xlu0 %v1591
    %v1594 = vpop.xlane.xlu0 %1593
    %1595 = vadd.xlane.f32.xlu0 %v1592
    %v1596 = vpop.xlane.xlu0 %1595
    %v1597 = vcvt.f32.s32 %v1594
    %v1598 = vcvt.f32.s32 %v1596
    %v1599 = vshll.u32 %v1598, 16
    %v1600 = vadd.s32 %v1599, %v1597
    %v1601 = vrot.slane %v1600, 4
    %v1602 = vadd.s32 %v1600, %v1601
    %v1603 = vrot.slane %v1602, 2
    %v1604 = vadd.s32 %v1602, %v1603
    %v1605 = vrot.slane %v1604, 1
    %v1606 = vadd.s32 %v1604, %v1605
    %s1607 = vtos %v1606
    %p1608 = scmp.ge.s32.totalorder %s1607, 819
    %s1609 = scalar_select %p1608, %s1585, %s1581
    %s1610 = smin.f32 %s1583, %s1585
    %s1611 = scalar_select %p1608, %s1583, %s1610
    %s1612 = smul.f32 %s1444, 7.0
    %s1613 = sadd.f32 %s1440, %s1612
    %v1614 = vstv %s1613
    %vm1615 = vcmp.ge.f32.partialorder %v45, %v1614
    %v1616 = vsel %vm1615, 1, 0
    %v1617 = vand.u32 %v1616, 65535
    %v1618 = vshrl.u32 %v1616, 16
    %v1619 = vcvt.s32.f32 %v1617
    %v1620 = vcvt.s32.f32 %v1618
    %1621 = vadd.xlane.f32.xlu0 %v1619
    %v1622 = vpop.xlane.xlu0 %1621
    %1623 = vadd.xlane.f32.xlu0 %v1620
    %v1624 = vpop.xlane.xlu0 %1623
    %v1625 = vcvt.f32.s32 %v1622
    %v1626 = vcvt.f32.s32 %v1624
    %v1627 = vshll.u32 %v1626, 16
    %v1628 = vadd.s32 %v1627, %v1625
    %v1629 = vrot.slane %v1628, 4
    %v1630 = vadd.s32 %v1628, %v1629
    %v1631 = vrot.slane %v1630, 2
    %v1632 = vadd.s32 %v1630, %v1631
    %v1633 = vrot.slane %v1632, 1
    %v1634 = vadd.s32 %v1632, %v1633
    %s1635 = vtos %v1634
    %p1636 = scmp.ge.s32.totalorder %s1635, 819
    %s1637 = scalar_select %p1636, %s1613, %s1609
    %s1638 = smin.f32 %s1611, %s1613
    %s1639 = scalar_select %p1636, %s1611, %s1638
    %s1640 = ssub.f32 %s1639, %s1637
    %s1641 = smul.f32 %s1640, 0.125
    %s1642 = sadd.f32 %s1637, %s1641
    %v1643 = vstv %s1642
    %vm1644 = vcmp.ge.f32.partialorder %v45, %v1643
    %v1645 = vsel %vm1644, 1, 0
    %v1646 = vand.u32 %v1645, 65535
    %v1647 = vshrl.u32 %v1645, 16
    %v1648 = vcvt.s32.f32 %v1646
    %v1649 = vcvt.s32.f32 %v1647
    %1650 = vadd.xlane.f32.xlu0 %v1648
    %v1651 = vpop.xlane.xlu0 %1650
    %1652 = vadd.xlane.f32.xlu0 %v1649
    %v1653 = vpop.xlane.xlu0 %1652
    %v1654 = vcvt.f32.s32 %v1651
    %v1655 = vcvt.f32.s32 %v1653
    %v1656 = vshll.u32 %v1655, 16
    %v1657 = vadd.s32 %v1656, %v1654
    %v1658 = vrot.slane %v1657, 4
    %v1659 = vadd.s32 %v1657, %v1658
    %v1660 = vrot.slane %v1659, 2
    %v1661 = vadd.s32 %v1659, %v1660
    %v1662 = vrot.slane %v1661, 1
    %v1663 = vadd.s32 %v1661, %v1662
    %s1664 = vtos %v1663
    %p1665 = scmp.ge.s32.totalorder %s1664, 819
    %s1666 = scalar_select %p1665, %s1642, %s1637
    %s1667 = smin.f32 %s1639, %s1642
    %s1668 = scalar_select %p1665, %s1639, %s1667
    %s1669 = smul.f32 %s1641, 2.0
    %s1670 = sadd.f32 %s1637, %s1669
    %v1671 = vstv %s1670
    %vm1672 = vcmp.ge.f32.partialorder %v45, %v1671
    %v1673 = vsel %vm1672, 1, 0
    %v1674 = vand.u32 %v1673, 65535
    %v1675 = vshrl.u32 %v1673, 16
    %v1676 = vcvt.s32.f32 %v1674
    %v1677 = vcvt.s32.f32 %v1675
    %1678 = vadd.xlane.f32.xlu0 %v1676
    %v1679 = vpop.xlane.xlu0 %1678
    %1680 = vadd.xlane.f32.xlu0 %v1677
    %v1681 = vpop.xlane.xlu0 %1680
    %v1682 = vcvt.f32.s32 %v1679
    %v1683 = vcvt.f32.s32 %v1681
    %v1684 = vshll.u32 %v1683, 16
    %v1685 = vadd.s32 %v1684, %v1682
    %v1686 = vrot.slane %v1685, 4
    %v1687 = vadd.s32 %v1685, %v1686
    %v1688 = vrot.slane %v1687, 2
    %v1689 = vadd.s32 %v1687, %v1688
    %v1690 = vrot.slane %v1689, 1
    %v1691 = vadd.s32 %v1689, %v1690
    %s1692 = vtos %v1691
    %p1693 = scmp.ge.s32.totalorder %s1692, 819
    %s1694 = scalar_select %p1693, %s1670, %s1666
    %s1695 = smin.f32 %s1668, %s1670
    %s1696 = scalar_select %p1693, %s1668, %s1695
    %s1697 = smul.f32 %s1641, 3.0
    %s1698 = sadd.f32 %s1637, %s1697
    %v1699 = vstv %s1698
    %vm1700 = vcmp.ge.f32.partialorder %v45, %v1699
    %v1701 = vsel %vm1700, 1, 0
    %v1702 = vand.u32 %v1701, 65535
    %v1703 = vshrl.u32 %v1701, 16
    %v1704 = vcvt.s32.f32 %v1702
    %v1705 = vcvt.s32.f32 %v1703
    %1706 = vadd.xlane.f32.xlu0 %v1704
    %v1707 = vpop.xlane.xlu0 %1706
    %1708 = vadd.xlane.f32.xlu0 %v1705
    %v1709 = vpop.xlane.xlu0 %1708
    %v1710 = vcvt.f32.s32 %v1707
    %v1711 = vcvt.f32.s32 %v1709
    %v1712 = vshll.u32 %v1711, 16
    %v1713 = vadd.s32 %v1712, %v1710
    %v1714 = vrot.slane %v1713, 4
    %v1715 = vadd.s32 %v1713, %v1714
    %v1716 = vrot.slane %v1715, 2
    %v1717 = vadd.s32 %v1715, %v1716
    %v1718 = vrot.slane %v1717, 1
    %v1719 = vadd.s32 %v1717, %v1718
    %s1720 = vtos %v1719
    %p1721 = scmp.ge.s32.totalorder %s1720, 819
    %s1722 = scalar_select %p1721, %s1698, %s1694
    %s1723 = smin.f32 %s1696, %s1698
    %s1724 = scalar_select %p1721, %s1696, %s1723
    %s1725 = smul.f32 %s1641, 4.0
    %s1726 = sadd.f32 %s1637, %s1725
    %v1727 = vstv %s1726
    %vm1728 = vcmp.ge.f32.partialorder %v45, %v1727
    %v1729 = vsel %vm1728, 1, 0
    %v1730 = vand.u32 %v1729, 65535
    %v1731 = vshrl.u32 %v1729, 16
    %v1732 = vcvt.s32.f32 %v1730
    %v1733 = vcvt.s32.f32 %v1731
    %1734 = vadd.xlane.f32.xlu0 %v1732
    %v1735 = vpop.xlane.xlu0 %1734
    %1736 = vadd.xlane.f32.xlu0 %v1733
    %v1737 = vpop.xlane.xlu0 %1736
    %v1738 = vcvt.f32.s32 %v1735
    %v1739 = vcvt.f32.s32 %v1737
    %v1740 = vshll.u32 %v1739, 16
    %v1741 = vadd.s32 %v1740, %v1738
    %v1742 = vrot.slane %v1741, 4
    %v1743 = vadd.s32 %v1741, %v1742
    %v1744 = vrot.slane %v1743, 2
    %v1745 = vadd.s32 %v1743, %v1744
    %v1746 = vrot.slane %v1745, 1
    %v1747 = vadd.s32 %v1745, %v1746
    %s1748 = vtos %v1747
    %p1749 = scmp.ge.s32.totalorder %s1748, 819
    %s1750 = scalar_select %p1749, %s1726, %s1722
    %s1751 = smin.f32 %s1724, %s1726
    %s1752 = scalar_select %p1749, %s1724, %s1751
    %s1753 = smul.f32 %s1641, 5.0
    %s1754 = sadd.f32 %s1637, %s1753
    %v1755 = vstv %s1754
    %vm1756 = vcmp.ge.f32.partialorder %v45, %v1755
    %v1757 = vsel %vm1756, 1, 0
    %v1758 = vand.u32 %v1757, 65535
    %v1759 = vshrl.u32 %v1757, 16
    %v1760 = vcvt.s32.f32 %v1758
    %v1761 = vcvt.s32.f32 %v1759
    %1762 = vadd.xlane.f32.xlu0 %v1760
    %v1763 = vpop.xlane.xlu0 %1762
    %1764 = vadd.xlane.f32.xlu0 %v1761
    %v1765 = vpop.xlane.xlu0 %1764
    %v1766 = vcvt.f32.s32 %v1763
    %v1767 = vcvt.f32.s32 %v1765
    %v1768 = vshll.u32 %v1767, 16
    %v1769 = vadd.s32 %v1768, %v1766
    %v1770 = vrot.slane %v1769, 4
    %v1771 = vadd.s32 %v1769, %v1770
    %v1772 = vrot.slane %v1771, 2
    %v1773 = vadd.s32 %v1771, %v1772
    %v1774 = vrot.slane %v1773, 1
    %v1775 = vadd.s32 %v1773, %v1774
    %s1776 = vtos %v1775
    %p1777 = scmp.ge.s32.totalorder %s1776, 819
    %s1778 = scalar_select %p1777, %s1754, %s1750
    %s1779 = smin.f32 %s1752, %s1754
    %s1780 = scalar_select %p1777, %s1752, %s1779
    %s1781 = smul.f32 %s1641, 6.0
    %s1782 = sadd.f32 %s1637, %s1781
    %v1783 = vstv %s1782
    %vm1784 = vcmp.ge.f32.partialorder %v45, %v1783
    %v1785 = vsel %vm1784, 1, 0
    %v1786 = vand.u32 %v1785, 65535
    %v1787 = vshrl.u32 %v1785, 16
    %v1788 = vcvt.s32.f32 %v1786
    %v1789 = vcvt.s32.f32 %v1787
    %1790 = vadd.xlane.f32.xlu0 %v1788
    %v1791 = vpop.xlane.xlu0 %1790
    %1792 = vadd.xlane.f32.xlu0 %v1789
    %v1793 = vpop.xlane.xlu0 %1792
    %v1794 = vcvt.f32.s32 %v1791
    %v1795 = vcvt.f32.s32 %v1793
    %v1796 = vshll.u32 %v1795, 16
    %v1797 = vadd.s32 %v1796, %v1794
    %v1798 = vrot.slane %v1797, 4
    %v1799 = vadd.s32 %v1797, %v1798
    %v1800 = vrot.slane %v1799, 2
    %v1801 = vadd.s32 %v1799, %v1800
    %v1802 = vrot.slane %v1801, 1
    %v1803 = vadd.s32 %v1801, %v1802
    %s1804 = vtos %v1803
    %p1805 = scmp.ge.s32.totalorder %s1804, 819
    %s1806 = scalar_select %p1805, %s1782, %s1778
    %s1807 = smin.f32 %s1780, %s1782
    %s1808 = scalar_select %p1805, %s1780, %s1807
    %s1809 = smul.f32 %s1641, 7.0
    %s1810 = sadd.f32 %s1637, %s1809
    %v1811 = vstv %s1810
    %vm1812 = vcmp.ge.f32.partialorder %v45, %v1811
    %v1813 = vsel %vm1812, 1, 0
    %v1814 = vand.u32 %v1813, 65535
    %v1815 = vshrl.u32 %v1813, 16
    %v1816 = vcvt.s32.f32 %v1814
    %v1817 = vcvt.s32.f32 %v1815
    %1818 = vadd.xlane.f32.xlu0 %v1816
    %v1819 = vpop.xlane.xlu0 %1818
    %1820 = vadd.xlane.f32.xlu0 %v1817
    %v1821 = vpop.xlane.xlu0 %1820
    %v1822 = vcvt.f32.s32 %v1819
    %v1823 = vcvt.f32.s32 %v1821
    %v1824 = vshll.u32 %v1823, 16
    %v1825 = vadd.s32 %v1824, %v1822
    %v1826 = vrot.slane %v1825, 4
    %v1827 = vadd.s32 %v1825, %v1826
    %v1828 = vrot.slane %v1827, 2
    %v1829 = vadd.s32 %v1827, %v1828
    %v1830 = vrot.slane %v1829, 1
    %v1831 = vadd.s32 %v1829, %v1830
    %s1832 = vtos %v1831
    %p1833 = scmp.ge.s32.totalorder %s1832, 819
    %s1834 = scalar_select %p1833, %s1810, %s1806
    %s1835 = smin.f32 %s1808, %s1810
    %s1836 = scalar_select %p1833, %s1808, %s1835
    %s1837 = ssub.f32 %s1836, %s1834
    %s1838 = smul.f32 %s1837, 0.125
    %s1839 = sadd.f32 %s1834, %s1838
    %v1840 = vstv %s1839
    %vm1841 = vcmp.ge.f32.partialorder %v45, %v1840
    %v1842 = vsel %vm1841, 1, 0
    %v1843 = vand.u32 %v1842, 65535
    %v1844 = vshrl.u32 %v1842, 16
    %v1845 = vcvt.s32.f32 %v1843
    %v1846 = vcvt.s32.f32 %v1844
    %1847 = vadd.xlane.f32.xlu0 %v1845
    %v1848 = vpop.xlane.xlu0 %1847
    %1849 = vadd.xlane.f32.xlu0 %v1846
    %v1850 = vpop.xlane.xlu0 %1849
    %v1851 = vcvt.f32.s32 %v1848
    %v1852 = vcvt.f32.s32 %v1850
    %v1853 = vshll.u32 %v1852, 16
    %v1854 = vadd.s32 %v1853, %v1851
    %v1855 = vrot.slane %v1854, 4
    %v1856 = vadd.s32 %v1854, %v1855
    %v1857 = vrot.slane %v1856, 2
    %v1858 = vadd.s32 %v1856, %v1857
    %v1859 = vrot.slane %v1858, 1
    %v1860 = vadd.s32 %v1858, %v1859
    %s1861 = vtos %v1860
    %p1862 = scmp.ge.s32.totalorder %s1861, 819
    %s1863 = scalar_select %p1862, %s1839, %s1834
    %s1864 = smin.f32 %s1836, %s1839
    %s1865 = scalar_select %p1862, %s1836, %s1864
    %s1866 = smul.f32 %s1838, 2.0
    %s1867 = sadd.f32 %s1834, %s1866
    %v1868 = vstv %s1867
    %vm1869 = vcmp.ge.f32.partialorder %v45, %v1868
    %v1870 = vsel %vm1869, 1, 0
    %v1871 = vand.u32 %v1870, 65535
    %v1872 = vshrl.u32 %v1870, 16
    %v1873 = vcvt.s32.f32 %v1871
    %v1874 = vcvt.s32.f32 %v1872
    %1875 = vadd.xlane.f32.xlu0 %v1873
    %v1876 = vpop.xlane.xlu0 %1875
    %1877 = vadd.xlane.f32.xlu0 %v1874
    %v1878 = vpop.xlane.xlu0 %1877
    %v1879 = vcvt.f32.s32 %v1876
    %v1880 = vcvt.f32.s32 %v1878
    %v1881 = vshll.u32 %v1880, 16
    %v1882 = vadd.s32 %v1881, %v1879
    %v1883 = vrot.slane %v1882, 4
    %v1884 = vadd.s32 %v1882, %v1883
    %v1885 = vrot.slane %v1884, 2
    %v1886 = vadd.s32 %v1884, %v1885
    %v1887 = vrot.slane %v1886, 1
    %v1888 = vadd.s32 %v1886, %v1887
    %s1889 = vtos %v1888
    %p1890 = scmp.ge.s32.totalorder %s1889, 819
    %s1891 = scalar_select %p1890, %s1867, %s1863
    %s1892 = smin.f32 %s1865, %s1867
    %s1893 = scalar_select %p1890, %s1865, %s1892
    %s1894 = smul.f32 %s1838, 3.0
    %s1895 = sadd.f32 %s1834, %s1894
    %v1896 = vstv %s1895
    %vm1897 = vcmp.ge.f32.partialorder %v45, %v1896
    %v1898 = vsel %vm1897, 1, 0
    %v1899 = vand.u32 %v1898, 65535
    %v1900 = vshrl.u32 %v1898, 16
    %v1901 = vcvt.s32.f32 %v1899
    %v1902 = vcvt.s32.f32 %v1900
    %1903 = vadd.xlane.f32.xlu0 %v1901
    %v1904 = vpop.xlane.xlu0 %1903
    %1905 = vadd.xlane.f32.xlu0 %v1902
    %v1906 = vpop.xlane.xlu0 %1905
    %v1907 = vcvt.f32.s32 %v1904
    %v1908 = vcvt.f32.s32 %v1906
    %v1909 = vshll.u32 %v1908, 16
    %v1910 = vadd.s32 %v1909, %v1907
    %v1911 = vrot.slane %v1910, 4
    %v1912 = vadd.s32 %v1910, %v1911
    %v1913 = vrot.slane %v1912, 2
    %v1914 = vadd.s32 %v1912, %v1913
    %v1915 = vrot.slane %v1914, 1
    %v1916 = vadd.s32 %v1914, %v1915
    %s1917 = vtos %v1916
    %p1918 = scmp.ge.s32.totalorder %s1917, 819
    %s1919 = scalar_select %p1918, %s1895, %s1891
    %s1920 = smin.f32 %s1893, %s1895
    %s1921 = scalar_select %p1918, %s1893, %s1920
    %s1922 = smul.f32 %s1838, 4.0
    %s1923 = sadd.f32 %s1834, %s1922
    %v1924 = vstv %s1923
    %vm1925 = vcmp.ge.f32.partialorder %v45, %v1924
    %v1926 = vsel %vm1925, 1, 0
    %v1927 = vand.u32 %v1926, 65535
    %v1928 = vshrl.u32 %v1926, 16
    %v1929 = vcvt.s32.f32 %v1927
    %v1930 = vcvt.s32.f32 %v1928
    %1931 = vadd.xlane.f32.xlu0 %v1929
    %v1932 = vpop.xlane.xlu0 %1931
    %1933 = vadd.xlane.f32.xlu0 %v1930
    %v1934 = vpop.xlane.xlu0 %1933
    %v1935 = vcvt.f32.s32 %v1932
    %v1936 = vcvt.f32.s32 %v1934
    %v1937 = vshll.u32 %v1936, 16
    %v1938 = vadd.s32 %v1937, %v1935
    %v1939 = vrot.slane %v1938, 4
    %v1940 = vadd.s32 %v1938, %v1939
    %v1941 = vrot.slane %v1940, 2
    %v1942 = vadd.s32 %v1940, %v1941
    %v1943 = vrot.slane %v1942, 1
    %v1944 = vadd.s32 %v1942, %v1943
    %s1945 = vtos %v1944
    %p1946 = scmp.ge.s32.totalorder %s1945, 819
    %s1947 = scalar_select %p1946, %s1923, %s1919
    %s1948 = smin.f32 %s1921, %s1923
    %s1949 = scalar_select %p1946, %s1921, %s1948
    %s1950 = smul.f32 %s1838, 5.0
    %s1951 = sadd.f32 %s1834, %s1950
    %v1952 = vstv %s1951
    %vm1953 = vcmp.ge.f32.partialorder %v45, %v1952
    %v1954 = vsel %vm1953, 1, 0
    %v1955 = vand.u32 %v1954, 65535
    %v1956 = vshrl.u32 %v1954, 16
    %v1957 = vcvt.s32.f32 %v1955
    %v1958 = vcvt.s32.f32 %v1956
    %1959 = vadd.xlane.f32.xlu0 %v1957
    %v1960 = vpop.xlane.xlu0 %1959
    %1961 = vadd.xlane.f32.xlu0 %v1958
    %v1962 = vpop.xlane.xlu0 %1961
    %v1963 = vcvt.f32.s32 %v1960
    %v1964 = vcvt.f32.s32 %v1962
    %v1965 = vshll.u32 %v1964, 16
    %v1966 = vadd.s32 %v1965, %v1963
    %v1967 = vrot.slane %v1966, 4
    %v1968 = vadd.s32 %v1966, %v1967
    %v1969 = vrot.slane %v1968, 2
    %v1970 = vadd.s32 %v1968, %v1969
    %v1971 = vrot.slane %v1970, 1
    %v1972 = vadd.s32 %v1970, %v1971
    %s1973 = vtos %v1972
    %p1974 = scmp.ge.s32.totalorder %s1973, 819
    %s1975 = scalar_select %p1974, %s1951, %s1947
    %s1976 = smin.f32 %s1949, %s1951
    %s1977 = scalar_select %p1974, %s1949, %s1976
    %s1978 = smul.f32 %s1838, 6.0
    %s1979 = sadd.f32 %s1834, %s1978
    %v1980 = vstv %s1979
    %vm1981 = vcmp.ge.f32.partialorder %v45, %v1980
    %v1982 = vsel %vm1981, 1, 0
    %v1983 = vand.u32 %v1982, 65535
    %v1984 = vshrl.u32 %v1982, 16
    %v1985 = vcvt.s32.f32 %v1983
    %v1986 = vcvt.s32.f32 %v1984
    %1987 = vadd.xlane.f32.xlu0 %v1985
    %v1988 = vpop.xlane.xlu0 %1987
    %1989 = vadd.xlane.f32.xlu0 %v1986
    %v1990 = vpop.xlane.xlu0 %1989
    %v1991 = vcvt.f32.s32 %v1988
    %v1992 = vcvt.f32.s32 %v1990
    %v1993 = vshll.u32 %v1992, 16
    %v1994 = vadd.s32 %v1993, %v1991
    %v1995 = vrot.slane %v1994, 4
    %v1996 = vadd.s32 %v1994, %v1995
    %v1997 = vrot.slane %v1996, 2
    %v1998 = vadd.s32 %v1996, %v1997
    %v1999 = vrot.slane %v1998, 1
    %v2000 = vadd.s32 %v1998, %v1999
    %s2001 = vtos %v2000
    %p2002 = scmp.ge.s32.totalorder %s2001, 819
    %s2003 = scalar_select %p2002, %s1979, %s1975
    %s2004 = smin.f32 %s1977, %s1979
    %s2005 = scalar_select %p2002, %s1977, %s2004
    %s2006 = smul.f32 %s1838, 7.0
    %s2007 = sadd.f32 %s1834, %s2006
    %v2008 = vstv %s2007
    %vm2009 = vcmp.ge.f32.partialorder %v45, %v2008
    %v2010 = vsel %vm2009, 1, 0
    %v2011 = vand.u32 %v2010, 65535
    %v2012 = vshrl.u32 %v2010, 16
    %v2013 = vcvt.s32.f32 %v2011
    %v2014 = vcvt.s32.f32 %v2012
    %2015 = vadd.xlane.f32.xlu0 %v2013
    %v2016 = vpop.xlane.xlu0 %2015
    %2017 = vadd.xlane.f32.xlu0 %v2014
    %v2018 = vpop.xlane.xlu0 %2017
    %v2019 = vcvt.f32.s32 %v2016
    %v2020 = vcvt.f32.s32 %v2018
    %v2021 = vshll.u32 %v2020, 16
    %v2022 = vadd.s32 %v2021, %v2019
    %v2023 = vrot.slane %v2022, 4
    %v2024 = vadd.s32 %v2022, %v2023
    %v2025 = vrot.slane %v2024, 2
    %v2026 = vadd.s32 %v2024, %v2025
    %v2027 = vrot.slane %v2026, 1
    %v2028 = vadd.s32 %v2026, %v2027
    %s2029 = vtos %v2028
    %p2030 = scmp.ge.s32.totalorder %s2029, 819
    %s2031 = scalar_select %p2030, %s2007, %s2003
    %s2032 = smin.f32 %s2005, %s2007
    %s2033 = scalar_select %p2030, %s2005, %s2032
    %s2034 = ssub.f32 %s2033, %s2031
    %s2035 = smul.f32 %s2034, 0.125
    %s2036 = sadd.f32 %s2031, %s2035
    %v2037 = vstv %s2036
    %vm2038 = vcmp.ge.f32.partialorder %v45, %v2037
    %v2039 = vsel %vm2038, 1, 0
    %v2040 = vand.u32 %v2039, 65535
    %v2041 = vshrl.u32 %v2039, 16
    %v2042 = vcvt.s32.f32 %v2040
    %v2043 = vcvt.s32.f32 %v2041
    %2044 = vadd.xlane.f32.xlu0 %v2042
    %v2045 = vpop.xlane.xlu0 %2044
    %2046 = vadd.xlane.f32.xlu0 %v2043
    %v2047 = vpop.xlane.xlu0 %2046
    %v2048 = vcvt.f32.s32 %v2045
    %v2049 = vcvt.f32.s32 %v2047
    %v2050 = vshll.u32 %v2049, 16
    %v2051 = vadd.s32 %v2050, %v2048
    %v2052 = vrot.slane %v2051, 4
    %v2053 = vadd.s32 %v2051, %v2052
    %v2054 = vrot.slane %v2053, 2
    %v2055 = vadd.s32 %v2053, %v2054
    %v2056 = vrot.slane %v2055, 1
    %v2057 = vadd.s32 %v2055, %v2056
    %s2058 = vtos %v2057
    %p2059 = scmp.ge.s32.totalorder %s2058, 819
    %s2060 = scalar_select %p2059, %s2036, %s2031
    %s2061 = smin.f32 %s2033, %s2036
    %s2062 = scalar_select %p2059, %s2033, %s2061
    %s2063 = smul.f32 %s2035, 2.0
    %s2064 = sadd.f32 %s2031, %s2063
    %v2065 = vstv %s2064
    %vm2066 = vcmp.ge.f32.partialorder %v45, %v2065
    %v2067 = vsel %vm2066, 1, 0
    %v2068 = vand.u32 %v2067, 65535
    %v2069 = vshrl.u32 %v2067, 16
    %v2070 = vcvt.s32.f32 %v2068
    %v2071 = vcvt.s32.f32 %v2069
    %2072 = vadd.xlane.f32.xlu0 %v2070
    %v2073 = vpop.xlane.xlu0 %2072
    %2074 = vadd.xlane.f32.xlu0 %v2071
    %v2075 = vpop.xlane.xlu0 %2074
    %v2076 = vcvt.f32.s32 %v2073
    %v2077 = vcvt.f32.s32 %v2075
    %v2078 = vshll.u32 %v2077, 16
    %v2079 = vadd.s32 %v2078, %v2076
    %v2080 = vrot.slane %v2079, 4
    %v2081 = vadd.s32 %v2079, %v2080
    %v2082 = vrot.slane %v2081, 2
    %v2083 = vadd.s32 %v2081, %v2082
    %v2084 = vrot.slane %v2083, 1
    %v2085 = vadd.s32 %v2083, %v2084
    %s2086 = vtos %v2085
    %p2087 = scmp.ge.s32.totalorder %s2086, 819
    %s2088 = scalar_select %p2087, %s2064, %s2060
    %s2089 = smin.f32 %s2062, %s2064
    %s2090 = scalar_select %p2087, %s2062, %s2089
    %s2091 = smul.f32 %s2035, 3.0
    %s2092 = sadd.f32 %s2031, %s2091
    %v2093 = vstv %s2092
    %vm2094 = vcmp.ge.f32.partialorder %v45, %v2093
    %v2095 = vsel %vm2094, 1, 0
    %v2096 = vand.u32 %v2095, 65535
    %v2097 = vshrl.u32 %v2095, 16
    %v2098 = vcvt.s32.f32 %v2096
    %v2099 = vcvt.s32.f32 %v2097
    %2100 = vadd.xlane.f32.xlu0 %v2098
    %v2101 = vpop.xlane.xlu0 %2100
    %2102 = vadd.xlane.f32.xlu0 %v2099
    %v2103 = vpop.xlane.xlu0 %2102
    %v2104 = vcvt.f32.s32 %v2101
    %v2105 = vcvt.f32.s32 %v2103
    %v2106 = vshll.u32 %v2105, 16
    %v2107 = vadd.s32 %v2106, %v2104
    %v2108 = vrot.slane %v2107, 4
    %v2109 = vadd.s32 %v2107, %v2108
    %v2110 = vrot.slane %v2109, 2
    %v2111 = vadd.s32 %v2109, %v2110
    %v2112 = vrot.slane %v2111, 1
    %v2113 = vadd.s32 %v2111, %v2112
    %s2114 = vtos %v2113
    %p2115 = scmp.ge.s32.totalorder %s2114, 819
    %s2116 = scalar_select %p2115, %s2092, %s2088
    %s2117 = smin.f32 %s2090, %s2092
    %s2118 = scalar_select %p2115, %s2090, %s2117
    %s2119 = smul.f32 %s2035, 4.0
    %s2120 = sadd.f32 %s2031, %s2119
    %v2121 = vstv %s2120
    %vm2122 = vcmp.ge.f32.partialorder %v45, %v2121
    %v2123 = vsel %vm2122, 1, 0
    %v2124 = vand.u32 %v2123, 65535
    %v2125 = vshrl.u32 %v2123, 16
    %v2126 = vcvt.s32.f32 %v2124
    %v2127 = vcvt.s32.f32 %v2125
    %2128 = vadd.xlane.f32.xlu0 %v2126
    %v2129 = vpop.xlane.xlu0 %2128
    %2130 = vadd.xlane.f32.xlu0 %v2127
    %v2131 = vpop.xlane.xlu0 %2130
    %v2132 = vcvt.f32.s32 %v2129
    %v2133 = vcvt.f32.s32 %v2131
    %v2134 = vshll.u32 %v2133, 16
    %v2135 = vadd.s32 %v2134, %v2132
    %v2136 = vrot.slane %v2135, 4
    %v2137 = vadd.s32 %v2135, %v2136
    %v2138 = vrot.slane %v2137, 2
    %v2139 = vadd.s32 %v2137, %v2138
    %v2140 = vrot.slane %v2139, 1
    %v2141 = vadd.s32 %v2139, %v2140
    %s2142 = vtos %v2141
    %p2143 = scmp.ge.s32.totalorder %s2142, 819
    %s2144 = scalar_select %p2143, %s2120, %s2116
    %s2145 = smin.f32 %s2118, %s2120
    %s2146 = scalar_select %p2143, %s2118, %s2145
    %s2147 = smul.f32 %s2035, 5.0
    %s2148 = sadd.f32 %s2031, %s2147
    %v2149 = vstv %s2148
    %vm2150 = vcmp.ge.f32.partialorder %v45, %v2149
    %v2151 = vsel %vm2150, 1, 0
    %v2152 = vand.u32 %v2151, 65535
    %v2153 = vshrl.u32 %v2151, 16
    %v2154 = vcvt.s32.f32 %v2152
    %v2155 = vcvt.s32.f32 %v2153
    %2156 = vadd.xlane.f32.xlu0 %v2154
    %v2157 = vpop.xlane.xlu0 %2156
    %2158 = vadd.xlane.f32.xlu0 %v2155
    %v2159 = vpop.xlane.xlu0 %2158
    %v2160 = vcvt.f32.s32 %v2157
    %v2161 = vcvt.f32.s32 %v2159
    %v2162 = vshll.u32 %v2161, 16
    %v2163 = vadd.s32 %v2162, %v2160
    %v2164 = vrot.slane %v2163, 4
    %v2165 = vadd.s32 %v2163, %v2164
    %v2166 = vrot.slane %v2165, 2
    %v2167 = vadd.s32 %v2165, %v2166
    %v2168 = vrot.slane %v2167, 1
    %v2169 = vadd.s32 %v2167, %v2168
    %s2170 = vtos %v2169
    %p2171 = scmp.ge.s32.totalorder %s2170, 819
    %s2172 = scalar_select %p2171, %s2148, %s2144
    %s2173 = smin.f32 %s2146, %s2148
    %s2174 = scalar_select %p2171, %s2146, %s2173
    %s2175 = smul.f32 %s2035, 6.0
    %s2176 = sadd.f32 %s2031, %s2175
    %v2177 = vstv %s2176
    %vm2178 = vcmp.ge.f32.partialorder %v45, %v2177
    %v2179 = vsel %vm2178, 1, 0
    %v2180 = vand.u32 %v2179, 65535
    %v2181 = vshrl.u32 %v2179, 16
    %v2182 = vcvt.s32.f32 %v2180
    %v2183 = vcvt.s32.f32 %v2181
    %2184 = vadd.xlane.f32.xlu0 %v2182
    %v2185 = vpop.xlane.xlu0 %2184
    %2186 = vadd.xlane.f32.xlu0 %v2183
    %v2187 = vpop.xlane.xlu0 %2186
    %v2188 = vcvt.f32.s32 %v2185
    %v2189 = vcvt.f32.s32 %v2187
    %v2190 = vshll.u32 %v2189, 16
    %v2191 = vadd.s32 %v2190, %v2188
    %v2192 = vrot.slane %v2191, 4
    %v2193 = vadd.s32 %v2191, %v2192
    %v2194 = vrot.slane %v2193, 2
    %v2195 = vadd.s32 %v2193, %v2194
    %v2196 = vrot.slane %v2195, 1
    %v2197 = vadd.s32 %v2195, %v2196
    %s2198 = vtos %v2197
    %p2199 = scmp.ge.s32.totalorder %s2198, 819
    %s2200 = scalar_select %p2199, %s2176, %s2172
    %s2201 = smin.f32 %s2174, %s2176
    %s2202 = scalar_select %p2199, %s2174, %s2201
    %s2203 = smul.f32 %s2035, 7.0
    %s2204 = sadd.f32 %s2031, %s2203
    %v2205 = vstv %s2204
    %vm2206 = vcmp.ge.f32.partialorder %v45, %v2205
    %v2207 = vsel %vm2206, 1, 0
    %v2208 = vand.u32 %v2207, 65535
    %v2209 = vshrl.u32 %v2207, 16
    %v2210 = vcvt.s32.f32 %v2208
    %v2211 = vcvt.s32.f32 %v2209
    %2212 = vadd.xlane.f32.xlu0 %v2210
    %v2213 = vpop.xlane.xlu0 %2212
    %2214 = vadd.xlane.f32.xlu0 %v2211
    %v2215 = vpop.xlane.xlu0 %2214
    %v2216 = vcvt.f32.s32 %v2213
    %v2217 = vcvt.f32.s32 %v2215
    %v2218 = vshll.u32 %v2217, 16
    %v2219 = vadd.s32 %v2218, %v2216
    %v2220 = vrot.slane %v2219, 4
    %v2221 = vadd.s32 %v2219, %v2220
    %v2222 = vrot.slane %v2221, 2
    %v2223 = vadd.s32 %v2221, %v2222
    %v2224 = vrot.slane %v2223, 1
    %v2225 = vadd.s32 %v2223, %v2224
    %s2226 = vtos %v2225
    %p2227 = scmp.ge.s32.totalorder %s2226, 819
    %s2228 = scalar_select %p2227, %s2204, %s2200
    %s2229 = smin.f32 %s2202, %s2204
    %s2230 = scalar_select %p2227, %s2202, %s2229
    %s2231 = ssub.f32 %s2230, %s2228
    %s2232 = smul.f32 %s2231, 0.125
    %s2233 = sadd.f32 %s2228, %s2232
    %v2234 = vstv %s2233
    %vm2235 = vcmp.ge.f32.partialorder %v45, %v2234
    %v2236 = vsel %vm2235, 1, 0
    %v2237 = vand.u32 %v2236, 65535
    %v2238 = vshrl.u32 %v2236, 16
    %v2239 = vcvt.s32.f32 %v2237
    %v2240 = vcvt.s32.f32 %v2238
    %2241 = vadd.xlane.f32.xlu0 %v2239
    %v2242 = vpop.xlane.xlu0 %2241
    %2243 = vadd.xlane.f32.xlu0 %v2240
    %v2244 = vpop.xlane.xlu0 %2243
    %v2245 = vcvt.f32.s32 %v2242
    %v2246 = vcvt.f32.s32 %v2244
    %v2247 = vshll.u32 %v2246, 16
    %v2248 = vadd.s32 %v2247, %v2245
    %v2249 = vrot.slane %v2248, 4
    %v2250 = vadd.s32 %v2248, %v2249
    %v2251 = vrot.slane %v2250, 2
    %v2252 = vadd.s32 %v2250, %v2251
    %v2253 = vrot.slane %v2252, 1
    %v2254 = vadd.s32 %v2252, %v2253
    %s2255 = vtos %v2254
    %p2256 = scmp.ge.s32.totalorder %s2255, 819
    %s2257 = scalar_select %p2256, %s2233, %s2228
    %s2258 = smul.f32 %s2232, 2.0
    %s2259 = sadd.f32 %s2228, %s2258
    %v2260 = vstv %s2259
    %vm2261 = vcmp.ge.f32.partialorder %v45, %v2260
    %v2262 = vsel %vm2261, 1, 0
    %v2263 = vand.u32 %v2262, 65535
    %v2264 = vshrl.u32 %v2262, 16
    %v2265 = vcvt.s32.f32 %v2263
    %v2266 = vcvt.s32.f32 %v2264
    %2267 = vadd.xlane.f32.xlu0 %v2265
    %v2268 = vpop.xlane.xlu0 %2267
    %2269 = vadd.xlane.f32.xlu0 %v2266
    %v2270 = vpop.xlane.xlu0 %2269
    %v2271 = vcvt.f32.s32 %v2268
    %v2272 = vcvt.f32.s32 %v2270
    %v2273 = vshll.u32 %v2272, 16
    %v2274 = vadd.s32 %v2273, %v2271
    %v2275 = vrot.slane %v2274, 4
    %v2276 = vadd.s32 %v2274, %v2275
    %v2277 = vrot.slane %v2276, 2
    %v2278 = vadd.s32 %v2276, %v2277
    %v2279 = vrot.slane %v2278, 1
    %v2280 = vadd.s32 %v2278, %v2279
    %s2281 = vtos %v2280
    %p2282 = scmp.ge.s32.totalorder %s2281, 819
    %s2283 = scalar_select %p2282, %s2259, %s2257
    %s2284 = smul.f32 %s2232, 3.0
    %s2285 = sadd.f32 %s2228, %s2284
    %v2286 = vstv %s2285
    %vm2287 = vcmp.ge.f32.partialorder %v45, %v2286
    %v2288 = vsel %vm2287, 1, 0
    %v2289 = vand.u32 %v2288, 65535
    %v2290 = vshrl.u32 %v2288, 16
    %v2291 = vcvt.s32.f32 %v2289
    %v2292 = vcvt.s32.f32 %v2290
    %2293 = vadd.xlane.f32.xlu0 %v2291
    %v2294 = vpop.xlane.xlu0 %2293
    %2295 = vadd.xlane.f32.xlu0 %v2292
    %v2296 = vpop.xlane.xlu0 %2295
    %v2297 = vcvt.f32.s32 %v2294
    %v2298 = vcvt.f32.s32 %v2296
    %v2299 = vshll.u32 %v2298, 16
    %v2300 = vadd.s32 %v2299, %v2297
    %v2301 = vrot.slane %v2300, 4
    %v2302 = vadd.s32 %v2300, %v2301
    %v2303 = vrot.slane %v2302, 2
    %v2304 = vadd.s32 %v2302, %v2303
    %v2305 = vrot.slane %v2304, 1
    %v2306 = vadd.s32 %v2304, %v2305
    %s2307 = vtos %v2306
    %p2308 = scmp.ge.s32.totalorder %s2307, 819
    %s2309 = scalar_select %p2308, %s2285, %s2283
    %s2310 = smul.f32 %s2232, 4.0
    %s2311 = sadd.f32 %s2228, %s2310
    %v2312 = vstv %s2311
    %vm2313 = vcmp.ge.f32.partialorder %v45, %v2312
    %v2314 = vsel %vm2313, 1, 0
    %v2315 = vand.u32 %v2314, 65535
    %v2316 = vshrl.u32 %v2314, 16
    %v2317 = vcvt.s32.f32 %v2315
    %v2318 = vcvt.s32.f32 %v2316
    %2319 = vadd.xlane.f32.xlu0 %v2317
    %v2320 = vpop.xlane.xlu0 %2319
    %2321 = vadd.xlane.f32.xlu0 %v2318
    %v2322 = vpop.xlane.xlu0 %2321
    %v2323 = vcvt.f32.s32 %v2320
    %v2324 = vcvt.f32.s32 %v2322
    %v2325 = vshll.u32 %v2324, 16
    %v2326 = vadd.s32 %v2325, %v2323
    %v2327 = vrot.slane %v2326, 4
    %v2328 = vadd.s32 %v2326, %v2327
    %v2329 = vrot.slane %v2328, 2
    %v2330 = vadd.s32 %v2328, %v2329
    %v2331 = vrot.slane %v2330, 1
    %v2332 = vadd.s32 %v2330, %v2331
    %s2333 = vtos %v2332
    %p2334 = scmp.ge.s32.totalorder %s2333, 819
    %s2335 = scalar_select %p2334, %s2311, %s2309
    %s2336 = smul.f32 %s2232, 5.0
    %s2337 = sadd.f32 %s2228, %s2336
    %v2338 = vstv %s2337
    %vm2339 = vcmp.ge.f32.partialorder %v45, %v2338
    %v2340 = vsel %vm2339, 1, 0
    %v2341 = vand.u32 %v2340, 65535
    %v2342 = vshrl.u32 %v2340, 16
    %v2343 = vcvt.s32.f32 %v2341
    %v2344 = vcvt.s32.f32 %v2342
    %2345 = vadd.xlane.f32.xlu0 %v2343
    %v2346 = vpop.xlane.xlu0 %2345
    %2347 = vadd.xlane.f32.xlu0 %v2344
    %v2348 = vpop.xlane.xlu0 %2347
    %v2349 = vcvt.f32.s32 %v2346
    %v2350 = vcvt.f32.s32 %v2348
    %v2351 = vshll.u32 %v2350, 16
    %v2352 = vadd.s32 %v2351, %v2349
    %v2353 = vrot.slane %v2352, 4
    %v2354 = vadd.s32 %v2352, %v2353
    %v2355 = vrot.slane %v2354, 2
    %v2356 = vadd.s32 %v2354, %v2355
    %v2357 = vrot.slane %v2356, 1
    %v2358 = vadd.s32 %v2356, %v2357
    %s2359 = vtos %v2358
    %p2360 = scmp.ge.s32.totalorder %s2359, 819
    %s2361 = scalar_select %p2360, %s2337, %s2335
    %s2362 = smul.f32 %s2232, 6.0
    %s2363 = sadd.f32 %s2228, %s2362
    %v2364 = vstv %s2363
    %vm2365 = vcmp.ge.f32.partialorder %v45, %v2364
    %v2366 = vsel %vm2365, 1, 0
    %v2367 = vand.u32 %v2366, 65535
    %v2368 = vshrl.u32 %v2366, 16
    %v2369 = vcvt.s32.f32 %v2367
    %v2370 = vcvt.s32.f32 %v2368
    %2371 = vadd.xlane.f32.xlu0 %v2369
    %v2372 = vpop.xlane.xlu0 %2371
    %2373 = vadd.xlane.f32.xlu0 %v2370
    %v2374 = vpop.xlane.xlu0 %2373
    %v2375 = vcvt.f32.s32 %v2372
    %v2376 = vcvt.f32.s32 %v2374
    %v2377 = vshll.u32 %v2376, 16
    %v2378 = vadd.s32 %v2377, %v2375
    %v2379 = vrot.slane %v2378, 4
    %v2380 = vadd.s32 %v2378, %v2379
    %v2381 = vrot.slane %v2380, 2
    %v2382 = vadd.s32 %v2380, %v2381
    %v2383 = vrot.slane %v2382, 1
    %v2384 = vadd.s32 %v2382, %v2383
    %s2385 = vtos %v2384
    %p2386 = scmp.ge.s32.totalorder %s2385, 819
    %s2387 = scalar_select %p2386, %s2363, %s2361
    %s2388 = smul.f32 %s2232, 7.0
    %s2389 = sadd.f32 %s2228, %s2388
    %v2390 = vstv %s2389
    %vm2391 = vcmp.ge.f32.partialorder %v45, %v2390
    %v2392 = vsel %vm2391, 1, 0
    %v2393 = vand.u32 %v2392, 65535
    %v2394 = vshrl.u32 %v2392, 16
    %v2395 = vcvt.s32.f32 %v2393
    %v2396 = vcvt.s32.f32 %v2394
    %2397 = vadd.xlane.f32.xlu0 %v2395
    %v2398 = vpop.xlane.xlu0 %2397
    %2399 = vadd.xlane.f32.xlu0 %v2396
    %v2400 = vpop.xlane.xlu0 %2399
    %v2401 = vcvt.f32.s32 %v2398
    %v2402 = vcvt.f32.s32 %v2400
    %v2403 = vshll.u32 %v2402, 16
    %v2404 = vadd.s32 %v2403, %v2401
    %v2405 = vrot.slane %v2404, 4
    %v2406 = vadd.s32 %v2404, %v2405
    %v2407 = vrot.slane %v2406, 2
    %v2408 = vadd.s32 %v2406, %v2407
    %v2409 = vrot.slane %v2408, 1
    %v2410 = vadd.s32 %v2408, %v2409
    %s2411 = vtos %v2410
    %p2412 = scmp.ge.s32.totalorder %s2411, 819
    %s2413 = scalar_select %p2412, %s2389, %s2387
    %v2414 = vstv %s2413
    %vm2415 = vcmp.ge.f32.partialorder %v45, %v2414
    %v2416 = vsel %vm2415, 1, 0
    %v2417 = vcvt.s32.f32 %v2416
    %2418 = vst [vmem:[#allocation7] sm:$0xff] %v2417
    // Predicated region
    $region18: #{tpu_custom_call.1} parent=1 // pred_check
      _
    $region19: #{tpu_custom_call.1} parent=1 // pred_check_branch
      %2420 = sbr.rel (0) target = $region21
    $region20: #{tpu_custom_call.1} parent=1 // pred_region
      %s2422 = ssub.s32 128, 128
      %2423 = vsyncadd [#allocation4], %s2422
      %s2425 = sshll.u32 [#allocation7], 4
      %s2426 = int_to_ptr.vmem [resolvable:$true] %s2425
      %2428 = dma.vmem_to_hbm [thread:$0]  %s2426, 128, %s2, [#allocation4]
    $region21: #{tpu_custom_call.1} parent=1 // pred_fallthru
      _
    // Predicated region
    $region22: #{tpu_custom_call.1} parent=1 // pred_check
      _
    $region23: #{tpu_custom_call.1} parent=1 // pred_check_branch
      %2430 = sbr.rel (0) target = $region25
    $region24: #{tpu_custom_call.1} parent=1 // pred_region
      %2431 = dma.done [#allocation4], 128
    $region25: #{tpu_custom_call.1} parent=1 // pred_fallthru
      _
    %2432 = vsyncpa [#allocation3], 1
    %2433 = vsyncpa [#allocation6], 1
    %2434 = vsyncpa [#allocation4], 1

</llo_original>
